<compile_context>
chip_gen: v5e
topology: v5e:2x2
jax: 0.10.0
libtpu: 0.0.40
codegen_flags: <defaults>
</compile_context>

<pallas_src>
import jax
import jax.numpy as jnp
from jax import lax
from jax.experimental import pallas as pl

# ---------------------------------------------------------------------------
# Problem sizes (small, consistent with the module's shapes)
# ---------------------------------------------------------------------------
SEQ = 8          # seq_len  (L)
BATCH = 2        # batch    (B)
INPUT = 16       # input_size
HIDDEN = 32      # args.hidden_size (H)
DROPCONNECT = 0.1  # args.dropconnect (eval mode -> weight * (1 - p))


# ---------------------------------------------------------------------------
# Fused encoder kernel: whole PFN_Unit recurrence in a single invocation
# ---------------------------------------------------------------------------
def encoder_kernel(x_ref, w_in_ref, w_hid_ref, b_ref, w_tr_ref, b_tr_ref,
                   h_ner_ref, h_re_ref, h_share_ref):
    L, B, D = x_ref.shape
    H = h_ner_ref.shape[-1]

    # -------- loop-invariant hoists (once per kernel, not per timestep) -----
    # Per-gate, lane-aligned weight slabs (gate order: c, eg_cin, rg_cin, eg_c, rg_c)
    w_in = [w_in_ref[k] for k in range(5)]      # each (D, H)
    w_hid = [w_hid_ref[k] for k in range(5)]    # each (H, H)
    b_g = [b_ref[k] for k in range(5)]          # each (1, H)  (b_in + b_hid)
    w_tr = [w_tr_ref[k] for k in range(3)]      # each (H, H)  (re / ner / share)
    b_tr = b_tr_ref[...]                        # (1, H)

    # Upper-triangular ones matrix for cumsum-via-matmul, built ONCE.
    row = lax.broadcasted_iota(jnp.int32, (H, H), 0)
    col = lax.broadcasted_iota(jnp.int32, (H, H), 1)
    tri = (row <= col).astype(jnp.float32)

    def mm(a, w):
        return jnp.dot(a, w, preferred_element_type=jnp.float32)

    def cummax(z):
        # cumsum(softmax(z, -1), -1); division goes to the EUP (approx recip),
        # prefix-sum goes to the MXU via the hoisted triangular matrix.
        z = z - jnp.max(z, axis=-1, keepdims=True)
        e = jnp.exp(z)
        inv = pl.reciprocal(jnp.sum(e, axis=-1, keepdims=True), approx=True)
        return mm(e * inv, tri)

    def step(t, carry):
        h_in, c_in = carry
        x_t = x_ref[t]                          # (B, D), read from VMEM (no DMA)

        gates = [mm(x_t, w_in[k]) + mm(h_in, w_hid[k]) + b_g[k] for k in range(5)]
        c_g, eg_cin, rg_cin, eg_c, rg_c = gates

        eg_cin = 1.0 - cummax(eg_cin)
        rg_cin = cummax(rg_cin)
        eg_c = 1.0 - cummax(eg_c)
        rg_c = cummax(rg_c)
        c = jnp.tanh(c_g)

        overlap_c = rg_c * eg_c
        upper_c = rg_c - overlap_c
        downer_c = eg_c - overlap_c
        overlap_cin = rg_cin * eg_cin
        upper_cin = rg_cin - overlap_cin
        downer_cin = eg_cin - overlap_cin

        share = overlap_cin * c_in + overlap_c * c
        c_re = upper_cin * c_in + upper_c * c + share
        c_ner = downer_cin * c_in + downer_c * c + share

        # transform(cat(c_re, c_ner, c_share)) with split (H,H) slabs (no concat)
        c_out = mm(c_re, w_tr[0]) + mm(c_ner, w_tr[1]) + mm(share, w_tr[2]) + b_tr
        h_out = jnp.tanh(c_out)

        h_ner_ref[t] = jnp.tanh(c_ner)
        h_re_ref[t] = jnp.tanh(c_re)
        h_share_ref[t] = jnp.tanh(share)
        return (h_out, c_out)

    zero = jnp.zeros((B, H), jnp.float32)
    lax.fori_loop(0, L, step, (zero, zero), unroll=True)


def encoder_forward(x, p):
    """Encoder.forward (eval mode): x (L,B,D) -> (h_ner, h_re, h_share), each (L,B,H)."""
    L, B, D = x.shape
    H = HIDDEN

    # Eval-mode LinearDropConnect: weight * (1 - dropout).
    w_hid_eff = p['w_hid'] * (1.0 - DROPCONNECT)

    # Per-gate slabs in (in_features, out_features) layout (lane-aligned in-kernel).
    w_in5 = jnp.transpose(p['w_in'].reshape(5, H, D), (0, 2, 1))      # (5, D, H)
    w_hid5 = jnp.transpose(w_hid_eff.reshape(5, H, H), (0, 2, 1))     # (5, H, H)
    b5 = (p['b_in'] + p['b_hid']).reshape(5, 1, H)                    # (5, 1, H)
    w_tr3 = jnp.transpose(p['w_tr'].reshape(H, 3, H), (1, 2, 0))      # (3, H, H)
    b_tr = p['b_tr'].reshape(1, H)                                    # (1, H)

    out_sd = jax.ShapeDtypeStruct((L, B, H), jnp.float32)
    # No grid: the whole problem (< 100 KiB) lives in VMEM for a single invocation;
    # inputs are DMA'd in once, outputs written back once.
    return pl.pallas_call(
        encoder_kernel,
        out_shape=(out_sd, out_sd, out_sd),
    )(x, w_in5, w_hid5, b5, w_tr3, b_tr)


# ---------------------------------------------------------------------------
# Parameter init (deterministic, PyTorch-Linear-style uniform)
# ---------------------------------------------------------------------------
def init_params(key):
    def lin(k, fan_in, fan_out):
        k1, k2 = jax.random.split(k)
        bound = 1.0 / jnp.sqrt(fan_in)
        w = jax.random.uniform(k1, (fan_out, fan_in), jnp.float32, -bound, bound)
        b = jax.random.uniform(k2, (fan_out,), jnp.float32, -bound, bound)
        return w, b

    ks = jax.random.split(key, 3)
    p = {}
    p['w_in'], p['b_in'] = lin(ks[0], INPUT, 5 * HIDDEN)     # input_transform
    p['w_hid'], p['b_hid'] = lin(ks[1], HIDDEN, 5 * HIDDEN)  # hidden_transform (DropConnect)
    p['w_tr'], p['b_tr'] = lin(ks[2], 3 * HIDDEN, HIDDEN)    # transform
    return p


# ---------------------------------------------------------------------------
# Pure-JAX reference (mirrors the PyTorch Encoder/PFN_Unit exactly)
# ---------------------------------------------------------------------------
def _cummax_ref(x):
    return jnp.cumsum(jax.nn.softmax(x, axis=-1), axis=-1)


def _encoder_ref(x, p):
    L, B, _ = x.shape
    H = HIDDEN
    w_hid_eff = p['w_hid'] * (1.0 - DROPCONNECT)
    h = jnp.zeros((B, H), jnp.float32)
    c_in = jnp.zeros((B, H), jnp.float32)
    ners, res, shares = [], [], []
    for t in range(L):
        gates = x[t] @ p['w_in'].T + p['b_in'] + h @ w_hid_eff.T + p['b_hid']
        c_g, eg_cin, rg_cin, eg_c, rg_c = [gates[:, k * H:(k + 1) * H] for k in range(5)]
        eg_cin = 1 - _cummax_ref(eg_cin); rg_cin = _cummax_ref(rg_cin)
        eg_c = 1 - _cummax_ref(eg_c); rg_c = _cummax_ref(rg_c)
        c = jnp.tanh(c_g)
        ov_c = rg_c * eg_c; up_c = rg_c - ov_c; dn_c = eg_c - ov_c
        ov_i = rg_cin * eg_cin; up_i = rg_cin - ov_i; dn_i = eg_cin - ov_i
        share = ov_i * c_in + ov_c * c
        c_re = up_i * c_in + up_c * c + share
        c_ner = dn_i * c_in + dn_c * c + share
        c_out = jnp.concatenate([c_re, c_ner, share], -1) @ p['w_tr'].T + p['b_tr']
        h = jnp.tanh(c_out)
        c_in = c_out
        ners.append(jnp.tanh(c_ner)); res.append(jnp.tanh(c_re)); shares.append(jnp.tanh(share))
    return jnp.stack(ners), jnp.stack(res), jnp.stack(shares)


# ---------------------------------------------------------------------------
if __name__ == "__main__":
    key = jax.random.PRNGKey(0)
    kx, kp = jax.random.split(key)

    # Token embeddings, time-major (seq_len, batch, input_size).
    x = jax.random.normal(kx, (SEQ, BATCH, INPUT), jnp.float32)
    params = init_params(kp)

    fwd = jax.jit(encoder_forward)
    h_ner, h_re, h_share = fwd(x, params)
    jax.block_until_ready((h_ner, h_re, h_share))

    assert h_ner.shape == (SEQ, BATCH, HIDDEN)
    assert h_re.shape == (SEQ, BATCH, HIDDEN)
    assert h_share.shape == (SEQ, BATCH, HIDDEN)

    # Reference under full-precision matmuls so it is an accurate oracle.
    with jax.default_matmul_precision("highest"):
        r_ner, r_re, r_share = _encoder_ref(x, params)
        r_ner, r_re, r_share = map(jax.block_until_ready, (r_ner, r_re, r_share))

    err = max(
        float(jnp.max(jnp.abs(a - b)))
        for a, b in [(h_ner, r_ner), (h_re, r_re), (h_share, r_share)]
    )
    # Residual error budget: EUP approximate reciprocal in softmax + MXU
    # summation-order differences across the 8-step recurrence.
    assert err < 5e-3, err

    print("KERNEL_OK")
</pallas_src>

<mosaic_0001>
module attributes {stable_mosaic.version = 11 : i64} {
  func.func @encoder_kernel(%arg0: memref<8x2x16xf32, #tpu.memory_space<vmem>>, %arg1: memref<5x16x32xf32, #tpu.memory_space<vmem>>, %arg2: memref<5x32x32xf32, #tpu.memory_space<vmem>>, %arg3: memref<5x1x32xf32, #tpu.memory_space<vmem>>, %arg4: memref<3x32x32xf32, #tpu.memory_space<vmem>>, %arg5: memref<1x32xf32, #tpu.memory_space<vmem>>, %arg6: memref<8x2x32xf32, #tpu.memory_space<vmem>>, %arg7: memref<8x2x32xf32, #tpu.memory_space<vmem>>, %arg8: memref<8x2x32xf32, #tpu.memory_space<vmem>>) attributes {dimension_semantics = [], scalar_prefetch = 0 : i64, scratch_operands = 0 : i64, tpu.core_type = #tpu.core_type<tc>} {
    %c0 = arith.constant 0 : index
    %c0_0 = arith.constant 0 : index
    %c0_1 = arith.constant 0 : index
    %0 = vector.load %arg1[%c0, %c0_0, %c0_1] : memref<5x16x32xf32, #tpu.memory_space<vmem>>, vector<1x16x32xf32>
    %1 = vector.shape_cast %0 : vector<1x16x32xf32> to vector<16x32xf32>
    %c1 = arith.constant 1 : index
    %c0_2 = arith.constant 0 : index
    %c0_3 = arith.constant 0 : index
    %2 = vector.load %arg1[%c1, %c0_2, %c0_3] : memref<5x16x32xf32, #tpu.memory_space<vmem>>, vector<1x16x32xf32>
    %3 = vector.shape_cast %2 : vector<1x16x32xf32> to vector<16x32xf32>
    %c2 = arith.constant 2 : index
    %c0_4 = arith.constant 0 : index
    %c0_5 = arith.constant 0 : index
    %4 = vector.load %arg1[%c2, %c0_4, %c0_5] : memref<5x16x32xf32, #tpu.memory_space<vmem>>, vector<1x16x32xf32>
    %5 = vector.shape_cast %4 : vector<1x16x32xf32> to vector<16x32xf32>
    %c3 = arith.constant 3 : index
    %c0_6 = arith.constant 0 : index
    %c0_7 = arith.constant 0 : index
    %6 = vector.load %arg1[%c3, %c0_6, %c0_7] : memref<5x16x32xf32, #tpu.memory_space<vmem>>, vector<1x16x32xf32>
    %7 = vector.shape_cast %6 : vector<1x16x32xf32> to vector<16x32xf32>
    %c4 = arith.constant 4 : index
    %c0_8 = arith.constant 0 : index
    %c0_9 = arith.constant 0 : index
    %8 = vector.load %arg1[%c4, %c0_8, %c0_9] : memref<5x16x32xf32, #tpu.memory_space<vmem>>, vector<1x16x32xf32>
    %9 = vector.shape_cast %8 : vector<1x16x32xf32> to vector<16x32xf32>
    %c0_10 = arith.constant 0 : index
    %c0_11 = arith.constant 0 : index
    %c0_12 = arith.constant 0 : index
    %10 = vector.load %arg2[%c0_10, %c0_11, %c0_12] : memref<5x32x32xf32, #tpu.memory_space<vmem>>, vector<1x32x32xf32>
    %11 = vector.shape_cast %10 : vector<1x32x32xf32> to vector<32x32xf32>
    %c1_13 = arith.constant 1 : index
    %c0_14 = arith.constant 0 : index
    %c0_15 = arith.constant 0 : index
    %12 = vector.load %arg2[%c1_13, %c0_14, %c0_15] : memref<5x32x32xf32, #tpu.memory_space<vmem>>, vector<1x32x32xf32>
    %13 = vector.shape_cast %12 : vector<1x32x32xf32> to vector<32x32xf32>
    %c2_16 = arith.constant 2 : index
    %c0_17 = arith.constant 0 : index
    %c0_18 = arith.constant 0 : index
    %14 = vector.load %arg2[%c2_16, %c0_17, %c0_18] : memref<5x32x32xf32, #tpu.memory_space<vmem>>, vector<1x32x32xf32>
    %15 = vector.shape_cast %14 : vector<1x32x32xf32> to vector<32x32xf32>
    %c3_19 = arith.constant 3 : index
    %c0_20 = arith.constant 0 : index
    %c0_21 = arith.constant 0 : index
    %16 = vector.load %arg2[%c3_19, %c0_20, %c0_21] : memref<5x32x32xf32, #tpu.memory_space<vmem>>, vector<1x32x32xf32>
    %17 = vector.shape_cast %16 : vector<1x32x32xf32> to vector<32x32xf32>
    %c4_22 = arith.constant 4 : index
    %c0_23 = arith.constant 0 : index
    %c0_24 = arith.constant 0 : index
    %18 = vector.load %arg2[%c4_22, %c0_23, %c0_24] : memref<5x32x32xf32, #tpu.memory_space<vmem>>, vector<1x32x32xf32>
    %19 = vector.shape_cast %18 : vector<1x32x32xf32> to vector<32x32xf32>
    %c0_25 = arith.constant 0 : index
    %c0_26 = arith.constant 0 : index
    %c0_27 = arith.constant 0 : index
    %20 = vector.load %arg3[%c0_25, %c0_26, %c0_27] : memref<5x1x32xf32, #tpu.memory_space<vmem>>, vector<1x1x32xf32>
    %21 = vector.shape_cast %20 : vector<1x1x32xf32> to vector<1x32xf32>
    %c1_28 = arith.constant 1 : index
    %c0_29 = arith.constant 0 : index
    %c0_30 = arith.constant 0 : index
    %22 = vector.load %arg3[%c1_28, %c0_29, %c0_30] : memref<5x1x32xf32, #tpu.memory_space<vmem>>, vector<1x1x32xf32>
    %23 = vector.shape_cast %22 : vector<1x1x32xf32> to vector<1x32xf32>
    %c2_31 = arith.constant 2 : index
    %c0_32 = arith.constant 0 : index
    %c0_33 = arith.constant 0 : index
    %24 = vector.load %arg3[%c2_31, %c0_32, %c0_33] : memref<5x1x32xf32, #tpu.memory_space<vmem>>, vector<1x1x32xf32>
    %25 = vector.shape_cast %24 : vector<1x1x32xf32> to vector<1x32xf32>
    %c3_34 = arith.constant 3 : index
    %c0_35 = arith.constant 0 : index
    %c0_36 = arith.constant 0 : index
    %26 = vector.load %arg3[%c3_34, %c0_35, %c0_36] : memref<5x1x32xf32, #tpu.memory_space<vmem>>, vector<1x1x32xf32>
    %27 = vector.shape_cast %26 : vector<1x1x32xf32> to vector<1x32xf32>
    %c4_37 = arith.constant 4 : index
    %c0_38 = arith.constant 0 : index
    %c0_39 = arith.constant 0 : index
    %28 = vector.load %arg3[%c4_37, %c0_38, %c0_39] : memref<5x1x32xf32, #tpu.memory_space<vmem>>, vector<1x1x32xf32>
    %29 = vector.shape_cast %28 : vector<1x1x32xf32> to vector<1x32xf32>
    %c0_40 = arith.constant 0 : index
    %c0_41 = arith.constant 0 : index
    %c0_42 = arith.constant 0 : index
    %30 = vector.load %arg4[%c0_40, %c0_41, %c0_42] : memref<3x32x32xf32, #tpu.memory_space<vmem>>, vector<1x32x32xf32>
    %31 = vector.shape_cast %30 : vector<1x32x32xf32> to vector<32x32xf32>
    %c1_43 = arith.constant 1 : index
    %c0_44 = arith.constant 0 : index
    %c0_45 = arith.constant 0 : index
    %32 = vector.load %arg4[%c1_43, %c0_44, %c0_45] : memref<3x32x32xf32, #tpu.memory_space<vmem>>, vector<1x32x32xf32>
    %33 = vector.shape_cast %32 : vector<1x32x32xf32> to vector<32x32xf32>
    %c2_46 = arith.constant 2 : index
    %c0_47 = arith.constant 0 : index
    %c0_48 = arith.constant 0 : index
    %34 = vector.load %arg4[%c2_46, %c0_47, %c0_48] : memref<3x32x32xf32, #tpu.memory_space<vmem>>, vector<1x32x32xf32>
    %35 = vector.shape_cast %34 : vector<1x32x32xf32> to vector<32x32xf32>
    %c0_49 = arith.constant 0 : index
    %c0_50 = arith.constant 0 : index
    %36 = vector.load %arg5[%c0_49, %c0_50] : memref<1x32xf32, #tpu.memory_space<vmem>>, vector<1x32xf32>
    %37 = tpu.iota {dimensions = array<i32: 0>} : vector<32x32xi32>
    %38 = tpu.iota {dimensions = array<i32: 1>} : vector<32x32xi32>
    %39 = arith.cmpi sle, %37, %38 : vector<32x32xi32>
    %40 = arith.extui %39 : vector<32x32xi1> to vector<32x32xi32>
    %41 = arith.sitofp %40 : vector<32x32xi32> to vector<32x32xf32>
    %cst = arith.constant 0.000000e+00 : f32
    %42 = vector.broadcast %cst : f32 to vector<2x32xf32>
    %c0_i32 = arith.constant 0 : i32
    %43 = arith.index_cast %c0_i32 : i32 to index
    %c0_51 = arith.constant 0 : index
    %c0_52 = arith.constant 0 : index
    %44 = vector.load %arg0[%43, %c0_51, %c0_52] : memref<8x2x16xf32, #tpu.memory_space<vmem>>, vector<1x2x16xf32>
    %45 = vector.shape_cast %44 : vector<1x2x16xf32> to vector<2x16xf32>
    %cst_53 = arith.constant dense<0.000000e+00> : vector<2x32xf32>
    %46 = tpu.matmul %45, %1, %cst_53 {dimension_numbers = #tpu.dot_dimension_numbers<[1], [0], [0], [1], [0, 0, 1, 1], [], []>} : vector<2x16xf32>, vector<16x32xf32>, vector<2x32xf32> -> vector<2x32xf32>
    %cst_54 = arith.constant dense<0.000000e+00> : vector<2x32xf32>
    %47 = tpu.matmul %42, %11, %cst_54 {dimension_numbers = #tpu.dot_dimension_numbers<[1], [0], [0], [1], [0, 0, 1, 1], [], []>} : vector<2x32xf32>, vector<32x32xf32>, vector<2x32xf32> -> vector<2x32xf32>
    %48 = arith.addf %46, %47 : vector<2x32xf32>
    %49 = vector.broadcast %21 : vector<1x32xf32> to vector<2x32xf32>
    %50 = arith.addf %48, %49 : vector<2x32xf32>
    %cst_55 = arith.constant dense<0.000000e+00> : vector<2x32xf32>
    %51 = tpu.matmul %45, %3, %cst_55 {dimension_numbers = #tpu.dot_dimension_numbers<[1], [0], [0], [1], [0, 0, 1, 1], [], []>} : vector<2x16xf32>, vector<16x32xf32>, vector<2x32xf32> -> vector<2x32xf32>
    %cst_56 = arith.constant dense<0.000000e+00> : vector<2x32xf32>
    %52 = tpu.matmul %42, %13, %cst_56 {dimension_numbers = #tpu.dot_dimension_numbers<[1], [0], [0], [1], [0, 0, 1, 1], [], []>} : vector<2x32xf32>, vector<32x32xf32>, vector<2x32xf32> -> vector<2x32xf32>
    %53 = arith.addf %51, %52 : vector<2x32xf32>
    %54 = vector.broadcast %23 : vector<1x32xf32> to vector<2x32xf32>
    %55 = arith.addf %53, %54 : vector<2x32xf32>
    %cst_57 = arith.constant dense<0.000000e+00> : vector<2x32xf32>
    %56 = tpu.matmul %45, %5, %cst_57 {dimension_numbers = #tpu.dot_dimension_numbers<[1], [0], [0], [1], [0, 0, 1, 1], [], []>} : vector<2x16xf32>, vector<16x32xf32>, vector<2x32xf32> -> vector<2x32xf32>
    %cst_58 = arith.constant dense<0.000000e+00> : vector<2x32xf32>
    %57 = tpu.matmul %42, %15, %cst_58 {dimension_numbers = #tpu.dot_dimension_numbers<[1], [0], [0], [1], [0, 0, 1, 1], [], []>} : vector<2x32xf32>, vector<32x32xf32>, vector<2x32xf32> -> vector<2x32xf32>
    %58 = arith.addf %56, %57 : vector<2x32xf32>
    %59 = vector.broadcast %25 : vector<1x32xf32> to vector<2x32xf32>
    %60 = arith.addf %58, %59 : vector<2x32xf32>
    %cst_59 = arith.constant dense<0.000000e+00> : vector<2x32xf32>
    %61 = tpu.matmul %45, %7, %cst_59 {dimension_numbers = #tpu.dot_dimension_numbers<[1], [0], [0], [1], [0, 0, 1, 1], [], []>} : vector<2x16xf32>, vector<16x32xf32>, vector<2x32xf32> -> vector<2x32xf32>
    %cst_60 = arith.constant dense<0.000000e+00> : vector<2x32xf32>
    %62 = tpu.matmul %42, %17, %cst_60 {dimension_numbers = #tpu.dot_dimension_numbers<[1], [0], [0], [1], [0, 0, 1, 1], [], []>} : vector<2x32xf32>, vector<32x32xf32>, vector<2x32xf32> -> vector<2x32xf32>
    %63 = arith.addf %61, %62 : vector<2x32xf32>
    %64 = vector.broadcast %27 : vector<1x32xf32> to vector<2x32xf32>
    %65 = arith.addf %63, %64 : vector<2x32xf32>
    %cst_61 = arith.constant dense<0.000000e+00> : vector<2x32xf32>
    %66 = tpu.matmul %45, %9, %cst_61 {dimension_numbers = #tpu.dot_dimension_numbers<[1], [0], [0], [1], [0, 0, 1, 1], [], []>} : vector<2x16xf32>, vector<16x32xf32>, vector<2x32xf32> -> vector<2x32xf32>
    %cst_62 = arith.constant dense<0.000000e+00> : vector<2x32xf32>
    %67 = tpu.matmul %42, %19, %cst_62 {dimension_numbers = #tpu.dot_dimension_numbers<[1], [0], [0], [1], [0, 0, 1, 1], [], []>} : vector<2x32xf32>, vector<32x32xf32>, vector<2x32xf32> -> vector<2x32xf32>
    %68 = arith.addf %66, %67 : vector<2x32xf32>
    %69 = vector.broadcast %29 : vector<1x32xf32> to vector<2x32xf32>
    %70 = arith.addf %68, %69 : vector<2x32xf32>
    %cst_63 = arith.constant dense<0xFF800000> : vector<2xf32>
    %71 = vector.multi_reduction <maximumf>, %55, %cst_63 [1] : vector<2x32xf32> to vector<2xf32>
    %72 = vector.shape_cast %71 : vector<2xf32> to vector<2x1xf32>
    %73 = vector.broadcast %72 : vector<2x1xf32> to vector<2x32xf32>
    %74 = arith.subf %55, %73 : vector<2x32xf32>
    %75 = math.exp %74 : vector<2x32xf32>
    %cst_64 = arith.constant dense<0.000000e+00> : vector<2xf32>
    %76 = vector.multi_reduction <add>, %75, %cst_64 [1] : vector<2x32xf32> to vector<2xf32>
    %77 = vector.shape_cast %76 : vector<2xf32> to vector<2x1xf32>
    %78 = tpu.reciprocal %77 {approx = true} : vector<2x1xf32> -> vector<2x1xf32>
    %79 = vector.broadcast %78 : vector<2x1xf32> to vector<2x32xf32>
    %80 = arith.mulf %75, %79 : vector<2x32xf32>
    %cst_65 = arith.constant dense<0.000000e+00> : vector<2x32xf32>
    %81 = tpu.matmul %80, %41, %cst_65 {dimension_numbers = #tpu.dot_dimension_numbers<[1], [0], [0], [1], [0, 0, 1, 1], [], []>} : vector<2x32xf32>, vector<32x32xf32>, vector<2x32xf32> -> vector<2x32xf32>
    %cst_66 = arith.constant 1.000000e+00 : f32
    %82 = vector.broadcast %cst_66 : f32 to vector<2x32xf32>
    %83 = arith.subf %82, %81 : vector<2x32xf32>
    %cst_67 = arith.constant dense<0xFF800000> : vector<2xf32>
    %84 = vector.multi_reduction <maximumf>, %60, %cst_67 [1] : vector<2x32xf32> to vector<2xf32>
    %85 = vector.shape_cast %84 : vector<2xf32> to vector<2x1xf32>
    %86 = vector.broadcast %85 : vector<2x1xf32> to vector<2x32xf32>
    %87 = arith.subf %60, %86 : vector<2x32xf32>
    %88 = math.exp %87 : vector<2x32xf32>
    %cst_68 = arith.constant dense<0.000000e+00> : vector<2xf32>
    %89 = vector.multi_reduction <add>, %88, %cst_68 [1] : vector<2x32xf32> to vector<2xf32>
    %90 = vector.shape_cast %89 : vector<2xf32> to vector<2x1xf32>
    %91 = tpu.reciprocal %90 {approx = true} : vector<2x1xf32> -> vector<2x1xf32>
    %92 = vector.broadcast %91 : vector<2x1xf32> to vector<2x32xf32>
    %93 = arith.mulf %88, %92 : vector<2x32xf32>
    %cst_69 = arith.constant dense<0.000000e+00> : vector<2x32xf32>
    %94 = tpu.matmul %93, %41, %cst_69 {dimension_numbers = #tpu.dot_dimension_numbers<[1], [0], [0], [1], [0, 0, 1, 1], [], []>} : vector<2x32xf32>, vector<32x32xf32>, vector<2x32xf32> -> vector<2x32xf32>
    %cst_70 = arith.constant dense<0xFF800000> : vector<2xf32>
    %95 = vector.multi_reduction <maximumf>, %65, %cst_70 [1] : vector<2x32xf32> to vector<2xf32>
    %96 = vector.shape_cast %95 : vector<2xf32> to vector<2x1xf32>
    %97 = vector.broadcast %96 : vector<2x1xf32> to vector<2x32xf32>
    %98 = arith.subf %65, %97 : vector<2x32xf32>
    %99 = math.exp %98 : vector<2x32xf32>
    %cst_71 = arith.constant dense<0.000000e+00> : vector<2xf32>
    %100 = vector.multi_reduction <add>, %99, %cst_71 [1] : vector<2x32xf32> to vector<2xf32>
    %101 = vector.shape_cast %100 : vector<2xf32> to vector<2x1xf32>
    %102 = tpu.reciprocal %101 {approx = true} : vector<2x1xf32> -> vector<2x1xf32>
    %103 = vector.broadcast %102 : vector<2x1xf32> to vector<2x32xf32>
    %104 = arith.mulf %99, %103 : vector<2x32xf32>
    %cst_72 = arith.constant dense<0.000000e+00> : vector<2x32xf32>
    %105 = tpu.matmul %104, %41, %cst_72 {dimension_numbers = #tpu.dot_dimension_numbers<[1], [0], [0], [1], [0, 0, 1, 1], [], []>} : vector<2x32xf32>, vector<32x32xf32>, vector<2x32xf32> -> vector<2x32xf32>
    %cst_73 = arith.constant 1.000000e+00 : f32
    %106 = vector.broadcast %cst_73 : f32 to vector<2x32xf32>
    %107 = arith.subf %106, %105 : vector<2x32xf32>
    %cst_74 = arith.constant dense<0xFF800000> : vector<2xf32>
    %108 = vector.multi_reduction <maximumf>, %70, %cst_74 [1] : vector<2x32xf32> to vector<2xf32>
    %109 = vector.shape_cast %108 : vector<2xf32> to vector<2x1xf32>
    %110 = vector.broadcast %109 : vector<2x1xf32> to vector<2x32xf32>
    %111 = arith.subf %70, %110 : vector<2x32xf32>
    %112 = math.exp %111 : vector<2x32xf32>
    %cst_75 = arith.constant dense<0.000000e+00> : vector<2xf32>
    %113 = vector.multi_reduction <add>, %112, %cst_75 [1] : vector<2x32xf32> to vector<2xf32>
    %114 = vector.shape_cast %113 : vector<2xf32> to vector<2x1xf32>
    %115 = tpu.reciprocal %114 {approx = true} : vector<2x1xf32> -> vector<2x1xf32>
    %116 = vector.broadcast %115 : vector<2x1xf32> to vector<2x32xf32>
    %117 = arith.mulf %112, %116 : vector<2x32xf32>
    %cst_76 = arith.constant dense<0.000000e+00> : vector<2x32xf32>
    %118 = tpu.matmul %117, %41, %cst_76 {dimension_numbers = #tpu.dot_dimension_numbers<[1], [0], [0], [1], [0, 0, 1, 1], [], []>} : vector<2x32xf32>, vector<32x32xf32>, vector<2x32xf32> -> vector<2x32xf32>
    %119 = math.tanh %50 : vector<2x32xf32>
    %120 = arith.mulf %118, %107 : vector<2x32xf32>
    %121 = arith.subf %118, %120 : vector<2x32xf32>
    %122 = arith.subf %107, %120 : vector<2x32xf32>
    %123 = arith.mulf %94, %83 : vector<2x32xf32>
    %124 = arith.subf %94, %123 : vector<2x32xf32>
    %125 = arith.subf %83, %123 : vector<2x32xf32>
    %126 = arith.mulf %123, %42 : vector<2x32xf32>
    %127 = arith.mulf %120, %119 : vector<2x32xf32>
    %128 = arith.addf %126, %127 : vector<2x32xf32>
    %129 = arith.mulf %124, %42 : vector<2x32xf32>
    %130 = arith.mulf %121, %119 : vector<2x32xf32>
    %131 = arith.addf %129, %130 : vector<2x32xf32>
    %132 = arith.addf %131, %128 : vector<2x32xf32>
    %133 = arith.mulf %125, %42 : vector<2x32xf32>
    %134 = arith.mulf %122, %119 : vector<2x32xf32>
    %135 = arith.addf %133, %134 : vector<2x32xf32>
    %136 = arith.addf %135, %128 : vector<2x32xf32>
    %cst_77 = arith.constant dense<0.000000e+00> : vector<2x32xf32>
    %137 = tpu.matmul %132, %31, %cst_77 {dimension_numbers = #tpu.dot_dimension_numbers<[1], [0], [0], [1], [0, 0, 1, 1], [], []>} : vector<2x32xf32>, vector<32x32xf32>, vector<2x32xf32> -> vector<2x32xf32>
    %cst_78 = arith.constant dense<0.000000e+00> : vector<2x32xf32>
    %138 = tpu.matmul %136, %33, %cst_78 {dimension_numbers = #tpu.dot_dimension_numbers<[1], [0], [0], [1], [0, 0, 1, 1], [], []>} : vector<2x32xf32>, vector<32x32xf32>, vector<2x32xf32> -> vector<2x32xf32>
    %139 = arith.addf %137, %138 : vector<2x32xf32>
    %cst_79 = arith.constant dense<0.000000e+00> : vector<2x32xf32>
    %140 = tpu.matmul %128, %35, %cst_79 {dimension_numbers = #tpu.dot_dimension_numbers<[1], [0], [0], [1], [0, 0, 1, 1], [], []>} : vector<2x32xf32>, vector<32x32xf32>, vector<2x32xf32> -> vector<2x32xf32>
    %141 = arith.addf %139, %140 : vector<2x32xf32>
    %142 = vector.broadcast %36 : vector<1x32xf32> to vector<2x32xf32>
    %143 = arith.addf %141, %142 : vector<2x32xf32>
    %144 = math.tanh %143 : vector<2x32xf32>
    %145 = math.tanh %136 : vector<2x32xf32>
    %146 = arith.index_cast %c0_i32 : i32 to index
    %c0_80 = arith.constant 0 : index
    %c0_81 = arith.constant 0 : index
    %147 = vector.load %arg6[%146, %c0_80, %c0_81] : memref<8x2x32xf32, #tpu.memory_space<vmem>>, vector<1x2x32xf32>
    %148 = vector.shape_cast %147 : vector<1x2x32xf32> to vector<2x32xf32>
    %149 = vector.shape_cast %145 : vector<2x32xf32> to vector<1x2x32xf32>
    tpu.vector_store %arg6[%146, %c0_80, %c0_81], %149 {strides = array<i32>} : memref<8x2x32xf32, #tpu.memory_space<vmem>>, vector<1x2x32xf32>,
    %150 = math.tanh %132 : vector<2x32xf32>
    %151 = arith.index_cast %c0_i32 : i32 to index
    %c0_82 = arith.constant 0 : index
    %c0_83 = arith.constant 0 : index
    %152 = vector.load %arg7[%151, %c0_82, %c0_83] : memref<8x2x32xf32, #tpu.memory_space<vmem>>, vector<1x2x32xf32>
    %153 = vector.shape_cast %152 : vector<1x2x32xf32> to vector<2x32xf32>
    %154 = vector.shape_cast %150 : vector<2x32xf32> to vector<1x2x32xf32>
    tpu.vector_store %arg7[%151, %c0_82, %c0_83], %154 {strides = array<i32>} : memref<8x2x32xf32, #tpu.memory_space<vmem>>, vector<1x2x32xf32>,
    %155 = math.tanh %128 : vector<2x32xf32>
    %156 = arith.index_cast %c0_i32 : i32 to index
    %c0_84 = arith.constant 0 : index
    %c0_85 = arith.constant 0 : index
    %157 = vector.load %arg8[%156, %c0_84, %c0_85] : memref<8x2x32xf32, #tpu.memory_space<vmem>>, vector<1x2x32xf32>
    %158 = vector.shape_cast %157 : vector<1x2x32xf32> to vector<2x32xf32>
    %159 = vector.shape_cast %155 : vector<2x32xf32> to vector<1x2x32xf32>
    tpu.vector_store %arg8[%156, %c0_84, %c0_85], %159 {strides = array<i32>} : memref<8x2x32xf32, #tpu.memory_space<vmem>>, vector<1x2x32xf32>,
    %c1_i32 = arith.constant 1 : i32
    %160 = arith.index_cast %c1_i32 : i32 to index
    %c0_86 = arith.constant 0 : index
    %c0_87 = arith.constant 0 : index
    %161 = vector.load %arg0[%160, %c0_86, %c0_87] : memref<8x2x16xf32, #tpu.memory_space<vmem>>, vector<1x2x16xf32>
    %162 = vector.shape_cast %161 : vector<1x2x16xf32> to vector<2x16xf32>
    %cst_88 = arith.constant dense<0.000000e+00> : vector<2x32xf32>
    %163 = tpu.matmul %162, %1, %cst_88 {dimension_numbers = #tpu.dot_dimension_numbers<[1], [0], [0], [1], [0, 0, 1, 1], [], []>} : vector<2x16xf32>, vector<16x32xf32>, vector<2x32xf32> -> vector<2x32xf32>
    %cst_89 = arith.constant dense<0.000000e+00> : vector<2x32xf32>
    %164 = tpu.matmul %144, %11, %cst_89 {dimension_numbers = #tpu.dot_dimension_numbers<[1], [0], [0], [1], [0, 0, 1, 1], [], []>} : vector<2x32xf32>, vector<32x32xf32>, vector<2x32xf32> -> vector<2x32xf32>
    %165 = arith.addf %163, %164 : vector<2x32xf32>
    %166 = vector.broadcast %21 : vector<1x32xf32> to vector<2x32xf32>
    %167 = arith.addf %165, %166 : vector<2x32xf32>
    %cst_90 = arith.constant dense<0.000000e+00> : vector<2x32xf32>
    %168 = tpu.matmul %162, %3, %cst_90 {dimension_numbers = #tpu.dot_dimension_numbers<[1], [0], [0], [1], [0, 0, 1, 1], [], []>} : vector<2x16xf32>, vector<16x32xf32>, vector<2x32xf32> -> vector<2x32xf32>
    %cst_91 = arith.constant dense<0.000000e+00> : vector<2x32xf32>
    %169 = tpu.matmul %144, %13, %cst_91 {dimension_numbers = #tpu.dot_dimension_numbers<[1], [0], [0], [1], [0, 0, 1, 1], [], []>} : vector<2x32xf32>, vector<32x32xf32>, vector<2x32xf32> -> vector<2x32xf32>
    %170 = arith.addf %168, %169 : vector<2x32xf32>
    %171 = vector.broadcast %23 : vector<1x32xf32> to vector<2x32xf32>
    %172 = arith.addf %170, %171 : vector<2x32xf32>
    %cst_92 = arith.constant dense<0.000000e+00> : vector<2x32xf32>
    %173 = tpu.matmul %162, %5, %cst_92 {dimension_numbers = #tpu.dot_dimension_numbers<[1], [0], [0], [1], [0, 0, 1, 1], [], []>} : vector<2x16xf32>, vector<16x32xf32>, vector<2x32xf32> -> vector<2x32xf32>
    %cst_93 = arith.constant dense<0.000000e+00> : vector<2x32xf32>
    %174 = tpu.matmul %144, %15, %cst_93 {dimension_numbers = #tpu.dot_dimension_numbers<[1], [0], [0], [1], [0, 0, 1, 1], [], []>} : vector<2x32xf32>, vector<32x32xf32>, vector<2x32xf32> -> vector<2x32xf32>
    %175 = arith.addf %173, %174 : vector<2x32xf32>
    %176 = vector.broadcast %25 : vector<1x32xf32> to vector<2x32xf32>
    %177 = arith.addf %175, %176 : vector<2x32xf32>
    %cst_94 = arith.constant dense<0.000000e+00> : vector<2x32xf32>
    %178 = tpu.matmul %162, %7, %cst_94 {dimension_numbers = #tpu.dot_dimension_numbers<[1], [0], [0], [1], [0, 0, 1, 1], [], []>} : vector<2x16xf32>, vector<16x32xf32>, vector<2x32xf32> -> vector<2x32xf32>
    %cst_95 = arith.constant dense<0.000000e+00> : vector<2x32xf32>
    %179 = tpu.matmul %144, %17, %cst_95 {dimension_numbers = #tpu.dot_dimension_numbers<[1], [0], [0], [1], [0, 0, 1, 1], [], []>} : vector<2x32xf32>, vector<32x32xf32>, vector<2x32xf32> -> vector<2x32xf32>
    %180 = arith.addf %178, %179 : vector<2x32xf32>
    %181 = vector.broadcast %27 : vector<1x32xf32> to vector<2x32xf32>
    %182 = arith.addf %180, %181 : vector<2x32xf32>
    %cst_96 = arith.constant dense<0.000000e+00> : vector<2x32xf32>
    %183 = tpu.matmul %162, %9, %cst_96 {dimension_numbers = #tpu.dot_dimension_numbers<[1], [0], [0], [1], [0, 0, 1, 1], [], []>} : vector<2x16xf32>, vector<16x32xf32>, vector<2x32xf32> -> vector<2x32xf32>
    %cst_97 = arith.constant dense<0.000000e+00> : vector<2x32xf32>
    %184 = tpu.matmul %144, %19, %cst_97 {dimension_numbers = #tpu.dot_dimension_numbers<[1], [0], [0], [1], [0, 0, 1, 1], [], []>} : vector<2x32xf32>, vector<32x32xf32>, vector<2x32xf32> -> vector<2x32xf32>
    %185 = arith.addf %183, %184 : vector<2x32xf32>
    %186 = vector.broadcast %29 : vector<1x32xf32> to vector<2x32xf32>
    %187 = arith.addf %185, %186 : vector<2x32xf32>
    %cst_98 = arith.constant dense<0xFF800000> : vector<2xf32>
    %188 = vector.multi_reduction <maximumf>, %172, %cst_98 [1] : vector<2x32xf32> to vector<2xf32>
    %189 = vector.shape_cast %188 : vector<2xf32> to vector<2x1xf32>
    %190 = vector.broadcast %189 : vector<2x1xf32> to vector<2x32xf32>
    %191 = arith.subf %172, %190 : vector<2x32xf32>
    %192 = math.exp %191 : vector<2x32xf32>
    %cst_99 = arith.constant dense<0.000000e+00> : vector<2xf32>
    %193 = vector.multi_reduction <add>, %192, %cst_99 [1] : vector<2x32xf32> to vector<2xf32>
    %194 = vector.shape_cast %193 : vector<2xf32> to vector<2x1xf32>
    %195 = tpu.reciprocal %194 {approx = true} : vector<2x1xf32> -> vector<2x1xf32>
    %196 = vector.broadcast %195 : vector<2x1xf32> to vector<2x32xf32>
    %197 = arith.mulf %192, %196 : vector<2x32xf32>
    %cst_100 = arith.constant dense<0.000000e+00> : vector<2x32xf32>
    %198 = tpu.matmul %197, %41, %cst_100 {dimension_numbers = #tpu.dot_dimension_numbers<[1], [0], [0], [1], [0, 0, 1, 1], [], []>} : vector<2x32xf32>, vector<32x32xf32>, vector<2x32xf32> -> vector<2x32xf32>
    %cst_101 = arith.constant 1.000000e+00 : f32
    %199 = vector.broadcast %cst_101 : f32 to vector<2x32xf32>
    %200 = arith.subf %199, %198 : vector<2x32xf32>
    %cst_102 = arith.constant dense<0xFF800000> : vector<2xf32>
    %201 = vector.multi_reduction <maximumf>, %177, %cst_102 [1] : vector<2x32xf32> to vector<2xf32>
    %202 = vector.shape_cast %201 : vector<2xf32> to vector<2x1xf32>
    %203 = vector.broadcast %202 : vector<2x1xf32> to vector<2x32xf32>
    %204 = arith.subf %177, %203 : vector<2x32xf32>
    %205 = math.exp %204 : vector<2x32xf32>
    %cst_103 = arith.constant dense<0.000000e+00> : vector<2xf32>
    %206 = vector.multi_reduction <add>, %205, %cst_103 [1] : vector<2x32xf32> to vector<2xf32>
    %207 = vector.shape_cast %206 : vector<2xf32> to vector<2x1xf32>
    %208 = tpu.reciprocal %207 {approx = true} : vector<2x1xf32> -> vector<2x1xf32>
    %209 = vector.broadcast %208 : vector<2x1xf32> to vector<2x32xf32>
    %210 = arith.mulf %205, %209 : vector<2x32xf32>
    %cst_104 = arith.constant dense<0.000000e+00> : vector<2x32xf32>
    %211 = tpu.matmul %210, %41, %cst_104 {dimension_numbers = #tpu.dot_dimension_numbers<[1], [0], [0], [1], [0, 0, 1, 1], [], []>} : vector<2x32xf32>, vector<32x32xf32>, vector<2x32xf32> -> vector<2x32xf32>
    %cst_105 = arith.constant dense<0xFF800000> : vector<2xf32>
    %212 = vector.multi_reduction <maximumf>, %182, %cst_105 [1] : vector<2x32xf32> to vector<2xf32>
    %213 = vector.shape_cast %212 : vector<2xf32> to vector<2x1xf32>
    %214 = vector.broadcast %213 : vector<2x1xf32> to vector<2x32xf32>
    %215 = arith.subf %182, %214 : vector<2x32xf32>
    %216 = math.exp %215 : vector<2x32xf32>
    %cst_106 = arith.constant dense<0.000000e+00> : vector<2xf32>
    %217 = vector.multi_reduction <add>, %216, %cst_106 [1] : vector<2x32xf32> to vector<2xf32>
    %218 = vector.shape_cast %217 : vector<2xf32> to vector<2x1xf32>
    %219 = tpu.reciprocal %218 {approx = true} : vector<2x1xf32> -> vector<2x1xf32>
    %220 = vector.broadcast %219 : vector<2x1xf32> to vector<2x32xf32>
    %221 = arith.mulf %216, %220 : vector<2x32xf32>
    %cst_107 = arith.constant dense<0.000000e+00> : vector<2x32xf32>
    %222 = tpu.matmul %221, %41, %cst_107 {dimension_numbers = #tpu.dot_dimension_numbers<[1], [0], [0], [1], [0, 0, 1, 1], [], []>} : vector<2x32xf32>, vector<32x32xf32>, vector<2x32xf32> -> vector<2x32xf32>
    %cst_108 = arith.constant 1.000000e+00 : f32
    %223 = vector.broadcast %cst_108 : f32 to vector<2x32xf32>
    %224 = arith.subf %223, %222 : vector<2x32xf32>
    %cst_109 = arith.constant dense<0xFF800000> : vector<2xf32>
    %225 = vector.multi_reduction <maximumf>, %187, %cst_109 [1] : vector<2x32xf32> to vector<2xf32>
    %226 = vector.shape_cast %225 : vector<2xf32> to vector<2x1xf32>
    %227 = vector.broadcast %226 : vector<2x1xf32> to vector<2x32xf32>
    %228 = arith.subf %187, %227 : vector<2x32xf32>
    %229 = math.exp %228 : vector<2x32xf32>
    %cst_110 = arith.constant dense<0.000000e+00> : vector<2xf32>
    %230 = vector.multi_reduction <add>, %229, %cst_110 [1] : vector<2x32xf32> to vector<2xf32>
    %231 = vector.shape_cast %230 : vector<2xf32> to vector<2x1xf32>
    %232 = tpu.reciprocal %231 {approx = true} : vector<2x1xf32> -> vector<2x1xf32>
    %233 = vector.broadcast %232 : vector<2x1xf32> to vector<2x32xf32>
    %234 = arith.mulf %229, %233 : vector<2x32xf32>
    %cst_111 = arith.constant dense<0.000000e+00> : vector<2x32xf32>
    %235 = tpu.matmul %234, %41, %cst_111 {dimension_numbers = #tpu.dot_dimension_numbers<[1], [0], [0], [1], [0, 0, 1, 1], [], []>} : vector<2x32xf32>, vector<32x32xf32>, vector<2x32xf32> -> vector<2x32xf32>
    %236 = math.tanh %167 : vector<2x32xf32>
    %237 = arith.mulf %235, %224 : vector<2x32xf32>
    %238 = arith.subf %235, %237 : vector<2x32xf32>
    %239 = arith.subf %224, %237 : vector<2x32xf32>
    %240 = arith.mulf %211, %200 : vector<2x32xf32>
    %241 = arith.subf %211, %240 : vector<2x32xf32>
    %242 = arith.subf %200, %240 : vector<2x32xf32>
    %243 = arith.mulf %240, %143 : vector<2x32xf32>
    %244 = arith.mulf %237, %236 : vector<2x32xf32>
    %245 = arith.addf %243, %244 : vector<2x32xf32>
    %246 = arith.mulf %241, %143 : vector<2x32xf32>
    %247 = arith.mulf %238, %236 : vector<2x32xf32>
    %248 = arith.addf %246, %247 : vector<2x32xf32>
    %249 = arith.addf %248, %245 : vector<2x32xf32>
    %250 = arith.mulf %242, %143 : vector<2x32xf32>
    %251 = arith.mulf %239, %236 : vector<2x32xf32>
    %252 = arith.addf %250, %251 : vector<2x32xf32>
    %253 = arith.addf %252, %245 : vector<2x32xf32>
    %cst_112 = arith.constant dense<0.000000e+00> : vector<2x32xf32>
    %254 = tpu.matmul %249, %31, %cst_112 {dimension_numbers = #tpu.dot_dimension_numbers<[1], [0], [0], [1], [0, 0, 1, 1], [], []>} : vector<2x32xf32>, vector<32x32xf32>, vector<2x32xf32> -> vector<2x32xf32>
    %cst_113 = arith.constant dense<0.000000e+00> : vector<2x32xf32>
    %255 = tpu.matmul %253, %33, %cst_113 {dimension_numbers = #tpu.dot_dimension_numbers<[1], [0], [0], [1], [0, 0, 1, 1], [], []>} : vector<2x32xf32>, vector<32x32xf32>, vector<2x32xf32> -> vector<2x32xf32>
    %256 = arith.addf %254, %255 : vector<2x32xf32>
    %cst_114 = arith.constant dense<0.000000e+00> : vector<2x32xf32>
    %257 = tpu.matmul %245, %35, %cst_114 {dimension_numbers = #tpu.dot_dimension_numbers<[1], [0], [0], [1], [0, 0, 1, 1], [], []>} : vector<2x32xf32>, vector<32x32xf32>, vector<2x32xf32> -> vector<2x32xf32>
    %258 = arith.addf %256, %257 : vector<2x32xf32>
    %259 = vector.broadcast %36 : vector<1x32xf32> to vector<2x32xf32>
    %260 = arith.addf %258, %259 : vector<2x32xf32>
    %261 = math.tanh %260 : vector<2x32xf32>
    %262 = math.tanh %253 : vector<2x32xf32>
    %263 = arith.index_cast %c1_i32 : i32 to index
    %c0_115 = arith.constant 0 : index
    %c0_116 = arith.constant 0 : index
    %264 = vector.load %arg6[%263, %c0_115, %c0_116] : memref<8x2x32xf32, #tpu.memory_space<vmem>>, vector<1x2x32xf32>
    %265 = vector.shape_cast %264 : vector<1x2x32xf32> to vector<2x32xf32>
    %266 = vector.shape_cast %262 : vector<2x32xf32> to vector<1x2x32xf32>
    tpu.vector_store %arg6[%263, %c0_115, %c0_116], %266 {strides = array<i32>} : memref<8x2x32xf32, #tpu.memory_space<vmem>>, vector<1x2x32xf32>,
    %267 = math.tanh %249 : vector<2x32xf32>
    %268 = arith.index_cast %c1_i32 : i32 to index
    %c0_117 = arith.constant 0 : index
    %c0_118 = arith.constant 0 : index
    %269 = vector.load %arg7[%268, %c0_117, %c0_118] : memref<8x2x32xf32, #tpu.memory_space<vmem>>, vector<1x2x32xf32>
    %270 = vector.shape_cast %269 : vector<1x2x32xf32> to vector<2x32xf32>
    %271 = vector.shape_cast %267 : vector<2x32xf32> to vector<1x2x32xf32>
    tpu.vector_store %arg7[%268, %c0_117, %c0_118], %271 {strides = array<i32>} : memref<8x2x32xf32, #tpu.memory_space<vmem>>, vector<1x2x32xf32>,
    %272 = math.tanh %245 : vector<2x32xf32>
    %273 = arith.index_cast %c1_i32 : i32 to index
    %c0_119 = arith.constant 0 : index
    %c0_120 = arith.constant 0 : index
    %274 = vector.load %arg8[%273, %c0_119, %c0_120] : memref<8x2x32xf32, #tpu.memory_space<vmem>>, vector<1x2x32xf32>
    %275 = vector.shape_cast %274 : vector<1x2x32xf32> to vector<2x32xf32>
    %276 = vector.shape_cast %272 : vector<2x32xf32> to vector<1x2x32xf32>
    tpu.vector_store %arg8[%273, %c0_119, %c0_120], %276 {strides = array<i32>} : memref<8x2x32xf32, #tpu.memory_space<vmem>>, vector<1x2x32xf32>,
    %c2_i32 = arith.constant 2 : i32
    %277 = arith.index_cast %c2_i32 : i32 to index
    %c0_121 = arith.constant 0 : index
    %c0_122 = arith.constant 0 : index
    %278 = vector.load %arg0[%277, %c0_121, %c0_122] : memref<8x2x16xf32, #tpu.memory_space<vmem>>, vector<1x2x16xf32>
    %279 = vector.shape_cast %278 : vector<1x2x16xf32> to vector<2x16xf32>
    %cst_123 = arith.constant dense<0.000000e+00> : vector<2x32xf32>
    %280 = tpu.matmul %279, %1, %cst_123 {dimension_numbers = #tpu.dot_dimension_numbers<[1], [0], [0], [1], [0, 0, 1, 1], [], []>} : vector<2x16xf32>, vector<16x32xf32>, vector<2x32xf32> -> vector<2x32xf32>
    %cst_124 = arith.constant dense<0.000000e+00> : vector<2x32xf32>
    %281 = tpu.matmul %261, %11, %cst_124 {dimension_numbers = #tpu.dot_dimension_numbers<[1], [0], [0], [1], [0, 0, 1, 1], [], []>} : vector<2x32xf32>, vector<32x32xf32>, vector<2x32xf32> -> vector<2x32xf32>
    %282 = arith.addf %280, %281 : vector<2x32xf32>
    %283 = vector.broadcast %21 : vector<1x32xf32> to vector<2x32xf32>
    %284 = arith.addf %282, %283 : vector<2x32xf32>
    %cst_125 = arith.constant dense<0.000000e+00> : vector<2x32xf32>
    %285 = tpu.matmul %279, %3, %cst_125 {dimension_numbers = #tpu.dot_dimension_numbers<[1], [0], [0], [1], [0, 0, 1, 1], [], []>} : vector<2x16xf32>, vector<16x32xf32>, vector<2x32xf32> -> vector<2x32xf32>
    %cst_126 = arith.constant dense<0.000000e+00> : vector<2x32xf32>
    %286 = tpu.matmul %261, %13, %cst_126 {dimension_numbers = #tpu.dot_dimension_numbers<[1], [0], [0], [1], [0, 0, 1, 1], [], []>} : vector<2x32xf32>, vector<32x32xf32>, vector<2x32xf32> -> vector<2x32xf32>
    %287 = arith.addf %285, %286 : vector<2x32xf32>
    %288 = vector.broadcast %23 : vector<1x32xf32> to vector<2x32xf32>
    %289 = arith.addf %287, %288 : vector<2x32xf32>
    %cst_127 = arith.constant dense<0.000000e+00> : vector<2x32xf32>
    %290 = tpu.matmul %279, %5, %cst_127 {dimension_numbers = #tpu.dot_dimension_numbers<[1], [0], [0], [1], [0, 0, 1, 1], [], []>} : vector<2x16xf32>, vector<16x32xf32>, vector<2x32xf32> -> vector<2x32xf32>
    %cst_128 = arith.constant dense<0.000000e+00> : vector<2x32xf32>
    %291 = tpu.matmul %261, %15, %cst_128 {dimension_numbers = #tpu.dot_dimension_numbers<[1], [0], [0], [1], [0, 0, 1, 1], [], []>} : vector<2x32xf32>, vector<32x32xf32>, vector<2x32xf32> -> vector<2x32xf32>
    %292 = arith.addf %290, %291 : vector<2x32xf32>
    %293 = vector.broadcast %25 : vector<1x32xf32> to vector<2x32xf32>
    %294 = arith.addf %292, %293 : vector<2x32xf32>
    %cst_129 = arith.constant dense<0.000000e+00> : vector<2x32xf32>
    %295 = tpu.matmul %279, %7, %cst_129 {dimension_numbers = #tpu.dot_dimension_numbers<[1], [0], [0], [1], [0, 0, 1, 1], [], []>} : vector<2x16xf32>, vector<16x32xf32>, vector<2x32xf32> -> vector<2x32xf32>
    %cst_130 = arith.constant dense<0.000000e+00> : vector<2x32xf32>
    %296 = tpu.matmul %261, %17, %cst_130 {dimension_numbers = #tpu.dot_dimension_numbers<[1], [0], [0], [1], [0, 0, 1, 1], [], []>} : vector<2x32xf32>, vector<32x32xf32>, vector<2x32xf32> -> vector<2x32xf32>
    %297 = arith.addf %295, %296 : vector<2x32xf32>
    %298 = vector.broadcast %27 : vector<1x32xf32> to vector<2x32xf32>
    %299 = arith.addf %297, %298 : vector<2x32xf32>
    %cst_131 = arith.constant dense<0.000000e+00> : vector<2x32xf32>
    %300 = tpu.matmul %279, %9, %cst_131 {dimension_numbers = #tpu.dot_dimension_numbers<[1], [0], [0], [1], [0, 0, 1, 1], [], []>} : vector<2x16xf32>, vector<16x32xf32>, vector<2x32xf32> -> vector<2x32xf32>
    %cst_132 = arith.constant dense<0.000000e+00> : vector<2x32xf32>
    %301 = tpu.matmul %261, %19, %cst_132 {dimension_numbers = #tpu.dot_dimension_numbers<[1], [0], [0], [1], [0, 0, 1, 1], [], []>} : vector<2x32xf32>, vector<32x32xf32>, vector<2x32xf32> -> vector<2x32xf32>
    %302 = arith.addf %300, %301 : vector<2x32xf32>
    %303 = vector.broadcast %29 : vector<1x32xf32> to vector<2x32xf32>
    %304 = arith.addf %302, %303 : vector<2x32xf32>
    %cst_133 = arith.constant dense<0xFF800000> : vector<2xf32>
    %305 = vector.multi_reduction <maximumf>, %289, %cst_133 [1] : vector<2x32xf32> to vector<2xf32>
    %306 = vector.shape_cast %305 : vector<2xf32> to vector<2x1xf32>
    %307 = vector.broadcast %306 : vector<2x1xf32> to vector<2x32xf32>
    %308 = arith.subf %289, %307 : vector<2x32xf32>
    %309 = math.exp %308 : vector<2x32xf32>
    %cst_134 = arith.constant dense<0.000000e+00> : vector<2xf32>
    %310 = vector.multi_reduction <add>, %309, %cst_134 [1] : vector<2x32xf32> to vector<2xf32>
    %311 = vector.shape_cast %310 : vector<2xf32> to vector<2x1xf32>
    %312 = tpu.reciprocal %311 {approx = true} : vector<2x1xf32> -> vector<2x1xf32>
    %313 = vector.broadcast %312 : vector<2x1xf32> to vector<2x32xf32>
    %314 = arith.mulf %309, %313 : vector<2x32xf32>
    %cst_135 = arith.constant dense<0.000000e+00> : vector<2x32xf32>
    %315 = tpu.matmul %314, %41, %cst_135 {dimension_numbers = #tpu.dot_dimension_numbers<[1], [0], [0], [1], [0, 0, 1, 1], [], []>} : vector<2x32xf32>, vector<32x32xf32>, vector<2x32xf32> -> vector<2x32xf32>
    %cst_136 = arith.constant 1.000000e+00 : f32
    %316 = vector.broadcast %cst_136 : f32 to vector<2x32xf32>
    %317 = arith.subf %316, %315 : vector<2x32xf32>
    %cst_137 = arith.constant dense<0xFF800000> : vector<2xf32>
    %318 = vector.multi_reduction <maximumf>, %294, %cst_137 [1] : vector<2x32xf32> to vector<2xf32>
    %319 = vector.shape_cast %318 : vector<2xf32> to vector<2x1xf32>
    %320 = vector.broadcast %319 : vector<2x1xf32> to vector<2x32xf32>
    %321 = arith.subf %294, %320 : vector<2x32xf32>
    %322 = math.exp %321 : vector<2x32xf32>
    %cst_138 = arith.constant dense<0.000000e+00> : vector<2xf32>
    %323 = vector.multi_reduction <add>, %322, %cst_138 [1] : vector<2x32xf32> to vector<2xf32>
    %324 = vector.shape_cast %323 : vector<2xf32> to vector<2x1xf32>
    %325 = tpu.reciprocal %324 {approx = true} : vector<2x1xf32> -> vector<2x1xf32>
    %326 = vector.broadcast %325 : vector<2x1xf32> to vector<2x32xf32>
    %327 = arith.mulf %322, %326 : vector<2x32xf32>
    %cst_139 = arith.constant dense<0.000000e+00> : vector<2x32xf32>
    %328 = tpu.matmul %327, %41, %cst_139 {dimension_numbers = #tpu.dot_dimension_numbers<[1], [0], [0], [1], [0, 0, 1, 1], [], []>} : vector<2x32xf32>, vector<32x32xf32>, vector<2x32xf32> -> vector<2x32xf32>
    %cst_140 = arith.constant dense<0xFF800000> : vector<2xf32>
    %329 = vector.multi_reduction <maximumf>, %299, %cst_140 [1] : vector<2x32xf32> to vector<2xf32>
    %330 = vector.shape_cast %329 : vector<2xf32> to vector<2x1xf32>
    %331 = vector.broadcast %330 : vector<2x1xf32> to vector<2x32xf32>
    %332 = arith.subf %299, %331 : vector<2x32xf32>
    %333 = math.exp %332 : vector<2x32xf32>
    %cst_141 = arith.constant dense<0.000000e+00> : vector<2xf32>
    %334 = vector.multi_reduction <add>, %333, %cst_141 [1] : vector<2x32xf32> to vector<2xf32>
    %335 = vector.shape_cast %334 : vector<2xf32> to vector<2x1xf32>
    %336 = tpu.reciprocal %335 {approx = true} : vector<2x1xf32> -> vector<2x1xf32>
    %337 = vector.broadcast %336 : vector<2x1xf32> to vector<2x32xf32>
    %338 = arith.mulf %333, %337 : vector<2x32xf32>
    %cst_142 = arith.constant dense<0.000000e+00> : vector<2x32xf32>
    %339 = tpu.matmul %338, %41, %cst_142 {dimension_numbers = #tpu.dot_dimension_numbers<[1], [0], [0], [1], [0, 0, 1, 1], [], []>} : vector<2x32xf32>, vector<32x32xf32>, vector<2x32xf32> -> vector<2x32xf32>
    %cst_143 = arith.constant 1.000000e+00 : f32
    %340 = vector.broadcast %cst_143 : f32 to vector<2x32xf32>
    %341 = arith.subf %340, %339 : vector<2x32xf32>
    %cst_144 = arith.constant dense<0xFF800000> : vector<2xf32>
    %342 = vector.multi_reduction <maximumf>, %304, %cst_144 [1] : vector<2x32xf32> to vector<2xf32>
    %343 = vector.shape_cast %342 : vector<2xf32> to vector<2x1xf32>
    %344 = vector.broadcast %343 : vector<2x1xf32> to vector<2x32xf32>
    %345 = arith.subf %304, %344 : vector<2x32xf32>
    %346 = math.exp %345 : vector<2x32xf32>
    %cst_145 = arith.constant dense<0.000000e+00> : vector<2xf32>
    %347 = vector.multi_reduction <add>, %346, %cst_145 [1] : vector<2x32xf32> to vector<2xf32>
    %348 = vector.shape_cast %347 : vector<2xf32> to vector<2x1xf32>
    %349 = tpu.reciprocal %348 {approx = true} : vector<2x1xf32> -> vector<2x1xf32>
    %350 = vector.broadcast %349 : vector<2x1xf32> to vector<2x32xf32>
    %351 = arith.mulf %346, %350 : vector<2x32xf32>
    %cst_146 = arith.constant dense<0.000000e+00> : vector<2x32xf32>
    %352 = tpu.matmul %351, %41, %cst_146 {dimension_numbers = #tpu.dot_dimension_numbers<[1], [0], [0], [1], [0, 0, 1, 1], [], []>} : vector<2x32xf32>, vector<32x32xf32>, vector<2x32xf32> -> vector<2x32xf32>
    %353 = math.tanh %284 : vector<2x32xf32>
    %354 = arith.mulf %352, %341 : vector<2x32xf32>
    %355 = arith.subf %352, %354 : vector<2x32xf32>
    %356 = arith.subf %341, %354 : vector<2x32xf32>
    %357 = arith.mulf %328, %317 : vector<2x32xf32>
    %358 = arith.subf %328, %357 : vector<2x32xf32>
    %359 = arith.subf %317, %357 : vector<2x32xf32>
    %360 = arith.mulf %357, %260 : vector<2x32xf32>
    %361 = arith.mulf %354, %353 : vector<2x32xf32>
    %362 = arith.addf %360, %361 : vector<2x32xf32>
    %363 = arith.mulf %358, %260 : vector<2x32xf32>
    %364 = arith.mulf %355, %353 : vector<2x32xf32>
    %365 = arith.addf %363, %364 : vector<2x32xf32>
    %366 = arith.addf %365, %362 : vector<2x32xf32>
    %367 = arith.mulf %359, %260 : vector<2x32xf32>
    %368 = arith.mulf %356, %353 : vector<2x32xf32>
    %369 = arith.addf %367, %368 : vector<2x32xf32>
    %370 = arith.addf %369, %362 : vector<2x32xf32>
    %cst_147 = arith.constant dense<0.000000e+00> : vector<2x32xf32>
    %371 = tpu.matmul %366, %31, %cst_147 {dimension_numbers = #tpu.dot_dimension_numbers<[1], [0], [0], [1], [0, 0, 1, 1], [], []>} : vector<2x32xf32>, vector<32x32xf32>, vector<2x32xf32> -> vector<2x32xf32>
    %cst_148 = arith.constant dense<0.000000e+00> : vector<2x32xf32>
    %372 = tpu.matmul %370, %33, %cst_148 {dimension_numbers = #tpu.dot_dimension_numbers<[1], [0], [0], [1], [0, 0, 1, 1], [], []>} : vector<2x32xf32>, vector<32x32xf32>, vector<2x32xf32> -> vector<2x32xf32>
    %373 = arith.addf %371, %372 : vector<2x32xf32>
    %cst_149 = arith.constant dense<0.000000e+00> : vector<2x32xf32>
    %374 = tpu.matmul %362, %35, %cst_149 {dimension_numbers = #tpu.dot_dimension_numbers<[1], [0], [0], [1], [0, 0, 1, 1], [], []>} : vector<2x32xf32>, vector<32x32xf32>, vector<2x32xf32> -> vector<2x32xf32>
    %375 = arith.addf %373, %374 : vector<2x32xf32>
    %376 = vector.broadcast %36 : vector<1x32xf32> to vector<2x32xf32>
    %377 = arith.addf %375, %376 : vector<2x32xf32>
    %378 = math.tanh %377 : vector<2x32xf32>
    %379 = math.tanh %370 : vector<2x32xf32>
    %380 = arith.index_cast %c2_i32 : i32 to index
    %c0_150 = arith.constant 0 : index
    %c0_151 = arith.constant 0 : index
    %381 = vector.load %arg6[%380, %c0_150, %c0_151] : memref<8x2x32xf32, #tpu.memory_space<vmem>>, vector<1x2x32xf32>
    %382 = vector.shape_cast %381 : vector<1x2x32xf32> to vector<2x32xf32>
    %383 = vector.shape_cast %379 : vector<2x32xf32> to vector<1x2x32xf32>
    tpu.vector_store %arg6[%380, %c0_150, %c0_151], %383 {strides = array<i32>} : memref<8x2x32xf32, #tpu.memory_space<vmem>>, vector<1x2x32xf32>,
    %384 = math.tanh %366 : vector<2x32xf32>
    %385 = arith.index_cast %c2_i32 : i32 to index
    %c0_152 = arith.constant 0 : index
    %c0_153 = arith.constant 0 : index
    %386 = vector.load %arg7[%385, %c0_152, %c0_153] : memref<8x2x32xf32, #tpu.memory_space<vmem>>, vector<1x2x32xf32>
    %387 = vector.shape_cast %386 : vector<1x2x32xf32> to vector<2x32xf32>
    %388 = vector.shape_cast %384 : vector<2x32xf32> to vector<1x2x32xf32>
    tpu.vector_store %arg7[%385, %c0_152, %c0_153], %388 {strides = array<i32>} : memref<8x2x32xf32, #tpu.memory_space<vmem>>, vector<1x2x32xf32>,
    %389 = math.tanh %362 : vector<2x32xf32>
    %390 = arith.index_cast %c2_i32 : i32 to index
    %c0_154 = arith.constant 0 : index
    %c0_155 = arith.constant 0 : index
    %391 = vector.load %arg8[%390, %c0_154, %c0_155] : memref<8x2x32xf32, #tpu.memory_space<vmem>>, vector<1x2x32xf32>
    %392 = vector.shape_cast %391 : vector<1x2x32xf32> to vector<2x32xf32>
    %393 = vector.shape_cast %389 : vector<2x32xf32> to vector<1x2x32xf32>
    tpu.vector_store %arg8[%390, %c0_154, %c0_155], %393 {strides = array<i32>} : memref<8x2x32xf32, #tpu.memory_space<vmem>>, vector<1x2x32xf32>,
    %c3_i32 = arith.constant 3 : i32
    %394 = arith.index_cast %c3_i32 : i32 to index
    %c0_156 = arith.constant 0 : index
    %c0_157 = arith.constant 0 : index
    %395 = vector.load %arg0[%394, %c0_156, %c0_157] : memref<8x2x16xf32, #tpu.memory_space<vmem>>, vector<1x2x16xf32>
    %396 = vector.shape_cast %395 : vector<1x2x16xf32> to vector<2x16xf32>
    %cst_158 = arith.constant dense<0.000000e+00> : vector<2x32xf32>
    %397 = tpu.matmul %396, %1, %cst_158 {dimension_numbers = #tpu.dot_dimension_numbers<[1], [0], [0], [1], [0, 0, 1, 1], [], []>} : vector<2x16xf32>, vector<16x32xf32>, vector<2x32xf32> -> vector<2x32xf32>
    %cst_159 = arith.constant dense<0.000000e+00> : vector<2x32xf32>
    %398 = tpu.matmul %378, %11, %cst_159 {dimension_numbers = #tpu.dot_dimension_numbers<[1], [0], [0], [1], [0, 0, 1, 1], [], []>} : vector<2x32xf32>, vector<32x32xf32>, vector<2x32xf32> -> vector<2x32xf32>
    %399 = arith.addf %397, %398 : vector<2x32xf32>
    %400 = vector.broadcast %21 : vector<1x32xf32> to vector<2x32xf32>
    %401 = arith.addf %399, %400 : vector<2x32xf32>
    %cst_160 = arith.constant dense<0.000000e+00> : vector<2x32xf32>
    %402 = tpu.matmul %396, %3, %cst_160 {dimension_numbers = #tpu.dot_dimension_numbers<[1], [0], [0], [1], [0, 0, 1, 1], [], []>} : vector<2x16xf32>, vector<16x32xf32>, vector<2x32xf32> -> vector<2x32xf32>
    %cst_161 = arith.constant dense<0.000000e+00> : vector<2x32xf32>
    %403 = tpu.matmul %378, %13, %cst_161 {dimension_numbers = #tpu.dot_dimension_numbers<[1], [0], [0], [1], [0, 0, 1, 1], [], []>} : vector<2x32xf32>, vector<32x32xf32>, vector<2x32xf32> -> vector<2x32xf32>
    %404 = arith.addf %402, %403 : vector<2x32xf32>
    %405 = vector.broadcast %23 : vector<1x32xf32> to vector<2x32xf32>
    %406 = arith.addf %404, %405 : vector<2x32xf32>
    %cst_162 = arith.constant dense<0.000000e+00> : vector<2x32xf32>
    %407 = tpu.matmul %396, %5, %cst_162 {dimension_numbers = #tpu.dot_dimension_numbers<[1], [0], [0], [1], [0, 0, 1, 1], [], []>} : vector<2x16xf32>, vector<16x32xf32>, vector<2x32xf32> -> vector<2x32xf32>
    %cst_163 = arith.constant dense<0.000000e+00> : vector<2x32xf32>
    %408 = tpu.matmul %378, %15, %cst_163 {dimension_numbers = #tpu.dot_dimension_numbers<[1], [0], [0], [1], [0, 0, 1, 1], [], []>} : vector<2x32xf32>, vector<32x32xf32>, vector<2x32xf32> -> vector<2x32xf32>
    %409 = arith.addf %407, %408 : vector<2x32xf32>
    %410 = vector.broadcast %25 : vector<1x32xf32> to vector<2x32xf32>
    %411 = arith.addf %409, %410 : vector<2x32xf32>
    %cst_164 = arith.constant dense<0.000000e+00> : vector<2x32xf32>
    %412 = tpu.matmul %396, %7, %cst_164 {dimension_numbers = #tpu.dot_dimension_numbers<[1], [0], [0], [1], [0, 0, 1, 1], [], []>} : vector<2x16xf32>, vector<16x32xf32>, vector<2x32xf32> -> vector<2x32xf32>
    %cst_165 = arith.constant dense<0.000000e+00> : vector<2x32xf32>
    %413 = tpu.matmul %378, %17, %cst_165 {dimension_numbers = #tpu.dot_dimension_numbers<[1], [0], [0], [1], [0, 0, 1, 1], [], []>} : vector<2x32xf32>, vector<32x32xf32>, vector<2x32xf32> -> vector<2x32xf32>
    %414 = arith.addf %412, %413 : vector<2x32xf32>
    %415 = vector.broadcast %27 : vector<1x32xf32> to vector<2x32xf32>
    %416 = arith.addf %414, %415 : vector<2x32xf32>
    %cst_166 = arith.constant dense<0.000000e+00> : vector<2x32xf32>
    %417 = tpu.matmul %396, %9, %cst_166 {dimension_numbers = #tpu.dot_dimension_numbers<[1], [0], [0], [1], [0, 0, 1, 1], [], []>} : vector<2x16xf32>, vector<16x32xf32>, vector<2x32xf32> -> vector<2x32xf32>
    %cst_167 = arith.constant dense<0.000000e+00> : vector<2x32xf32>
    %418 = tpu.matmul %378, %19, %cst_167 {dimension_numbers = #tpu.dot_dimension_numbers<[1], [0], [0], [1], [0, 0, 1, 1], [], []>} : vector<2x32xf32>, vector<32x32xf32>, vector<2x32xf32> -> vector<2x32xf32>
    %419 = arith.addf %417, %418 : vector<2x32xf32>
    %420 = vector.broadcast %29 : vector<1x32xf32> to vector<2x32xf32>
    %421 = arith.addf %419, %420 : vector<2x32xf32>
    %cst_168 = arith.constant dense<0xFF800000> : vector<2xf32>
    %422 = vector.multi_reduction <maximumf>, %406, %cst_168 [1] : vector<2x32xf32> to vector<2xf32>
    %423 = vector.shape_cast %422 : vector<2xf32> to vector<2x1xf32>
    %424 = vector.broadcast %423 : vector<2x1xf32> to vector<2x32xf32>
    %425 = arith.subf %406, %424 : vector<2x32xf32>
    %426 = math.exp %425 : vector<2x32xf32>
    %cst_169 = arith.constant dense<0.000000e+00> : vector<2xf32>
    %427 = vector.multi_reduction <add>, %426, %cst_169 [1] : vector<2x32xf32> to vector<2xf32>
    %428 = vector.shape_cast %427 : vector<2xf32> to vector<2x1xf32>
    %429 = tpu.reciprocal %428 {approx = true} : vector<2x1xf32> -> vector<2x1xf32>
    %430 = vector.broadcast %429 : vector<2x1xf32> to vector<2x32xf32>
    %431 = arith.mulf %426, %430 : vector<2x32xf32>
    %cst_170 = arith.constant dense<0.000000e+00> : vector<2x32xf32>
    %432 = tpu.matmul %431, %41, %cst_170 {dimension_numbers = #tpu.dot_dimension_numbers<[1], [0], [0], [1], [0, 0, 1, 1], [], []>} : vector<2x32xf32>, vector<32x32xf32>, vector<2x32xf32> -> vector<2x32xf32>
    %cst_171 = arith.constant 1.000000e+00 : f32
    %433 = vector.broadcast %cst_171 : f32 to vector<2x32xf32>
    %434 = arith.subf %433, %432 : vector<2x32xf32>
    %cst_172 = arith.constant dense<0xFF800000> : vector<2xf32>
    %435 = vector.multi_reduction <maximumf>, %411, %cst_172 [1] : vector<2x32xf32> to vector<2xf32>
    %436 = vector.shape_cast %435 : vector<2xf32> to vector<2x1xf32>
    %437 = vector.broadcast %436 : vector<2x1xf32> to vector<2x32xf32>
    %438 = arith.subf %411, %437 : vector<2x32xf32>
    %439 = math.exp %438 : vector<2x32xf32>
    %cst_173 = arith.constant dense<0.000000e+00> : vector<2xf32>
    %440 = vector.multi_reduction <add>, %439, %cst_173 [1] : vector<2x32xf32> to vector<2xf32>
    %441 = vector.shape_cast %440 : vector<2xf32> to vector<2x1xf32>
    %442 = tpu.reciprocal %441 {approx = true} : vector<2x1xf32> -> vector<2x1xf32>
    %443 = vector.broadcast %442 : vector<2x1xf32> to vector<2x32xf32>
    %444 = arith.mulf %439, %443 : vector<2x32xf32>
    %cst_174 = arith.constant dense<0.000000e+00> : vector<2x32xf32>
    %445 = tpu.matmul %444, %41, %cst_174 {dimension_numbers = #tpu.dot_dimension_numbers<[1], [0], [0], [1], [0, 0, 1, 1], [], []>} : vector<2x32xf32>, vector<32x32xf32>, vector<2x32xf32> -> vector<2x32xf32>
    %cst_175 = arith.constant dense<0xFF800000> : vector<2xf32>
    %446 = vector.multi_reduction <maximumf>, %416, %cst_175 [1] : vector<2x32xf32> to vector<2xf32>
    %447 = vector.shape_cast %446 : vector<2xf32> to vector<2x1xf32>
    %448 = vector.broadcast %447 : vector<2x1xf32> to vector<2x32xf32>
    %449 = arith.subf %416, %448 : vector<2x32xf32>
    %450 = math.exp %449 : vector<2x32xf32>
    %cst_176 = arith.constant dense<0.000000e+00> : vector<2xf32>
    %451 = vector.multi_reduction <add>, %450, %cst_176 [1] : vector<2x32xf32> to vector<2xf32>
    %452 = vector.shape_cast %451 : vector<2xf32> to vector<2x1xf32>
    %453 = tpu.reciprocal %452 {approx = true} : vector<2x1xf32> -> vector<2x1xf32>
    %454 = vector.broadcast %453 : vector<2x1xf32> to vector<2x32xf32>
    %455 = arith.mulf %450, %454 : vector<2x32xf32>
    %cst_177 = arith.constant dense<0.000000e+00> : vector<2x32xf32>
    %456 = tpu.matmul %455, %41, %cst_177 {dimension_numbers = #tpu.dot_dimension_numbers<[1], [0], [0], [1], [0, 0, 1, 1], [], []>} : vector<2x32xf32>, vector<32x32xf32>, vector<2x32xf32> -> vector<2x32xf32>
    %cst_178 = arith.constant 1.000000e+00 : f32
    %457 = vector.broadcast %cst_178 : f32 to vector<2x32xf32>
    %458 = arith.subf %457, %456 : vector<2x32xf32>
    %cst_179 = arith.constant dense<0xFF800000> : vector<2xf32>
    %459 = vector.multi_reduction <maximumf>, %421, %cst_179 [1] : vector<2x32xf32> to vector<2xf32>
    %460 = vector.shape_cast %459 : vector<2xf32> to vector<2x1xf32>
    %461 = vector.broadcast %460 : vector<2x1xf32> to vector<2x32xf32>
    %462 = arith.subf %421, %461 : vector<2x32xf32>
    %463 = math.exp %462 : vector<2x32xf32>
    %cst_180 = arith.constant dense<0.000000e+00> : vector<2xf32>
    %464 = vector.multi_reduction <add>, %463, %cst_180 [1] : vector<2x32xf32> to vector<2xf32>
    %465 = vector.shape_cast %464 : vector<2xf32> to vector<2x1xf32>
    %466 = tpu.reciprocal %465 {approx = true} : vector<2x1xf32> -> vector<2x1xf32>
    %467 = vector.broadcast %466 : vector<2x1xf32> to vector<2x32xf32>
    %468 = arith.mulf %463, %467 : vector<2x32xf32>
    %cst_181 = arith.constant dense<0.000000e+00> : vector<2x32xf32>
    %469 = tpu.matmul %468, %41, %cst_181 {dimension_numbers = #tpu.dot_dimension_numbers<[1], [0], [0], [1], [0, 0, 1, 1], [], []>} : vector<2x32xf32>, vector<32x32xf32>, vector<2x32xf32> -> vector<2x32xf32>
    %470 = math.tanh %401 : vector<2x32xf32>
    %471 = arith.mulf %469, %458 : vector<2x32xf32>
    %472 = arith.subf %469, %471 : vector<2x32xf32>
    %473 = arith.subf %458, %471 : vector<2x32xf32>
    %474 = arith.mulf %445, %434 : vector<2x32xf32>
    %475 = arith.subf %445, %474 : vector<2x32xf32>
    %476 = arith.subf %434, %474 : vector<2x32xf32>
    %477 = arith.mulf %474, %377 : vector<2x32xf32>
    %478 = arith.mulf %471, %470 : vector<2x32xf32>
    %479 = arith.addf %477, %478 : vector<2x32xf32>
    %480 = arith.mulf %475, %377 : vector<2x32xf32>
    %481 = arith.mulf %472, %470 : vector<2x32xf32>
    %482 = arith.addf %480, %481 : vector<2x32xf32>
    %483 = arith.addf %482, %479 : vector<2x32xf32>
    %484 = arith.mulf %476, %377 : vector<2x32xf32>
    %485 = arith.mulf %473, %470 : vector<2x32xf32>
    %486 = arith.addf %484, %485 : vector<2x32xf32>
    %487 = arith.addf %486, %479 : vector<2x32xf32>
    %cst_182 = arith.constant dense<0.000000e+00> : vector<2x32xf32>
    %488 = tpu.matmul %483, %31, %cst_182 {dimension_numbers = #tpu.dot_dimension_numbers<[1], [0], [0], [1], [0, 0, 1, 1], [], []>} : vector<2x32xf32>, vector<32x32xf32>, vector<2x32xf32> -> vector<2x32xf32>
    %cst_183 = arith.constant dense<0.000000e+00> : vector<2x32xf32>
    %489 = tpu.matmul %487, %33, %cst_183 {dimension_numbers = #tpu.dot_dimension_numbers<[1], [0], [0], [1], [0, 0, 1, 1], [], []>} : vector<2x32xf32>, vector<32x32xf32>, vector<2x32xf32> -> vector<2x32xf32>
    %490 = arith.addf %488, %489 : vector<2x32xf32>
    %cst_184 = arith.constant dense<0.000000e+00> : vector<2x32xf32>
    %491 = tpu.matmul %479, %35, %cst_184 {dimension_numbers = #tpu.dot_dimension_numbers<[1], [0], [0], [1], [0, 0, 1, 1], [], []>} : vector<2x32xf32>, vector<32x32xf32>, vector<2x32xf32> -> vector<2x32xf32>
    %492 = arith.addf %490, %491 : vector<2x32xf32>
    %493 = vector.broadcast %36 : vector<1x32xf32> to vector<2x32xf32>
    %494 = arith.addf %492, %493 : vector<2x32xf32>
    %495 = math.tanh %494 : vector<2x32xf32>
    %496 = math.tanh %487 : vector<2x32xf32>
    %497 = arith.index_cast %c3_i32 : i32 to index
    %c0_185 = arith.constant 0 : index
    %c0_186 = arith.constant 0 : index
    %498 = vector.load %arg6[%497, %c0_185, %c0_186] : memref<8x2x32xf32, #tpu.memory_space<vmem>>, vector<1x2x32xf32>
    %499 = vector.shape_cast %498 : vector<1x2x32xf32> to vector<2x32xf32>
    %500 = vector.shape_cast %496 : vector<2x32xf32> to vector<1x2x32xf32>
    tpu.vector_store %arg6[%497, %c0_185, %c0_186], %500 {strides = array<i32>} : memref<8x2x32xf32, #tpu.memory_space<vmem>>, vector<1x2x32xf32>,
    %501 = math.tanh %483 : vector<2x32xf32>
    %502 = arith.index_cast %c3_i32 : i32 to index
    %c0_187 = arith.constant 0 : index
    %c0_188 = arith.constant 0 : index
    %503 = vector.load %arg7[%502, %c0_187, %c0_188] : memref<8x2x32xf32, #tpu.memory_space<vmem>>, vector<1x2x32xf32>
    %504 = vector.shape_cast %503 : vector<1x2x32xf32> to vector<2x32xf32>
    %505 = vector.shape_cast %501 : vector<2x32xf32> to vector<1x2x32xf32>
    tpu.vector_store %arg7[%502, %c0_187, %c0_188], %505 {strides = array<i32>} : memref<8x2x32xf32, #tpu.memory_space<vmem>>, vector<1x2x32xf32>,
    %506 = math.tanh %479 : vector<2x32xf32>
    %507 = arith.index_cast %c3_i32 : i32 to index
    %c0_189 = arith.constant 0 : index
    %c0_190 = arith.constant 0 : index
    %508 = vector.load %arg8[%507, %c0_189, %c0_190] : memref<8x2x32xf32, #tpu.memory_space<vmem>>, vector<1x2x32xf32>
    %509 = vector.shape_cast %508 : vector<1x2x32xf32> to vector<2x32xf32>
    %510 = vector.shape_cast %506 : vector<2x32xf32> to vector<1x2x32xf32>
    tpu.vector_store %arg8[%507, %c0_189, %c0_190], %510 {strides = array<i32>} : memref<8x2x32xf32, #tpu.memory_space<vmem>>, vector<1x2x32xf32>,
    %c4_i32 = arith.constant 4 : i32
    %511 = arith.index_cast %c4_i32 : i32 to index
    %c0_191 = arith.constant 0 : index
    %c0_192 = arith.constant 0 : index
    %512 = vector.load %arg0[%511, %c0_191, %c0_192] : memref<8x2x16xf32, #tpu.memory_space<vmem>>, vector<1x2x16xf32>
    %513 = vector.shape_cast %512 : vector<1x2x16xf32> to vector<2x16xf32>
    %cst_193 = arith.constant dense<0.000000e+00> : vector<2x32xf32>
    %514 = tpu.matmul %513, %1, %cst_193 {dimension_numbers = #tpu.dot_dimension_numbers<[1], [0], [0], [1], [0, 0, 1, 1], [], []>} : vector<2x16xf32>, vector<16x32xf32>, vector<2x32xf32> -> vector<2x32xf32>
    %cst_194 = arith.constant dense<0.000000e+00> : vector<2x32xf32>
    %515 = tpu.matmul %495, %11, %cst_194 {dimension_numbers = #tpu.dot_dimension_numbers<[1], [0], [0], [1], [0, 0, 1, 1], [], []>} : vector<2x32xf32>, vector<32x32xf32>, vector<2x32xf32> -> vector<2x32xf32>
    %516 = arith.addf %514, %515 : vector<2x32xf32>
    %517 = vector.broadcast %21 : vector<1x32xf32> to vector<2x32xf32>
    %518 = arith.addf %516, %517 : vector<2x32xf32>
    %cst_195 = arith.constant dense<0.000000e+00> : vector<2x32xf32>
    %519 = tpu.matmul %513, %3, %cst_195 {dimension_numbers = #tpu.dot_dimension_numbers<[1], [0], [0], [1], [0, 0, 1, 1], [], []>} : vector<2x16xf32>, vector<16x32xf32>, vector<2x32xf32> -> vector<2x32xf32>
    %cst_196 = arith.constant dense<0.000000e+00> : vector<2x32xf32>
    %520 = tpu.matmul %495, %13, %cst_196 {dimension_numbers = #tpu.dot_dimension_numbers<[1], [0], [0], [1], [0, 0, 1, 1], [], []>} : vector<2x32xf32>, vector<32x32xf32>, vector<2x32xf32> -> vector<2x32xf32>
    %521 = arith.addf %519, %520 : vector<2x32xf32>
    %522 = vector.broadcast %23 : vector<1x32xf32> to vector<2x32xf32>
    %523 = arith.addf %521, %522 : vector<2x32xf32>
    %cst_197 = arith.constant dense<0.000000e+00> : vector<2x32xf32>
    %524 = tpu.matmul %513, %5, %cst_197 {dimension_numbers = #tpu.dot_dimension_numbers<[1], [0], [0], [1], [0, 0, 1, 1], [], []>} : vector<2x16xf32>, vector<16x32xf32>, vector<2x32xf32> -> vector<2x32xf32>
    %cst_198 = arith.constant dense<0.000000e+00> : vector<2x32xf32>
    %525 = tpu.matmul %495, %15, %cst_198 {dimension_numbers = #tpu.dot_dimension_numbers<[1], [0], [0], [1], [0, 0, 1, 1], [], []>} : vector<2x32xf32>, vector<32x32xf32>, vector<2x32xf32> -> vector<2x32xf32>
    %526 = arith.addf %524, %525 : vector<2x32xf32>
    %527 = vector.broadcast %25 : vector<1x32xf32> to vector<2x32xf32>
    %528 = arith.addf %526, %527 : vector<2x32xf32>
    %cst_199 = arith.constant dense<0.000000e+00> : vector<2x32xf32>
    %529 = tpu.matmul %513, %7, %cst_199 {dimension_numbers = #tpu.dot_dimension_numbers<[1], [0], [0], [1], [0, 0, 1, 1], [], []>} : vector<2x16xf32>, vector<16x32xf32>, vector<2x32xf32> -> vector<2x32xf32>
    %cst_200 = arith.constant dense<0.000000e+00> : vector<2x32xf32>
    %530 = tpu.matmul %495, %17, %cst_200 {dimension_numbers = #tpu.dot_dimension_numbers<[1], [0], [0], [1], [0, 0, 1, 1], [], []>} : vector<2x32xf32>, vector<32x32xf32>, vector<2x32xf32> -> vector<2x32xf32>
    %531 = arith.addf %529, %530 : vector<2x32xf32>
    %532 = vector.broadcast %27 : vector<1x32xf32> to vector<2x32xf32>
    %533 = arith.addf %531, %532 : vector<2x32xf32>
    %cst_201 = arith.constant dense<0.000000e+00> : vector<2x32xf32>
    %534 = tpu.matmul %513, %9, %cst_201 {dimension_numbers = #tpu.dot_dimension_numbers<[1], [0], [0], [1], [0, 0, 1, 1], [], []>} : vector<2x16xf32>, vector<16x32xf32>, vector<2x32xf32> -> vector<2x32xf32>
    %cst_202 = arith.constant dense<0.000000e+00> : vector<2x32xf32>
    %535 = tpu.matmul %495, %19, %cst_202 {dimension_numbers = #tpu.dot_dimension_numbers<[1], [0], [0], [1], [0, 0, 1, 1], [], []>} : vector<2x32xf32>, vector<32x32xf32>, vector<2x32xf32> -> vector<2x32xf32>
    %536 = arith.addf %534, %535 : vector<2x32xf32>
    %537 = vector.broadcast %29 : vector<1x32xf32> to vector<2x32xf32>
    %538 = arith.addf %536, %537 : vector<2x32xf32>
    %cst_203 = arith.constant dense<0xFF800000> : vector<2xf32>
    %539 = vector.multi_reduction <maximumf>, %523, %cst_203 [1] : vector<2x32xf32> to vector<2xf32>
    %540 = vector.shape_cast %539 : vector<2xf32> to vector<2x1xf32>
    %541 = vector.broadcast %540 : vector<2x1xf32> to vector<2x32xf32>
    %542 = arith.subf %523, %541 : vector<2x32xf32>
    %543 = math.exp %542 : vector<2x32xf32>
    %cst_204 = arith.constant dense<0.000000e+00> : vector<2xf32>
    %544 = vector.multi_reduction <add>, %543, %cst_204 [1] : vector<2x32xf32> to vector<2xf32>
    %545 = vector.shape_cast %544 : vector<2xf32> to vector<2x1xf32>
    %546 = tpu.reciprocal %545 {approx = true} : vector<2x1xf32> -> vector<2x1xf32>
    %547 = vector.broadcast %546 : vector<2x1xf32> to vector<2x32xf32>
    %548 = arith.mulf %543, %547 : vector<2x32xf32>
    %cst_205 = arith.constant dense<0.000000e+00> : vector<2x32xf32>
    %549 = tpu.matmul %548, %41, %cst_205 {dimension_numbers = #tpu.dot_dimension_numbers<[1], [0], [0], [1], [0, 0, 1, 1], [], []>} : vector<2x32xf32>, vector<32x32xf32>, vector<2x32xf32> -> vector<2x32xf32>
    %cst_206 = arith.constant 1.000000e+00 : f32
    %550 = vector.broadcast %cst_206 : f32 to vector<2x32xf32>
    %551 = arith.subf %550, %549 : vector<2x32xf32>
    %cst_207 = arith.constant dense<0xFF800000> : vector<2xf32>
    %552 = vector.multi_reduction <maximumf>, %528, %cst_207 [1] : vector<2x32xf32> to vector<2xf32>
    %553 = vector.shape_cast %552 : vector<2xf32> to vector<2x1xf32>
    %554 = vector.broadcast %553 : vector<2x1xf32> to vector<2x32xf32>
    %555 = arith.subf %528, %554 : vector<2x32xf32>
    %556 = math.exp %555 : vector<2x32xf32>
    %cst_208 = arith.constant dense<0.000000e+00> : vector<2xf32>
    %557 = vector.multi_reduction <add>, %556, %cst_208 [1] : vector<2x32xf32> to vector<2xf32>
    %558 = vector.shape_cast %557 : vector<2xf32> to vector<2x1xf32>
    %559 = tpu.reciprocal %558 {approx = true} : vector<2x1xf32> -> vector<2x1xf32>
    %560 = vector.broadcast %559 : vector<2x1xf32> to vector<2x32xf32>
    %561 = arith.mulf %556, %560 : vector<2x32xf32>
    %cst_209 = arith.constant dense<0.000000e+00> : vector<2x32xf32>
    %562 = tpu.matmul %561, %41, %cst_209 {dimension_numbers = #tpu.dot_dimension_numbers<[1], [0], [0], [1], [0, 0, 1, 1], [], []>} : vector<2x32xf32>, vector<32x32xf32>, vector<2x32xf32> -> vector<2x32xf32>
    %cst_210 = arith.constant dense<0xFF800000> : vector<2xf32>
    %563 = vector.multi_reduction <maximumf>, %533, %cst_210 [1] : vector<2x32xf32> to vector<2xf32>
    %564 = vector.shape_cast %563 : vector<2xf32> to vector<2x1xf32>
    %565 = vector.broadcast %564 : vector<2x1xf32> to vector<2x32xf32>
    %566 = arith.subf %533, %565 : vector<2x32xf32>
    %567 = math.exp %566 : vector<2x32xf32>
    %cst_211 = arith.constant dense<0.000000e+00> : vector<2xf32>
    %568 = vector.multi_reduction <add>, %567, %cst_211 [1] : vector<2x32xf32> to vector<2xf32>
    %569 = vector.shape_cast %568 : vector<2xf32> to vector<2x1xf32>
    %570 = tpu.reciprocal %569 {approx = true} : vector<2x1xf32> -> vector<2x1xf32>
    %571 = vector.broadcast %570 : vector<2x1xf32> to vector<2x32xf32>
    %572 = arith.mulf %567, %571 : vector<2x32xf32>
    %cst_212 = arith.constant dense<0.000000e+00> : vector<2x32xf32>
    %573 = tpu.matmul %572, %41, %cst_212 {dimension_numbers = #tpu.dot_dimension_numbers<[1], [0], [0], [1], [0, 0, 1, 1], [], []>} : vector<2x32xf32>, vector<32x32xf32>, vector<2x32xf32> -> vector<2x32xf32>
    %cst_213 = arith.constant 1.000000e+00 : f32
    %574 = vector.broadcast %cst_213 : f32 to vector<2x32xf32>
    %575 = arith.subf %574, %573 : vector<2x32xf32>
    %cst_214 = arith.constant dense<0xFF800000> : vector<2xf32>
    %576 = vector.multi_reduction <maximumf>, %538, %cst_214 [1] : vector<2x32xf32> to vector<2xf32>
    %577 = vector.shape_cast %576 : vector<2xf32> to vector<2x1xf32>
    %578 = vector.broadcast %577 : vector<2x1xf32> to vector<2x32xf32>
    %579 = arith.subf %538, %578 : vector<2x32xf32>
    %580 = math.exp %579 : vector<2x32xf32>
    %cst_215 = arith.constant dense<0.000000e+00> : vector<2xf32>
    %581 = vector.multi_reduction <add>, %580, %cst_215 [1] : vector<2x32xf32> to vector<2xf32>
    %582 = vector.shape_cast %581 : vector<2xf32> to vector<2x1xf32>
    %583 = tpu.reciprocal %582 {approx = true} : vector<2x1xf32> -> vector<2x1xf32>
    %584 = vector.broadcast %583 : vector<2x1xf32> to vector<2x32xf32>
    %585 = arith.mulf %580, %584 : vector<2x32xf32>
    %cst_216 = arith.constant dense<0.000000e+00> : vector<2x32xf32>
    %586 = tpu.matmul %585, %41, %cst_216 {dimension_numbers = #tpu.dot_dimension_numbers<[1], [0], [0], [1], [0, 0, 1, 1], [], []>} : vector<2x32xf32>, vector<32x32xf32>, vector<2x32xf32> -> vector<2x32xf32>
    %587 = math.tanh %518 : vector<2x32xf32>
    %588 = arith.mulf %586, %575 : vector<2x32xf32>
    %589 = arith.subf %586, %588 : vector<2x32xf32>
    %590 = arith.subf %575, %588 : vector<2x32xf32>
    %591 = arith.mulf %562, %551 : vector<2x32xf32>
    %592 = arith.subf %562, %591 : vector<2x32xf32>
    %593 = arith.subf %551, %591 : vector<2x32xf32>
    %594 = arith.mulf %591, %494 : vector<2x32xf32>
    %595 = arith.mulf %588, %587 : vector<2x32xf32>
    %596 = arith.addf %594, %595 : vector<2x32xf32>
    %597 = arith.mulf %592, %494 : vector<2x32xf32>
    %598 = arith.mulf %589, %587 : vector<2x32xf32>
    %599 = arith.addf %597, %598 : vector<2x32xf32>
    %600 = arith.addf %599, %596 : vector<2x32xf32>
    %601 = arith.mulf %593, %494 : vector<2x32xf32>
    %602 = arith.mulf %590, %587 : vector<2x32xf32>
    %603 = arith.addf %601, %602 : vector<2x32xf32>
    %604 = arith.addf %603, %596 : vector<2x32xf32>
    %cst_217 = arith.constant dense<0.000000e+00> : vector<2x32xf32>
    %605 = tpu.matmul %600, %31, %cst_217 {dimension_numbers = #tpu.dot_dimension_numbers<[1], [0], [0], [1], [0, 0, 1, 1], [], []>} : vector<2x32xf32>, vector<32x32xf32>, vector<2x32xf32> -> vector<2x32xf32>
    %cst_218 = arith.constant dense<0.000000e+00> : vector<2x32xf32>
    %606 = tpu.matmul %604, %33, %cst_218 {dimension_numbers = #tpu.dot_dimension_numbers<[1], [0], [0], [1], [0, 0, 1, 1], [], []>} : vector<2x32xf32>, vector<32x32xf32>, vector<2x32xf32> -> vector<2x32xf32>
    %607 = arith.addf %605, %606 : vector<2x32xf32>
    %cst_219 = arith.constant dense<0.000000e+00> : vector<2x32xf32>
    %608 = tpu.matmul %596, %35, %cst_219 {dimension_numbers = #tpu.dot_dimension_numbers<[1], [0], [0], [1], [0, 0, 1, 1], [], []>} : vector<2x32xf32>, vector<32x32xf32>, vector<2x32xf32> -> vector<2x32xf32>
    %609 = arith.addf %607, %608 : vector<2x32xf32>
    %610 = vector.broadcast %36 : vector<1x32xf32> to vector<2x32xf32>
    %611 = arith.addf %609, %610 : vector<2x32xf32>
    %612 = math.tanh %611 : vector<2x32xf32>
    %613 = math.tanh %604 : vector<2x32xf32>
    %614 = arith.index_cast %c4_i32 : i32 to index
    %c0_220 = arith.constant 0 : index
    %c0_221 = arith.constant 0 : index
    %615 = vector.load %arg6[%614, %c0_220, %c0_221] : memref<8x2x32xf32, #tpu.memory_space<vmem>>, vector<1x2x32xf32>
    %616 = vector.shape_cast %615 : vector<1x2x32xf32> to vector<2x32xf32>
    %617 = vector.shape_cast %613 : vector<2x32xf32> to vector<1x2x32xf32>
    tpu.vector_store %arg6[%614, %c0_220, %c0_221], %617 {strides = array<i32>} : memref<8x2x32xf32, #tpu.memory_space<vmem>>, vector<1x2x32xf32>,
    %618 = math.tanh %600 : vector<2x32xf32>
    %619 = arith.index_cast %c4_i32 : i32 to index
    %c0_222 = arith.constant 0 : index
    %c0_223 = arith.constant 0 : index
    %620 = vector.load %arg7[%619, %c0_222, %c0_223] : memref<8x2x32xf32, #tpu.memory_space<vmem>>, vector<1x2x32xf32>
    %621 = vector.shape_cast %620 : vector<1x2x32xf32> to vector<2x32xf32>
    %622 = vector.shape_cast %618 : vector<2x32xf32> to vector<1x2x32xf32>
    tpu.vector_store %arg7[%619, %c0_222, %c0_223], %622 {strides = array<i32>} : memref<8x2x32xf32, #tpu.memory_space<vmem>>, vector<1x2x32xf32>,
    %623 = math.tanh %596 : vector<2x32xf32>
    %624 = arith.index_cast %c4_i32 : i32 to index
    %c0_224 = arith.constant 0 : index
    %c0_225 = arith.constant 0 : index
    %625 = vector.load %arg8[%624, %c0_224, %c0_225] : memref<8x2x32xf32, #tpu.memory_space<vmem>>, vector<1x2x32xf32>
    %626 = vector.shape_cast %625 : vector<1x2x32xf32> to vector<2x32xf32>
    %627 = vector.shape_cast %623 : vector<2x32xf32> to vector<1x2x32xf32>
    tpu.vector_store %arg8[%624, %c0_224, %c0_225], %627 {strides = array<i32>} : memref<8x2x32xf32, #tpu.memory_space<vmem>>, vector<1x2x32xf32>,
    %c5_i32 = arith.constant 5 : i32
    %628 = arith.index_cast %c5_i32 : i32 to index
    %c0_226 = arith.constant 0 : index
    %c0_227 = arith.constant 0 : index
    %629 = vector.load %arg0[%628, %c0_226, %c0_227] : memref<8x2x16xf32, #tpu.memory_space<vmem>>, vector<1x2x16xf32>
    %630 = vector.shape_cast %629 : vector<1x2x16xf32> to vector<2x16xf32>
    %cst_228 = arith.constant dense<0.000000e+00> : vector<2x32xf32>
    %631 = tpu.matmul %630, %1, %cst_228 {dimension_numbers = #tpu.dot_dimension_numbers<[1], [0], [0], [1], [0, 0, 1, 1], [], []>} : vector<2x16xf32>, vector<16x32xf32>, vector<2x32xf32> -> vector<2x32xf32>
    %cst_229 = arith.constant dense<0.000000e+00> : vector<2x32xf32>
    %632 = tpu.matmul %612, %11, %cst_229 {dimension_numbers = #tpu.dot_dimension_numbers<[1], [0], [0], [1], [0, 0, 1, 1], [], []>} : vector<2x32xf32>, vector<32x32xf32>, vector<2x32xf32> -> vector<2x32xf32>
    %633 = arith.addf %631, %632 : vector<2x32xf32>
    %634 = vector.broadcast %21 : vector<1x32xf32> to vector<2x32xf32>
    %635 = arith.addf %633, %634 : vector<2x32xf32>
    %cst_230 = arith.constant dense<0.000000e+00> : vector<2x32xf32>
    %636 = tpu.matmul %630, %3, %cst_230 {dimension_numbers = #tpu.dot_dimension_numbers<[1], [0], [0], [1], [0, 0, 1, 1], [], []>} : vector<2x16xf32>, vector<16x32xf32>, vector<2x32xf32> -> vector<2x32xf32>
    %cst_231 = arith.constant dense<0.000000e+00> : vector<2x32xf32>
    %637 = tpu.matmul %612, %13, %cst_231 {dimension_numbers = #tpu.dot_dimension_numbers<[1], [0], [0], [1], [0, 0, 1, 1], [], []>} : vector<2x32xf32>, vector<32x32xf32>, vector<2x32xf32> -> vector<2x32xf32>
    %638 = arith.addf %636, %637 : vector<2x32xf32>
    %639 = vector.broadcast %23 : vector<1x32xf32> to vector<2x32xf32>
    %640 = arith.addf %638, %639 : vector<2x32xf32>
    %cst_232 = arith.constant dense<0.000000e+00> : vector<2x32xf32>
    %641 = tpu.matmul %630, %5, %cst_232 {dimension_numbers = #tpu.dot_dimension_numbers<[1], [0], [0], [1], [0, 0, 1, 1], [], []>} : vector<2x16xf32>, vector<16x32xf32>, vector<2x32xf32> -> vector<2x32xf32>
    %cst_233 = arith.constant dense<0.000000e+00> : vector<2x32xf32>
    %642 = tpu.matmul %612, %15, %cst_233 {dimension_numbers = #tpu.dot_dimension_numbers<[1], [0], [0], [1], [0, 0, 1, 1], [], []>} : vector<2x32xf32>, vector<32x32xf32>, vector<2x32xf32> -> vector<2x32xf32>
    %643 = arith.addf %641, %642 : vector<2x32xf32>
    %644 = vector.broadcast %25 : vector<1x32xf32> to vector<2x32xf32>
    %645 = arith.addf %643, %644 : vector<2x32xf32>
    %cst_234 = arith.constant dense<0.000000e+00> : vector<2x32xf32>
    %646 = tpu.matmul %630, %7, %cst_234 {dimension_numbers = #tpu.dot_dimension_numbers<[1], [0], [0], [1], [0, 0, 1, 1], [], []>} : vector<2x16xf32>, vector<16x32xf32>, vector<2x32xf32> -> vector<2x32xf32>
    %cst_235 = arith.constant dense<0.000000e+00> : vector<2x32xf32>
    %647 = tpu.matmul %612, %17, %cst_235 {dimension_numbers = #tpu.dot_dimension_numbers<[1], [0], [0], [1], [0, 0, 1, 1], [], []>} : vector<2x32xf32>, vector<32x32xf32>, vector<2x32xf32> -> vector<2x32xf32>
    %648 = arith.addf %646, %647 : vector<2x32xf32>
    %649 = vector.broadcast %27 : vector<1x32xf32> to vector<2x32xf32>
    %650 = arith.addf %648, %649 : vector<2x32xf32>
    %cst_236 = arith.constant dense<0.000000e+00> : vector<2x32xf32>
    %651 = tpu.matmul %630, %9, %cst_236 {dimension_numbers = #tpu.dot_dimension_numbers<[1], [0], [0], [1], [0, 0, 1, 1], [], []>} : vector<2x16xf32>, vector<16x32xf32>, vector<2x32xf32> -> vector<2x32xf32>
    %cst_237 = arith.constant dense<0.000000e+00> : vector<2x32xf32>
    %652 = tpu.matmul %612, %19, %cst_237 {dimension_numbers = #tpu.dot_dimension_numbers<[1], [0], [0], [1], [0, 0, 1, 1], [], []>} : vector<2x32xf32>, vector<32x32xf32>, vector<2x32xf32> -> vector<2x32xf32>
    %653 = arith.addf %651, %652 : vector<2x32xf32>
    %654 = vector.broadcast %29 : vector<1x32xf32> to vector<2x32xf32>
    %655 = arith.addf %653, %654 : vector<2x32xf32>
    %cst_238 = arith.constant dense<0xFF800000> : vector<2xf32>
    %656 = vector.multi_reduction <maximumf>, %640, %cst_238 [1] : vector<2x32xf32> to vector<2xf32>
    %657 = vector.shape_cast %656 : vector<2xf32> to vector<2x1xf32>
    %658 = vector.broadcast %657 : vector<2x1xf32> to vector<2x32xf32>
    %659 = arith.subf %640, %658 : vector<2x32xf32>
    %660 = math.exp %659 : vector<2x32xf32>
    %cst_239 = arith.constant dense<0.000000e+00> : vector<2xf32>
    %661 = vector.multi_reduction <add>, %660, %cst_239 [1] : vector<2x32xf32> to vector<2xf32>
    %662 = vector.shape_cast %661 : vector<2xf32> to vector<2x1xf32>
    %663 = tpu.reciprocal %662 {approx = true} : vector<2x1xf32> -> vector<2x1xf32>
    %664 = vector.broadcast %663 : vector<2x1xf32> to vector<2x32xf32>
    %665 = arith.mulf %660, %664 : vector<2x32xf32>
    %cst_240 = arith.constant dense<0.000000e+00> : vector<2x32xf32>
    %666 = tpu.matmul %665, %41, %cst_240 {dimension_numbers = #tpu.dot_dimension_numbers<[1], [0], [0], [1], [0, 0, 1, 1], [], []>} : vector<2x32xf32>, vector<32x32xf32>, vector<2x32xf32> -> vector<2x32xf32>
    %cst_241 = arith.constant 1.000000e+00 : f32
    %667 = vector.broadcast %cst_241 : f32 to vector<2x32xf32>
    %668 = arith.subf %667, %666 : vector<2x32xf32>
    %cst_242 = arith.constant dense<0xFF800000> : vector<2xf32>
    %669 = vector.multi_reduction <maximumf>, %645, %cst_242 [1] : vector<2x32xf32> to vector<2xf32>
    %670 = vector.shape_cast %669 : vector<2xf32> to vector<2x1xf32>
    %671 = vector.broadcast %670 : vector<2x1xf32> to vector<2x32xf32>
    %672 = arith.subf %645, %671 : vector<2x32xf32>
    %673 = math.exp %672 : vector<2x32xf32>
    %cst_243 = arith.constant dense<0.000000e+00> : vector<2xf32>
    %674 = vector.multi_reduction <add>, %673, %cst_243 [1] : vector<2x32xf32> to vector<2xf32>
    %675 = vector.shape_cast %674 : vector<2xf32> to vector<2x1xf32>
    %676 = tpu.reciprocal %675 {approx = true} : vector<2x1xf32> -> vector<2x1xf32>
    %677 = vector.broadcast %676 : vector<2x1xf32> to vector<2x32xf32>
    %678 = arith.mulf %673, %677 : vector<2x32xf32>
    %cst_244 = arith.constant dense<0.000000e+00> : vector<2x32xf32>
    %679 = tpu.matmul %678, %41, %cst_244 {dimension_numbers = #tpu.dot_dimension_numbers<[1], [0], [0], [1], [0, 0, 1, 1], [], []>} : vector<2x32xf32>, vector<32x32xf32>, vector<2x32xf32> -> vector<2x32xf32>
    %cst_245 = arith.constant dense<0xFF800000> : vector<2xf32>
    %680 = vector.multi_reduction <maximumf>, %650, %cst_245 [1] : vector<2x32xf32> to vector<2xf32>
    %681 = vector.shape_cast %680 : vector<2xf32> to vector<2x1xf32>
    %682 = vector.broadcast %681 : vector<2x1xf32> to vector<2x32xf32>
    %683 = arith.subf %650, %682 : vector<2x32xf32>
    %684 = math.exp %683 : vector<2x32xf32>
    %cst_246 = arith.constant dense<0.000000e+00> : vector<2xf32>
    %685 = vector.multi_reduction <add>, %684, %cst_246 [1] : vector<2x32xf32> to vector<2xf32>
    %686 = vector.shape_cast %685 : vector<2xf32> to vector<2x1xf32>
    %687 = tpu.reciprocal %686 {approx = true} : vector<2x1xf32> -> vector<2x1xf32>
    %688 = vector.broadcast %687 : vector<2x1xf32> to vector<2x32xf32>
    %689 = arith.mulf %684, %688 : vector<2x32xf32>
    %cst_247 = arith.constant dense<0.000000e+00> : vector<2x32xf32>
    %690 = tpu.matmul %689, %41, %cst_247 {dimension_numbers = #tpu.dot_dimension_numbers<[1], [0], [0], [1], [0, 0, 1, 1], [], []>} : vector<2x32xf32>, vector<32x32xf32>, vector<2x32xf32> -> vector<2x32xf32>
    %cst_248 = arith.constant 1.000000e+00 : f32
    %691 = vector.broadcast %cst_248 : f32 to vector<2x32xf32>
    %692 = arith.subf %691, %690 : vector<2x32xf32>
    %cst_249 = arith.constant dense<0xFF800000> : vector<2xf32>
    %693 = vector.multi_reduction <maximumf>, %655, %cst_249 [1] : vector<2x32xf32> to vector<2xf32>
    %694 = vector.shape_cast %693 : vector<2xf32> to vector<2x1xf32>
    %695 = vector.broadcast %694 : vector<2x1xf32> to vector<2x32xf32>
    %696 = arith.subf %655, %695 : vector<2x32xf32>
    %697 = math.exp %696 : vector<2x32xf32>
    %cst_250 = arith.constant dense<0.000000e+00> : vector<2xf32>
    %698 = vector.multi_reduction <add>, %697, %cst_250 [1] : vector<2x32xf32> to vector<2xf32>
    %699 = vector.shape_cast %698 : vector<2xf32> to vector<2x1xf32>
    %700 = tpu.reciprocal %699 {approx = true} : vector<2x1xf32> -> vector<2x1xf32>
    %701 = vector.broadcast %700 : vector<2x1xf32> to vector<2x32xf32>
    %702 = arith.mulf %697, %701 : vector<2x32xf32>
    %cst_251 = arith.constant dense<0.000000e+00> : vector<2x32xf32>
    %703 = tpu.matmul %702, %41, %cst_251 {dimension_numbers = #tpu.dot_dimension_numbers<[1], [0], [0], [1], [0, 0, 1, 1], [], []>} : vector<2x32xf32>, vector<32x32xf32>, vector<2x32xf32> -> vector<2x32xf32>
    %704 = math.tanh %635 : vector<2x32xf32>
    %705 = arith.mulf %703, %692 : vector<2x32xf32>
    %706 = arith.subf %703, %705 : vector<2x32xf32>
    %707 = arith.subf %692, %705 : vector<2x32xf32>
    %708 = arith.mulf %679, %668 : vector<2x32xf32>
    %709 = arith.subf %679, %708 : vector<2x32xf32>
    %710 = arith.subf %668, %708 : vector<2x32xf32>
    %711 = arith.mulf %708, %611 : vector<2x32xf32>
    %712 = arith.mulf %705, %704 : vector<2x32xf32>
    %713 = arith.addf %711, %712 : vector<2x32xf32>
    %714 = arith.mulf %709, %611 : vector<2x32xf32>
    %715 = arith.mulf %706, %704 : vector<2x32xf32>
    %716 = arith.addf %714, %715 : vector<2x32xf32>
    %717 = arith.addf %716, %713 : vector<2x32xf32>
    %718 = arith.mulf %710, %611 : vector<2x32xf32>
    %719 = arith.mulf %707, %704 : vector<2x32xf32>
    %720 = arith.addf %718, %719 : vector<2x32xf32>
    %721 = arith.addf %720, %713 : vector<2x32xf32>
    %cst_252 = arith.constant dense<0.000000e+00> : vector<2x32xf32>
    %722 = tpu.matmul %717, %31, %cst_252 {dimension_numbers = #tpu.dot_dimension_numbers<[1], [0], [0], [1], [0, 0, 1, 1], [], []>} : vector<2x32xf32>, vector<32x32xf32>, vector<2x32xf32> -> vector<2x32xf32>
    %cst_253 = arith.constant dense<0.000000e+00> : vector<2x32xf32>
    %723 = tpu.matmul %721, %33, %cst_253 {dimension_numbers = #tpu.dot_dimension_numbers<[1], [0], [0], [1], [0, 0, 1, 1], [], []>} : vector<2x32xf32>, vector<32x32xf32>, vector<2x32xf32> -> vector<2x32xf32>
    %724 = arith.addf %722, %723 : vector<2x32xf32>
    %cst_254 = arith.constant dense<0.000000e+00> : vector<2x32xf32>
    %725 = tpu.matmul %713, %35, %cst_254 {dimension_numbers = #tpu.dot_dimension_numbers<[1], [0], [0], [1], [0, 0, 1, 1], [], []>} : vector<2x32xf32>, vector<32x32xf32>, vector<2x32xf32> -> vector<2x32xf32>
    %726 = arith.addf %724, %725 : vector<2x32xf32>
    %727 = vector.broadcast %36 : vector<1x32xf32> to vector<2x32xf32>
    %728 = arith.addf %726, %727 : vector<2x32xf32>
    %729 = math.tanh %728 : vector<2x32xf32>
    %730 = math.tanh %721 : vector<2x32xf32>
    %731 = arith.index_cast %c5_i32 : i32 to index
    %c0_255 = arith.constant 0 : index
    %c0_256 = arith.constant 0 : index
    %732 = vector.load %arg6[%731, %c0_255, %c0_256] : memref<8x2x32xf32, #tpu.memory_space<vmem>>, vector<1x2x32xf32>
    %733 = vector.shape_cast %732 : vector<1x2x32xf32> to vector<2x32xf32>
    %734 = vector.shape_cast %730 : vector<2x32xf32> to vector<1x2x32xf32>
    tpu.vector_store %arg6[%731, %c0_255, %c0_256], %734 {strides = array<i32>} : memref<8x2x32xf32, #tpu.memory_space<vmem>>, vector<1x2x32xf32>,
    %735 = math.tanh %717 : vector<2x32xf32>
    %736 = arith.index_cast %c5_i32 : i32 to index
    %c0_257 = arith.constant 0 : index
    %c0_258 = arith.constant 0 : index
    %737 = vector.load %arg7[%736, %c0_257, %c0_258] : memref<8x2x32xf32, #tpu.memory_space<vmem>>, vector<1x2x32xf32>
    %738 = vector.shape_cast %737 : vector<1x2x32xf32> to vector<2x32xf32>
    %739 = vector.shape_cast %735 : vector<2x32xf32> to vector<1x2x32xf32>
    tpu.vector_store %arg7[%736, %c0_257, %c0_258], %739 {strides = array<i32>} : memref<8x2x32xf32, #tpu.memory_space<vmem>>, vector<1x2x32xf32>,
    %740 = math.tanh %713 : vector<2x32xf32>
    %741 = arith.index_cast %c5_i32 : i32 to index
    %c0_259 = arith.constant 0 : index
    %c0_260 = arith.constant 0 : index
    %742 = vector.load %arg8[%741, %c0_259, %c0_260] : memref<8x2x32xf32, #tpu.memory_space<vmem>>, vector<1x2x32xf32>
    %743 = vector.shape_cast %742 : vector<1x2x32xf32> to vector<2x32xf32>
    %744 = vector.shape_cast %740 : vector<2x32xf32> to vector<1x2x32xf32>
    tpu.vector_store %arg8[%741, %c0_259, %c0_260], %744 {strides = array<i32>} : memref<8x2x32xf32, #tpu.memory_space<vmem>>, vector<1x2x32xf32>,
    %c6_i32 = arith.constant 6 : i32
    %745 = arith.index_cast %c6_i32 : i32 to index
    %c0_261 = arith.constant 0 : index
    %c0_262 = arith.constant 0 : index
    %746 = vector.load %arg0[%745, %c0_261, %c0_262] : memref<8x2x16xf32, #tpu.memory_space<vmem>>, vector<1x2x16xf32>
    %747 = vector.shape_cast %746 : vector<1x2x16xf32> to vector<2x16xf32>
    %cst_263 = arith.constant dense<0.000000e+00> : vector<2x32xf32>
    %748 = tpu.matmul %747, %1, %cst_263 {dimension_numbers = #tpu.dot_dimension_numbers<[1], [0], [0], [1], [0, 0, 1, 1], [], []>} : vector<2x16xf32>, vector<16x32xf32>, vector<2x32xf32> -> vector<2x32xf32>
    %cst_264 = arith.constant dense<0.000000e+00> : vector<2x32xf32>
    %749 = tpu.matmul %729, %11, %cst_264 {dimension_numbers = #tpu.dot_dimension_numbers<[1], [0], [0], [1], [0, 0, 1, 1], [], []>} : vector<2x32xf32>, vector<32x32xf32>, vector<2x32xf32> -> vector<2x32xf32>
    %750 = arith.addf %748, %749 : vector<2x32xf32>
    %751 = vector.broadcast %21 : vector<1x32xf32> to vector<2x32xf32>
    %752 = arith.addf %750, %751 : vector<2x32xf32>
    %cst_265 = arith.constant dense<0.000000e+00> : vector<2x32xf32>
    %753 = tpu.matmul %747, %3, %cst_265 {dimension_numbers = #tpu.dot_dimension_numbers<[1], [0], [0], [1], [0, 0, 1, 1], [], []>} : vector<2x16xf32>, vector<16x32xf32>, vector<2x32xf32> -> vector<2x32xf32>
    %cst_266 = arith.constant dense<0.000000e+00> : vector<2x32xf32>
    %754 = tpu.matmul %729, %13, %cst_266 {dimension_numbers = #tpu.dot_dimension_numbers<[1], [0], [0], [1], [0, 0, 1, 1], [], []>} : vector<2x32xf32>, vector<32x32xf32>, vector<2x32xf32> -> vector<2x32xf32>
    %755 = arith.addf %753, %754 : vector<2x32xf32>
    %756 = vector.broadcast %23 : vector<1x32xf32> to vector<2x32xf32>
    %757 = arith.addf %755, %756 : vector<2x32xf32>
    %cst_267 = arith.constant dense<0.000000e+00> : vector<2x32xf32>
    %758 = tpu.matmul %747, %5, %cst_267 {dimension_numbers = #tpu.dot_dimension_numbers<[1], [0], [0], [1], [0, 0, 1, 1], [], []>} : vector<2x16xf32>, vector<16x32xf32>, vector<2x32xf32> -> vector<2x32xf32>
    %cst_268 = arith.constant dense<0.000000e+00> : vector<2x32xf32>
    %759 = tpu.matmul %729, %15, %cst_268 {dimension_numbers = #tpu.dot_dimension_numbers<[1], [0], [0], [1], [0, 0, 1, 1], [], []>} : vector<2x32xf32>, vector<32x32xf32>, vector<2x32xf32> -> vector<2x32xf32>
    %760 = arith.addf %758, %759 : vector<2x32xf32>
    %761 = vector.broadcast %25 : vector<1x32xf32> to vector<2x32xf32>
    %762 = arith.addf %760, %761 : vector<2x32xf32>
    %cst_269 = arith.constant dense<0.000000e+00> : vector<2x32xf32>
    %763 = tpu.matmul %747, %7, %cst_269 {dimension_numbers = #tpu.dot_dimension_numbers<[1], [0], [0], [1], [0, 0, 1, 1], [], []>} : vector<2x16xf32>, vector<16x32xf32>, vector<2x32xf32> -> vector<2x32xf32>
    %cst_270 = arith.constant dense<0.000000e+00> : vector<2x32xf32>
    %764 = tpu.matmul %729, %17, %cst_270 {dimension_numbers = #tpu.dot_dimension_numbers<[1], [0], [0], [1], [0, 0, 1, 1], [], []>} : vector<2x32xf32>, vector<32x32xf32>, vector<2x32xf32> -> vector<2x32xf32>
    %765 = arith.addf %763, %764 : vector<2x32xf32>
    %766 = vector.broadcast %27 : vector<1x32xf32> to vector<2x32xf32>
    %767 = arith.addf %765, %766 : vector<2x32xf32>
    %cst_271 = arith.constant dense<0.000000e+00> : vector<2x32xf32>
    %768 = tpu.matmul %747, %9, %cst_271 {dimension_numbers = #tpu.dot_dimension_numbers<[1], [0], [0], [1], [0, 0, 1, 1], [], []>} : vector<2x16xf32>, vector<16x32xf32>, vector<2x32xf32> -> vector<2x32xf32>
    %cst_272 = arith.constant dense<0.000000e+00> : vector<2x32xf32>
    %769 = tpu.matmul %729, %19, %cst_272 {dimension_numbers = #tpu.dot_dimension_numbers<[1], [0], [0], [1], [0, 0, 1, 1], [], []>} : vector<2x32xf32>, vector<32x32xf32>, vector<2x32xf32> -> vector<2x32xf32>
    %770 = arith.addf %768, %769 : vector<2x32xf32>
    %771 = vector.broadcast %29 : vector<1x32xf32> to vector<2x32xf32>
    %772 = arith.addf %770, %771 : vector<2x32xf32>
    %cst_273 = arith.constant dense<0xFF800000> : vector<2xf32>
    %773 = vector.multi_reduction <maximumf>, %757, %cst_273 [1] : vector<2x32xf32> to vector<2xf32>
    %774 = vector.shape_cast %773 : vector<2xf32> to vector<2x1xf32>
    %775 = vector.broadcast %774 : vector<2x1xf32> to vector<2x32xf32>
    %776 = arith.subf %757, %775 : vector<2x32xf32>
    %777 = math.exp %776 : vector<2x32xf32>
    %cst_274 = arith.constant dense<0.000000e+00> : vector<2xf32>
    %778 = vector.multi_reduction <add>, %777, %cst_274 [1] : vector<2x32xf32> to vector<2xf32>
    %779 = vector.shape_cast %778 : vector<2xf32> to vector<2x1xf32>
    %780 = tpu.reciprocal %779 {approx = true} : vector<2x1xf32> -> vector<2x1xf32>
    %781 = vector.broadcast %780 : vector<2x1xf32> to vector<2x32xf32>
    %782 = arith.mulf %777, %781 : vector<2x32xf32>
    %cst_275 = arith.constant dense<0.000000e+00> : vector<2x32xf32>
    %783 = tpu.matmul %782, %41, %cst_275 {dimension_numbers = #tpu.dot_dimension_numbers<[1], [0], [0], [1], [0, 0, 1, 1], [], []>} : vector<2x32xf32>, vector<32x32xf32>, vector<2x32xf32> -> vector<2x32xf32>
    %cst_276 = arith.constant 1.000000e+00 : f32
    %784 = vector.broadcast %cst_276 : f32 to vector<2x32xf32>
    %785 = arith.subf %784, %783 : vector<2x32xf32>
    %cst_277 = arith.constant dense<0xFF800000> : vector<2xf32>
    %786 = vector.multi_reduction <maximumf>, %762, %cst_277 [1] : vector<2x32xf32> to vector<2xf32>
    %787 = vector.shape_cast %786 : vector<2xf32> to vector<2x1xf32>
    %788 = vector.broadcast %787 : vector<2x1xf32> to vector<2x32xf32>
    %789 = arith.subf %762, %788 : vector<2x32xf32>
    %790 = math.exp %789 : vector<2x32xf32>
    %cst_278 = arith.constant dense<0.000000e+00> : vector<2xf32>
    %791 = vector.multi_reduction <add>, %790, %cst_278 [1] : vector<2x32xf32> to vector<2xf32>
    %792 = vector.shape_cast %791 : vector<2xf32> to vector<2x1xf32>
    %793 = tpu.reciprocal %792 {approx = true} : vector<2x1xf32> -> vector<2x1xf32>
    %794 = vector.broadcast %793 : vector<2x1xf32> to vector<2x32xf32>
    %795 = arith.mulf %790, %794 : vector<2x32xf32>
    %cst_279 = arith.constant dense<0.000000e+00> : vector<2x32xf32>
    %796 = tpu.matmul %795, %41, %cst_279 {dimension_numbers = #tpu.dot_dimension_numbers<[1], [0], [0], [1], [0, 0, 1, 1], [], []>} : vector<2x32xf32>, vector<32x32xf32>, vector<2x32xf32> -> vector<2x32xf32>
    %cst_280 = arith.constant dense<0xFF800000> : vector<2xf32>
    %797 = vector.multi_reduction <maximumf>, %767, %cst_280 [1] : vector<2x32xf32> to vector<2xf32>
    %798 = vector.shape_cast %797 : vector<2xf32> to vector<2x1xf32>
    %799 = vector.broadcast %798 : vector<2x1xf32> to vector<2x32xf32>
    %800 = arith.subf %767, %799 : vector<2x32xf32>
    %801 = math.exp %800 : vector<2x32xf32>
    %cst_281 = arith.constant dense<0.000000e+00> : vector<2xf32>
    %802 = vector.multi_reduction <add>, %801, %cst_281 [1] : vector<2x32xf32> to vector<2xf32>
    %803 = vector.shape_cast %802 : vector<2xf32> to vector<2x1xf32>
    %804 = tpu.reciprocal %803 {approx = true} : vector<2x1xf32> -> vector<2x1xf32>
    %805 = vector.broadcast %804 : vector<2x1xf32> to vector<2x32xf32>
    %806 = arith.mulf %801, %805 : vector<2x32xf32>
    %cst_282 = arith.constant dense<0.000000e+00> : vector<2x32xf32>
    %807 = tpu.matmul %806, %41, %cst_282 {dimension_numbers = #tpu.dot_dimension_numbers<[1], [0], [0], [1], [0, 0, 1, 1], [], []>} : vector<2x32xf32>, vector<32x32xf32>, vector<2x32xf32> -> vector<2x32xf32>
    %cst_283 = arith.constant 1.000000e+00 : f32
    %808 = vector.broadcast %cst_283 : f32 to vector<2x32xf32>
    %809 = arith.subf %808, %807 : vector<2x32xf32>
    %cst_284 = arith.constant dense<0xFF800000> : vector<2xf32>
    %810 = vector.multi_reduction <maximumf>, %772, %cst_284 [1] : vector<2x32xf32> to vector<2xf32>
    %811 = vector.shape_cast %810 : vector<2xf32> to vector<2x1xf32>
    %812 = vector.broadcast %811 : vector<2x1xf32> to vector<2x32xf32>
    %813 = arith.subf %772, %812 : vector<2x32xf32>
    %814 = math.exp %813 : vector<2x32xf32>
    %cst_285 = arith.constant dense<0.000000e+00> : vector<2xf32>
    %815 = vector.multi_reduction <add>, %814, %cst_285 [1] : vector<2x32xf32> to vector<2xf32>
    %816 = vector.shape_cast %815 : vector<2xf32> to vector<2x1xf32>
    %817 = tpu.reciprocal %816 {approx = true} : vector<2x1xf32> -> vector<2x1xf32>
    %818 = vector.broadcast %817 : vector<2x1xf32> to vector<2x32xf32>
    %819 = arith.mulf %814, %818 : vector<2x32xf32>
    %cst_286 = arith.constant dense<0.000000e+00> : vector<2x32xf32>
    %820 = tpu.matmul %819, %41, %cst_286 {dimension_numbers = #tpu.dot_dimension_numbers<[1], [0], [0], [1], [0, 0, 1, 1], [], []>} : vector<2x32xf32>, vector<32x32xf32>, vector<2x32xf32> -> vector<2x32xf32>
    %821 = math.tanh %752 : vector<2x32xf32>
    %822 = arith.mulf %820, %809 : vector<2x32xf32>
    %823 = arith.subf %820, %822 : vector<2x32xf32>
    %824 = arith.subf %809, %822 : vector<2x32xf32>
    %825 = arith.mulf %796, %785 : vector<2x32xf32>
    %826 = arith.subf %796, %825 : vector<2x32xf32>
    %827 = arith.subf %785, %825 : vector<2x32xf32>
    %828 = arith.mulf %825, %728 : vector<2x32xf32>
    %829 = arith.mulf %822, %821 : vector<2x32xf32>
    %830 = arith.addf %828, %829 : vector<2x32xf32>
    %831 = arith.mulf %826, %728 : vector<2x32xf32>
    %832 = arith.mulf %823, %821 : vector<2x32xf32>
    %833 = arith.addf %831, %832 : vector<2x32xf32>
    %834 = arith.addf %833, %830 : vector<2x32xf32>
    %835 = arith.mulf %827, %728 : vector<2x32xf32>
    %836 = arith.mulf %824, %821 : vector<2x32xf32>
    %837 = arith.addf %835, %836 : vector<2x32xf32>
    %838 = arith.addf %837, %830 : vector<2x32xf32>
    %cst_287 = arith.constant dense<0.000000e+00> : vector<2x32xf32>
    %839 = tpu.matmul %834, %31, %cst_287 {dimension_numbers = #tpu.dot_dimension_numbers<[1], [0], [0], [1], [0, 0, 1, 1], [], []>} : vector<2x32xf32>, vector<32x32xf32>, vector<2x32xf32> -> vector<2x32xf32>
    %cst_288 = arith.constant dense<0.000000e+00> : vector<2x32xf32>
    %840 = tpu.matmul %838, %33, %cst_288 {dimension_numbers = #tpu.dot_dimension_numbers<[1], [0], [0], [1], [0, 0, 1, 1], [], []>} : vector<2x32xf32>, vector<32x32xf32>, vector<2x32xf32> -> vector<2x32xf32>
    %841 = arith.addf %839, %840 : vector<2x32xf32>
    %cst_289 = arith.constant dense<0.000000e+00> : vector<2x32xf32>
    %842 = tpu.matmul %830, %35, %cst_289 {dimension_numbers = #tpu.dot_dimension_numbers<[1], [0], [0], [1], [0, 0, 1, 1], [], []>} : vector<2x32xf32>, vector<32x32xf32>, vector<2x32xf32> -> vector<2x32xf32>
    %843 = arith.addf %841, %842 : vector<2x32xf32>
    %844 = vector.broadcast %36 : vector<1x32xf32> to vector<2x32xf32>
    %845 = arith.addf %843, %844 : vector<2x32xf32>
    %846 = math.tanh %845 : vector<2x32xf32>
    %847 = math.tanh %838 : vector<2x32xf32>
    %848 = arith.index_cast %c6_i32 : i32 to index
    %c0_290 = arith.constant 0 : index
    %c0_291 = arith.constant 0 : index
    %849 = vector.load %arg6[%848, %c0_290, %c0_291] : memref<8x2x32xf32, #tpu.memory_space<vmem>>, vector<1x2x32xf32>
    %850 = vector.shape_cast %849 : vector<1x2x32xf32> to vector<2x32xf32>
    %851 = vector.shape_cast %847 : vector<2x32xf32> to vector<1x2x32xf32>
    tpu.vector_store %arg6[%848, %c0_290, %c0_291], %851 {strides = array<i32>} : memref<8x2x32xf32, #tpu.memory_space<vmem>>, vector<1x2x32xf32>,
    %852 = math.tanh %834 : vector<2x32xf32>
    %853 = arith.index_cast %c6_i32 : i32 to index
    %c0_292 = arith.constant 0 : index
    %c0_293 = arith.constant 0 : index
    %854 = vector.load %arg7[%853, %c0_292, %c0_293] : memref<8x2x32xf32, #tpu.memory_space<vmem>>, vector<1x2x32xf32>
    %855 = vector.shape_cast %854 : vector<1x2x32xf32> to vector<2x32xf32>
    %856 = vector.shape_cast %852 : vector<2x32xf32> to vector<1x2x32xf32>
    tpu.vector_store %arg7[%853, %c0_292, %c0_293], %856 {strides = array<i32>} : memref<8x2x32xf32, #tpu.memory_space<vmem>>, vector<1x2x32xf32>,
    %857 = math.tanh %830 : vector<2x32xf32>
    %858 = arith.index_cast %c6_i32 : i32 to index
    %c0_294 = arith.constant 0 : index
    %c0_295 = arith.constant 0 : index
    %859 = vector.load %arg8[%858, %c0_294, %c0_295] : memref<8x2x32xf32, #tpu.memory_space<vmem>>, vector<1x2x32xf32>
    %860 = vector.shape_cast %859 : vector<1x2x32xf32> to vector<2x32xf32>
    %861 = vector.shape_cast %857 : vector<2x32xf32> to vector<1x2x32xf32>
    tpu.vector_store %arg8[%858, %c0_294, %c0_295], %861 {strides = array<i32>} : memref<8x2x32xf32, #tpu.memory_space<vmem>>, vector<1x2x32xf32>,
    %c7_i32 = arith.constant 7 : i32
    %862 = arith.index_cast %c7_i32 : i32 to index
    %c0_296 = arith.constant 0 : index
    %c0_297 = arith.constant 0 : index
    %863 = vector.load %arg0[%862, %c0_296, %c0_297] : memref<8x2x16xf32, #tpu.memory_space<vmem>>, vector<1x2x16xf32>
    %864 = vector.shape_cast %863 : vector<1x2x16xf32> to vector<2x16xf32>
    %cst_298 = arith.constant dense<0.000000e+00> : vector<2x32xf32>
    %865 = tpu.matmul %864, %1, %cst_298 {dimension_numbers = #tpu.dot_dimension_numbers<[1], [0], [0], [1], [0, 0, 1, 1], [], []>} : vector<2x16xf32>, vector<16x32xf32>, vector<2x32xf32> -> vector<2x32xf32>
    %cst_299 = arith.constant dense<0.000000e+00> : vector<2x32xf32>
    %866 = tpu.matmul %846, %11, %cst_299 {dimension_numbers = #tpu.dot_dimension_numbers<[1], [0], [0], [1], [0, 0, 1, 1], [], []>} : vector<2x32xf32>, vector<32x32xf32>, vector<2x32xf32> -> vector<2x32xf32>
    %867 = arith.addf %865, %866 : vector<2x32xf32>
    %868 = vector.broadcast %21 : vector<1x32xf32> to vector<2x32xf32>
    %869 = arith.addf %867, %868 : vector<2x32xf32>
    %cst_300 = arith.constant dense<0.000000e+00> : vector<2x32xf32>
    %870 = tpu.matmul %864, %3, %cst_300 {dimension_numbers = #tpu.dot_dimension_numbers<[1], [0], [0], [1], [0, 0, 1, 1], [], []>} : vector<2x16xf32>, vector<16x32xf32>, vector<2x32xf32> -> vector<2x32xf32>
    %cst_301 = arith.constant dense<0.000000e+00> : vector<2x32xf32>
    %871 = tpu.matmul %846, %13, %cst_301 {dimension_numbers = #tpu.dot_dimension_numbers<[1], [0], [0], [1], [0, 0, 1, 1], [], []>} : vector<2x32xf32>, vector<32x32xf32>, vector<2x32xf32> -> vector<2x32xf32>
    %872 = arith.addf %870, %871 : vector<2x32xf32>
    %873 = vector.broadcast %23 : vector<1x32xf32> to vector<2x32xf32>
    %874 = arith.addf %872, %873 : vector<2x32xf32>
    %cst_302 = arith.constant dense<0.000000e+00> : vector<2x32xf32>
    %875 = tpu.matmul %864, %5, %cst_302 {dimension_numbers = #tpu.dot_dimension_numbers<[1], [0], [0], [1], [0, 0, 1, 1], [], []>} : vector<2x16xf32>, vector<16x32xf32>, vector<2x32xf32> -> vector<2x32xf32>
    %cst_303 = arith.constant dense<0.000000e+00> : vector<2x32xf32>
    %876 = tpu.matmul %846, %15, %cst_303 {dimension_numbers = #tpu.dot_dimension_numbers<[1], [0], [0], [1], [0, 0, 1, 1], [], []>} : vector<2x32xf32>, vector<32x32xf32>, vector<2x32xf32> -> vector<2x32xf32>
    %877 = arith.addf %875, %876 : vector<2x32xf32>
    %878 = vector.broadcast %25 : vector<1x32xf32> to vector<2x32xf32>
    %879 = arith.addf %877, %878 : vector<2x32xf32>
    %cst_304 = arith.constant dense<0.000000e+00> : vector<2x32xf32>
    %880 = tpu.matmul %864, %7, %cst_304 {dimension_numbers = #tpu.dot_dimension_numbers<[1], [0], [0], [1], [0, 0, 1, 1], [], []>} : vector<2x16xf32>, vector<16x32xf32>, vector<2x32xf32> -> vector<2x32xf32>
    %cst_305 = arith.constant dense<0.000000e+00> : vector<2x32xf32>
    %881 = tpu.matmul %846, %17, %cst_305 {dimension_numbers = #tpu.dot_dimension_numbers<[1], [0], [0], [1], [0, 0, 1, 1], [], []>} : vector<2x32xf32>, vector<32x32xf32>, vector<2x32xf32> -> vector<2x32xf32>
    %882 = arith.addf %880, %881 : vector<2x32xf32>
    %883 = vector.broadcast %27 : vector<1x32xf32> to vector<2x32xf32>
    %884 = arith.addf %882, %883 : vector<2x32xf32>
    %cst_306 = arith.constant dense<0.000000e+00> : vector<2x32xf32>
    %885 = tpu.matmul %864, %9, %cst_306 {dimension_numbers = #tpu.dot_dimension_numbers<[1], [0], [0], [1], [0, 0, 1, 1], [], []>} : vector<2x16xf32>, vector<16x32xf32>, vector<2x32xf32> -> vector<2x32xf32>
    %cst_307 = arith.constant dense<0.000000e+00> : vector<2x32xf32>
    %886 = tpu.matmul %846, %19, %cst_307 {dimension_numbers = #tpu.dot_dimension_numbers<[1], [0], [0], [1], [0, 0, 1, 1], [], []>} : vector<2x32xf32>, vector<32x32xf32>, vector<2x32xf32> -> vector<2x32xf32>
    %887 = arith.addf %885, %886 : vector<2x32xf32>
    %888 = vector.broadcast %29 : vector<1x32xf32> to vector<2x32xf32>
    %889 = arith.addf %887, %888 : vector<2x32xf32>
    %cst_308 = arith.constant dense<0xFF800000> : vector<2xf32>
    %890 = vector.multi_reduction <maximumf>, %874, %cst_308 [1] : vector<2x32xf32> to vector<2xf32>
    %891 = vector.shape_cast %890 : vector<2xf32> to vector<2x1xf32>
    %892 = vector.broadcast %891 : vector<2x1xf32> to vector<2x32xf32>
    %893 = arith.subf %874, %892 : vector<2x32xf32>
    %894 = math.exp %893 : vector<2x32xf32>
    %cst_309 = arith.constant dense<0.000000e+00> : vector<2xf32>
    %895 = vector.multi_reduction <add>, %894, %cst_309 [1] : vector<2x32xf32> to vector<2xf32>
    %896 = vector.shape_cast %895 : vector<2xf32> to vector<2x1xf32>
    %897 = tpu.reciprocal %896 {approx = true} : vector<2x1xf32> -> vector<2x1xf32>
    %898 = vector.broadcast %897 : vector<2x1xf32> to vector<2x32xf32>
    %899 = arith.mulf %894, %898 : vector<2x32xf32>
    %cst_310 = arith.constant dense<0.000000e+00> : vector<2x32xf32>
    %900 = tpu.matmul %899, %41, %cst_310 {dimension_numbers = #tpu.dot_dimension_numbers<[1], [0], [0], [1], [0, 0, 1, 1], [], []>} : vector<2x32xf32>, vector<32x32xf32>, vector<2x32xf32> -> vector<2x32xf32>
    %cst_311 = arith.constant 1.000000e+00 : f32
    %901 = vector.broadcast %cst_311 : f32 to vector<2x32xf32>
    %902 = arith.subf %901, %900 : vector<2x32xf32>
    %cst_312 = arith.constant dense<0xFF800000> : vector<2xf32>
    %903 = vector.multi_reduction <maximumf>, %879, %cst_312 [1] : vector<2x32xf32> to vector<2xf32>
    %904 = vector.shape_cast %903 : vector<2xf32> to vector<2x1xf32>
    %905 = vector.broadcast %904 : vector<2x1xf32> to vector<2x32xf32>
    %906 = arith.subf %879, %905 : vector<2x32xf32>
    %907 = math.exp %906 : vector<2x32xf32>
    %cst_313 = arith.constant dense<0.000000e+00> : vector<2xf32>
    %908 = vector.multi_reduction <add>, %907, %cst_313 [1] : vector<2x32xf32> to vector<2xf32>
    %909 = vector.shape_cast %908 : vector<2xf32> to vector<2x1xf32>
    %910 = tpu.reciprocal %909 {approx = true} : vector<2x1xf32> -> vector<2x1xf32>
    %911 = vector.broadcast %910 : vector<2x1xf32> to vector<2x32xf32>
    %912 = arith.mulf %907, %911 : vector<2x32xf32>
    %cst_314 = arith.constant dense<0.000000e+00> : vector<2x32xf32>
    %913 = tpu.matmul %912, %41, %cst_314 {dimension_numbers = #tpu.dot_dimension_numbers<[1], [0], [0], [1], [0, 0, 1, 1], [], []>} : vector<2x32xf32>, vector<32x32xf32>, vector<2x32xf32> -> vector<2x32xf32>
    %cst_315 = arith.constant dense<0xFF800000> : vector<2xf32>
    %914 = vector.multi_reduction <maximumf>, %884, %cst_315 [1] : vector<2x32xf32> to vector<2xf32>
    %915 = vector.shape_cast %914 : vector<2xf32> to vector<2x1xf32>
    %916 = vector.broadcast %915 : vector<2x1xf32> to vector<2x32xf32>
    %917 = arith.subf %884, %916 : vector<2x32xf32>
    %918 = math.exp %917 : vector<2x32xf32>
    %cst_316 = arith.constant dense<0.000000e+00> : vector<2xf32>
    %919 = vector.multi_reduction <add>, %918, %cst_316 [1] : vector<2x32xf32> to vector<2xf32>
    %920 = vector.shape_cast %919 : vector<2xf32> to vector<2x1xf32>
    %921 = tpu.reciprocal %920 {approx = true} : vector<2x1xf32> -> vector<2x1xf32>
    %922 = vector.broadcast %921 : vector<2x1xf32> to vector<2x32xf32>
    %923 = arith.mulf %918, %922 : vector<2x32xf32>
    %cst_317 = arith.constant dense<0.000000e+00> : vector<2x32xf32>
    %924 = tpu.matmul %923, %41, %cst_317 {dimension_numbers = #tpu.dot_dimension_numbers<[1], [0], [0], [1], [0, 0, 1, 1], [], []>} : vector<2x32xf32>, vector<32x32xf32>, vector<2x32xf32> -> vector<2x32xf32>
    %cst_318 = arith.constant 1.000000e+00 : f32
    %925 = vector.broadcast %cst_318 : f32 to vector<2x32xf32>
    %926 = arith.subf %925, %924 : vector<2x32xf32>
    %cst_319 = arith.constant dense<0xFF800000> : vector<2xf32>
    %927 = vector.multi_reduction <maximumf>, %889, %cst_319 [1] : vector<2x32xf32> to vector<2xf32>
    %928 = vector.shape_cast %927 : vector<2xf32> to vector<2x1xf32>
    %929 = vector.broadcast %928 : vector<2x1xf32> to vector<2x32xf32>
    %930 = arith.subf %889, %929 : vector<2x32xf32>
    %931 = math.exp %930 : vector<2x32xf32>
    %cst_320 = arith.constant dense<0.000000e+00> : vector<2xf32>
    %932 = vector.multi_reduction <add>, %931, %cst_320 [1] : vector<2x32xf32> to vector<2xf32>
    %933 = vector.shape_cast %932 : vector<2xf32> to vector<2x1xf32>
    %934 = tpu.reciprocal %933 {approx = true} : vector<2x1xf32> -> vector<2x1xf32>
    %935 = vector.broadcast %934 : vector<2x1xf32> to vector<2x32xf32>
    %936 = arith.mulf %931, %935 : vector<2x32xf32>
    %cst_321 = arith.constant dense<0.000000e+00> : vector<2x32xf32>
    %937 = tpu.matmul %936, %41, %cst_321 {dimension_numbers = #tpu.dot_dimension_numbers<[1], [0], [0], [1], [0, 0, 1, 1], [], []>} : vector<2x32xf32>, vector<32x32xf32>, vector<2x32xf32> -> vector<2x32xf32>
    %938 = math.tanh %869 : vector<2x32xf32>
    %939 = arith.mulf %937, %926 : vector<2x32xf32>
    %940 = arith.subf %937, %939 : vector<2x32xf32>
    %941 = arith.subf %926, %939 : vector<2x32xf32>
    %942 = arith.mulf %913, %902 : vector<2x32xf32>
    %943 = arith.subf %913, %942 : vector<2x32xf32>
    %944 = arith.subf %902, %942 : vector<2x32xf32>
    %945 = arith.mulf %942, %845 : vector<2x32xf32>
    %946 = arith.mulf %939, %938 : vector<2x32xf32>
    %947 = arith.addf %945, %946 : vector<2x32xf32>
    %948 = arith.mulf %943, %845 : vector<2x32xf32>
    %949 = arith.mulf %940, %938 : vector<2x32xf32>
    %950 = arith.addf %948, %949 : vector<2x32xf32>
    %951 = arith.addf %950, %947 : vector<2x32xf32>
    %952 = arith.mulf %944, %845 : vector<2x32xf32>
    %953 = arith.mulf %941, %938 : vector<2x32xf32>
    %954 = arith.addf %952, %953 : vector<2x32xf32>
    %955 = arith.addf %954, %947 : vector<2x32xf32>
    %cst_322 = arith.constant dense<0.000000e+00> : vector<2x32xf32>
    %956 = tpu.matmul %951, %31, %cst_322 {dimension_numbers = #tpu.dot_dimension_numbers<[1], [0], [0], [1], [0, 0, 1, 1], [], []>} : vector<2x32xf32>, vector<32x32xf32>, vector<2x32xf32> -> vector<2x32xf32>
    %cst_323 = arith.constant dense<0.000000e+00> : vector<2x32xf32>
    %957 = tpu.matmul %955, %33, %cst_323 {dimension_numbers = #tpu.dot_dimension_numbers<[1], [0], [0], [1], [0, 0, 1, 1], [], []>} : vector<2x32xf32>, vector<32x32xf32>, vector<2x32xf32> -> vector<2x32xf32>
    %958 = arith.addf %956, %957 : vector<2x32xf32>
    %cst_324 = arith.constant dense<0.000000e+00> : vector<2x32xf32>
    %959 = tpu.matmul %947, %35, %cst_324 {dimension_numbers = #tpu.dot_dimension_numbers<[1], [0], [0], [1], [0, 0, 1, 1], [], []>} : vector<2x32xf32>, vector<32x32xf32>, vector<2x32xf32> -> vector<2x32xf32>
    %960 = arith.addf %958, %959 : vector<2x32xf32>
    %961 = vector.broadcast %36 : vector<1x32xf32> to vector<2x32xf32>
    %962 = arith.addf %960, %961 : vector<2x32xf32>
    %963 = math.tanh %962 : vector<2x32xf32>
    %964 = math.tanh %955 : vector<2x32xf32>
    %965 = arith.index_cast %c7_i32 : i32 to index
    %c0_325 = arith.constant 0 : index
    %c0_326 = arith.constant 0 : index
    %966 = vector.load %arg6[%965, %c0_325, %c0_326] : memref<8x2x32xf32, #tpu.memory_space<vmem>>, vector<1x2x32xf32>
    %967 = vector.shape_cast %966 : vector<1x2x32xf32> to vector<2x32xf32>
    %968 = vector.shape_cast %964 : vector<2x32xf32> to vector<1x2x32xf32>
    tpu.vector_store %arg6[%965, %c0_325, %c0_326], %968 {strides = array<i32>} : memref<8x2x32xf32, #tpu.memory_space<vmem>>, vector<1x2x32xf32>,
    %969 = math.tanh %951 : vector<2x32xf32>
    %970 = arith.index_cast %c7_i32 : i32 to index
    %c0_327 = arith.constant 0 : index
    %c0_328 = arith.constant 0 : index
    %971 = vector.load %arg7[%970, %c0_327, %c0_328] : memref<8x2x32xf32, #tpu.memory_space<vmem>>, vector<1x2x32xf32>
    %972 = vector.shape_cast %971 : vector<1x2x32xf32> to vector<2x32xf32>
    %973 = vector.shape_cast %969 : vector<2x32xf32> to vector<1x2x32xf32>
    tpu.vector_store %arg7[%970, %c0_327, %c0_328], %973 {strides = array<i32>} : memref<8x2x32xf32, #tpu.memory_space<vmem>>, vector<1x2x32xf32>,
    %974 = math.tanh %947 : vector<2x32xf32>
    %975 = arith.index_cast %c7_i32 : i32 to index
    %c0_329 = arith.constant 0 : index
    %c0_330 = arith.constant 0 : index
    %976 = vector.load %arg8[%975, %c0_329, %c0_330] : memref<8x2x32xf32, #tpu.memory_space<vmem>>, vector<1x2x32xf32>
    %977 = vector.shape_cast %976 : vector<1x2x32xf32> to vector<2x32xf32>
    %978 = vector.shape_cast %974 : vector<2x32xf32> to vector<1x2x32xf32>
    tpu.vector_store %arg8[%975, %c0_329, %c0_330], %978 {strides = array<i32>} : memref<8x2x32xf32, #tpu.memory_space<vmem>>, vector<1x2x32xf32>,
    %c8_i32 = arith.constant 8 : i32
    return
  }
}

</mosaic_0001>

<llo_original>
// kernel: encoder_forward.1
$region0: #{encoder_forward.1}
  #allocation0 [shape = 'u32[]', space=smem, size = 0x4, offset = 0x4, fixed_abs, tag = 'smem constant byte address 0x4 - core index']
  #allocation1 [shape = 'u32[72,128]{1,0:T(1,128)}', space=vmem, size = 0x9000, scoped, tag = 'internal scratch']
  %s0 = inlined_call_operand.vmem [shape: f32[8,2,16], index: 0, kind: input, shape index: {}]
  %s1 = inlined_call_operand.vmem [shape: f32[5,16,32], index: 1, kind: input, shape index: {}]
  %s2 = inlined_call_operand.vmem [shape: f32[5,32,32], index: 2, kind: input, shape index: {}]
  %s3 = inlined_call_operand.vmem [shape: f32[5,1,32], index: 3, kind: input, shape index: {}]
  %s4 = inlined_call_operand.vmem [shape: f32[3,32,32], index: 4, kind: input, shape index: {}]
  %s5 = inlined_call_operand.vmem [shape: f32[1,32], index: 5, kind: input, shape index: {}]
  %s6 = inlined_call_operand.hbm [shape: f32[8,2,32], index: 6, kind: output, shape index: {0}]
  %s7 = inlined_call_operand.hbm [shape: f32[8,2,32], index: 7, kind: output, shape index: {1}]
  %s8 = inlined_call_operand.hbm [shape: f32[8,2,32], index: 8, kind: output, shape index: {2}]
  %9 = xla_tuple %s6, %s7, %s8
  %s10 = sld [smem:[#allocation0]]
  $region50: #{encoder_forward.1} parent=0
    _
  %s12 = ssub.s32 1, %s10
  %s13 = scalar_select 0, %s12, %s10
  $region1: #{encoder_forward.1} parent=0
    #allocation2 [shape = 'u8[8192]{0}', space=vmem, size = 0x2000, scoped, tag = 'output window, operand 0, single buffered']
    #allocation3 [shape = 's32[1]{0}', space=sflag, size = 0x4, scoped, tag = 'scoped memory for encoder_forward.1']
    #allocation4 [shape = 'u8[8192]{0}', space=vmem, size = 0x2000, scoped, tag = 'output window, operand 1, single buffered']
    #allocation5 [shape = 's32[1]{0}', space=sflag, size = 0x4, scoped, tag = 'scoped memory for encoder_forward.1']
    #allocation6 [shape = 'u8[8192]{0}', space=vmem, size = 0x2000, scoped, tag = 'output window, operand 2, single buffered']
    %14 = vsyncpa [#allocation3], 0
    %15 = vsyncpa [#allocation5], 0
    // Predicated region
    $region2: #{encoder_forward.1} parent=1 // pred_check
      _
    $region3: #{encoder_forward.1} parent=1 // pred_check_branch
      %17 = sbr.rel (0) target = $region5
    $region4: #{encoder_forward.1} parent=1 // pred_region
      _
    $region5: #{encoder_forward.1} parent=1 // pred_fallthru
      _
    // Predicated region
    $region6: #{encoder_forward.1} parent=1 // pred_check
      _
    $region7: #{encoder_forward.1} parent=1 // pred_check_branch
      %19 = sbr.rel (0) target = $region9
    $region8: #{encoder_forward.1} parent=1 // pred_region
      _
    $region9: #{encoder_forward.1} parent=1 // pred_fallthru
      _
    // Predicated region
    $region10: #{encoder_forward.1} parent=1 // pred_check
      _
    $region11: #{encoder_forward.1} parent=1 // pred_check_branch
      %21 = sbr.rel (0) target = $region13
    $region12: #{encoder_forward.1} parent=1 // pred_region
      _
    $region13: #{encoder_forward.1} parent=1 // pred_fallthru
      _
    // Predicated region
    $region14: #{encoder_forward.1} parent=1 // pred_check
      _
    $region15: #{encoder_forward.1} parent=1 // pred_check_branch
      %23 = sbr.rel (0) target = $region17
    $region16: #{encoder_forward.1} parent=1 // pred_region
      _
    $region17: #{encoder_forward.1} parent=1 // pred_fallthru
      _
    // Predicated region
    $region18: #{encoder_forward.1} parent=1 // pred_check
      _
    $region19: #{encoder_forward.1} parent=1 // pred_check_branch
      %25 = sbr.rel (0) target = $region21
    $region20: #{encoder_forward.1} parent=1 // pred_region
      _
    $region21: #{encoder_forward.1} parent=1 // pred_fallthru
      _
    // Predicated region
    $region22: #{encoder_forward.1} parent=1 // pred_check
      _
    $region23: #{encoder_forward.1} parent=1 // pred_check_branch
      %27 = sbr.rel (0) target = $region25
    $region24: #{encoder_forward.1} parent=1 // pred_region
      _
    $region25: #{encoder_forward.1} parent=1 // pred_fallthru
      _
    %v28 = vld [vmem:[%s1] sm:$0xff]
    %v29 = vld [vmem:[%s1 + $0x8] sm:$0xff]
    %s30 = scalar_lea.vmem %s1, 16
    %v31 = vld [vmem:[%s30] sm:$0xff]
    %v32 = vld [vmem:[%s30 + $0x8] sm:$0xff]
    %s33 = scalar_lea.vmem %s1, 32
    %v34 = vld [vmem:[%s33] sm:$0xff]
    %v35 = vld [vmem:[%s33 + $0x8] sm:$0xff]
    %s36 = scalar_lea.vmem %s1, 48
    %v37 = vld [vmem:[%s36] sm:$0xff]
    %v38 = vld [vmem:[%s36 + $0x8] sm:$0xff]
    %s39 = scalar_lea.vmem %s1, 64
    %v40 = vld [vmem:[%s39] sm:$0xff]
    %v41 = vld [vmem:[%s39 + $0x8] sm:$0xff]
    %v42 = vld [vmem:[%s2] sm:$0xff]
    %v43 = vld [vmem:[%s2 + $0x8] sm:$0xff]
    %v44 = vld [vmem:[%s2 + $0x10] sm:$0xff]
    %v45 = vld [vmem:[%s2 + $0x18] sm:$0xff]
    %s46 = scalar_lea.vmem %s2, 32
    %v47 = vld [vmem:[%s46] sm:$0xff]
    %v48 = vld [vmem:[%s46 + $0x8] sm:$0xff]
    %v49 = vld [vmem:[%s46 + $0x10] sm:$0xff]
    %v50 = vld [vmem:[%s46 + $0x18] sm:$0xff]
    %s51 = scalar_lea.vmem %s2, 64
    %v52 = vld [vmem:[%s51] sm:$0xff]
    %v53 = vld [vmem:[%s51 + $0x8] sm:$0xff]
    %v54 = vld [vmem:[%s51 + $0x10] sm:$0xff]
    %v55 = vld [vmem:[%s51 + $0x18] sm:$0xff]
    %s56 = scalar_lea.vmem %s2, 96
    %v57 = vld [vmem:[%s56] sm:$0xff]
    %v58 = vld [vmem:[%s56 + $0x8] sm:$0xff]
    %v59 = vld [vmem:[%s56 + $0x10] sm:$0xff]
    %v60 = vld [vmem:[%s56 + $0x18] sm:$0xff]
    %s61 = scalar_lea.vmem %s2, 128
    %v62 = vld [vmem:[%s61] sm:$0xff]
    %v63 = vld [vmem:[%s61 + $0x8] sm:$0xff]
    %v64 = vld [vmem:[%s61 + $0x10] sm:$0xff]
    %v65 = vld [vmem:[%s61 + $0x18] sm:$0xff]
    %v66 = vld [vmem:[%s3] sm:$0x1]
    %s67 = scalar_lea.vmem %s3, 1
    %v68 = vld [vmem:[%s67] sm:$0x1]
    %s69 = scalar_lea.vmem %s3, 2
    %v70 = vld [vmem:[%s69] sm:$0x1]
    %s71 = scalar_lea.vmem %s3, 3
    %v72 = vld [vmem:[%s71] sm:$0x1]
    %s73 = scalar_lea.vmem %s3, 4
    %v74 = vld [vmem:[%s73] sm:$0x1]
    %v75 = vld [vmem:[%s4] sm:$0xff]
    %v76 = vld [vmem:[%s4 + $0x8] sm:$0xff]
    %v77 = vld [vmem:[%s4 + $0x10] sm:$0xff]
    %v78 = vld [vmem:[%s4 + $0x18] sm:$0xff]
    %s79 = scalar_lea.vmem %s4, 32
    %v80 = vld [vmem:[%s79] sm:$0xff]
    %v81 = vld [vmem:[%s79 + $0x8] sm:$0xff]
    %v82 = vld [vmem:[%s79 + $0x10] sm:$0xff]
    %v83 = vld [vmem:[%s79 + $0x18] sm:$0xff]
    %s84 = scalar_lea.vmem %s4, 64
    %v85 = vld [vmem:[%s84] sm:$0xff]
    %v86 = vld [vmem:[%s84 + $0x8] sm:$0xff]
    %v87 = vld [vmem:[%s84 + $0x10] sm:$0xff]
    %v88 = vld [vmem:[%s84 + $0x18] sm:$0xff]
    %v89 = vld [vmem:[%s5] sm:$0x1]
    %v90 = vlaneseq
    %v91 = vshrl.u32 %v90, 7
    %v92 = vadd.s32 %v91, 8
    %v93 = vadd.s32 %v91, 16
    %v94 = vadd.s32 %v91, 24
    %v95 = vlaneseq
    %v96 = vand.u32 %v95, 127
    %vm97 = vcmp.le.s32.totalorder %v91, %v96
    %vm98 = vcmp.le.s32.totalorder %v92, %v96
    %vm99 = vcmp.le.s32.totalorder %v93, %v96
    %vm100 = vcmp.le.s32.totalorder %v94, %v96
    %v101 = vsel %vm97, 1, 0
    %v102 = vsel %vm98, 1, 0
    %v103 = vsel %vm99, 1, 0
    %v104 = vsel %vm100, 1, 0
    %v105 = vcvt.s32.f32 %v101
    %v106 = vcvt.s32.f32 %v102
    %v107 = vcvt.s32.f32 %v103
    %v108 = vcvt.s32.f32 %v104
    %v109 = vld [vmem:[%s0] sm:$0x3]
    %vm110 = vcmask 261120
    %v112 = vsel %vm110, 0.0, 0
    %114 = vmatpush.msra.mxu0 0.0
    %115 = vmatpush.msra.mxu0 0.0
    %116 = vmatpush.msra.mxu0 0.0
    %117 = vmatpush.msra.mxu0 0.0
    %118 = vmatpush.msra.mxu0 0.0
    %119 = vmatpush.msra.mxu0 0.0
    %120 = vmatpush.msra.mxu0 0.0
    %121 = vmatpush.msra.mxu0 0.0
    %122 = vmatpush.msra.mxu0 0.0
    %123 = vmatpush.msra.mxu0 0.0
    %124 = vmatpush.msra.mxu0 0.0
    %125 = vmatpush.msra.mxu0 0.0
    %126 = vmatpush.msra.mxu0 %v45
    %127 = vmatpush.msra.mxu0 %v44
    %128 = vmatpush.msra.mxu0 %v43
    %129 = vmatpush.msra.mxu0 %v42
    %130 = vmatmul.f32.gmra.mxu0 %v112
    %v131 = vpop.f32.mrf.mxu0
    %v132 = vadd.f32 0.0, %v131
    %133 = vdwg.mxu0
    %vm134 = vcmask 130048
    %v136 = vsel %vm134, %v109, 0
    %138 = vmatpush.msra.mxu0 0.0
    %139 = vmatpush.msra.mxu0 0.0
    %140 = vmatpush.msra.mxu0 0.0
    %141 = vmatpush.msra.mxu0 0.0
    %142 = vmatpush.msra.mxu0 0.0
    %143 = vmatpush.msra.mxu0 0.0
    %144 = vmatpush.msra.mxu0 0.0
    %145 = vmatpush.msra.mxu0 0.0
    %146 = vmatpush.msra.mxu0 0.0
    %147 = vmatpush.msra.mxu0 0.0
    %148 = vmatpush.msra.mxu0 0.0
    %149 = vmatpush.msra.mxu0 0.0
    %150 = vmatpush.msra.mxu0 0.0
    %151 = vmatpush.msra.mxu0 0.0
    %152 = vmatpush.msra.mxu0 %v29
    %153 = vmatpush.msra.mxu0 %v28
    %154 = vmatmul.f32.gmra.mxu0 %v136
    %v155 = vpop.f32.mrf.mxu0
    %v156 = vadd.f32 %v132, %v155
    %157 = vdwg.mxu0
    %v159 = vperm.slane %v66, 0
    %v161 = vadd.f32 %v156, %v159
    %162 = vmatpush.msra.mxu0 0.0
    %163 = vmatpush.msra.mxu0 0.0
    %164 = vmatpush.msra.mxu0 0.0
    %165 = vmatpush.msra.mxu0 0.0
    %166 = vmatpush.msra.mxu0 0.0
    %167 = vmatpush.msra.mxu0 0.0
    %168 = vmatpush.msra.mxu0 0.0
    %169 = vmatpush.msra.mxu0 0.0
    %170 = vmatpush.msra.mxu0 0.0
    %171 = vmatpush.msra.mxu0 0.0
    %172 = vmatpush.msra.mxu0 0.0
    %173 = vmatpush.msra.mxu0 0.0
    %174 = vmatpush.msra.mxu0 %v50
    %175 = vmatpush.msra.mxu0 %v49
    %176 = vmatpush.msra.mxu0 %v48
    %177 = vmatpush.msra.mxu0 %v47
    %178 = vmatmul.f32.gmra.mxu0 %v112
    %v179 = vpop.f32.mrf.mxu0
    %v180 = vadd.f32 0.0, %v179
    %181 = vdwg.mxu0
    %182 = vmatpush.msra.mxu0 0.0
    %183 = vmatpush.msra.mxu0 0.0
    %184 = vmatpush.msra.mxu0 0.0
    %185 = vmatpush.msra.mxu0 0.0
    %186 = vmatpush.msra.mxu0 0.0
    %187 = vmatpush.msra.mxu0 0.0
    %188 = vmatpush.msra.mxu0 0.0
    %189 = vmatpush.msra.mxu0 0.0
    %190 = vmatpush.msra.mxu0 0.0
    %191 = vmatpush.msra.mxu0 0.0
    %192 = vmatpush.msra.mxu0 0.0
    %193 = vmatpush.msra.mxu0 0.0
    %194 = vmatpush.msra.mxu0 0.0
    %195 = vmatpush.msra.mxu0 0.0
    %196 = vmatpush.msra.mxu0 %v32
    %197 = vmatpush.msra.mxu0 %v31
    %198 = vmatmul.f32.gmra.mxu0 %v136
    %v199 = vpop.f32.mrf.mxu0
    %v200 = vadd.f32 %v180, %v199
    %201 = vdwg.mxu0
    %v203 = vperm.slane %v68, 0
    %v205 = vadd.f32 %v200, %v203
    %206 = vmatpush.msra.mxu0 0.0
    %207 = vmatpush.msra.mxu0 0.0
    %208 = vmatpush.msra.mxu0 0.0
    %209 = vmatpush.msra.mxu0 0.0
    %210 = vmatpush.msra.mxu0 0.0
    %211 = vmatpush.msra.mxu0 0.0
    %212 = vmatpush.msra.mxu0 0.0
    %213 = vmatpush.msra.mxu0 0.0
    %214 = vmatpush.msra.mxu0 0.0
    %215 = vmatpush.msra.mxu0 0.0
    %216 = vmatpush.msra.mxu0 0.0
    %217 = vmatpush.msra.mxu0 0.0
    %218 = vmatpush.msra.mxu0 %v55
    %219 = vmatpush.msra.mxu0 %v54
    %220 = vmatpush.msra.mxu0 %v53
    %221 = vmatpush.msra.mxu0 %v52
    %222 = vmatmul.f32.gmra.mxu0 %v112
    %v223 = vpop.f32.mrf.mxu0
    %v224 = vadd.f32 0.0, %v223
    %225 = vdwg.mxu0
    %226 = vmatpush.msra.mxu0 0.0
    %227 = vmatpush.msra.mxu0 0.0
    %228 = vmatpush.msra.mxu0 0.0
    %229 = vmatpush.msra.mxu0 0.0
    %230 = vmatpush.msra.mxu0 0.0
    %231 = vmatpush.msra.mxu0 0.0
    %232 = vmatpush.msra.mxu0 0.0
    %233 = vmatpush.msra.mxu0 0.0
    %234 = vmatpush.msra.mxu0 0.0
    %235 = vmatpush.msra.mxu0 0.0
    %236 = vmatpush.msra.mxu0 0.0
    %237 = vmatpush.msra.mxu0 0.0
    %238 = vmatpush.msra.mxu0 0.0
    %239 = vmatpush.msra.mxu0 0.0
    %240 = vmatpush.msra.mxu0 %v35
    %241 = vmatpush.msra.mxu0 %v34
    %242 = vmatmul.f32.gmra.mxu0 %v136
    %v243 = vpop.f32.mrf.mxu0
    %v244 = vadd.f32 %v224, %v243
    %245 = vdwg.mxu0
    %v247 = vperm.slane %v70, 0
    %v249 = vadd.f32 %v244, %v247
    %250 = vmatpush.msra.mxu0 0.0
    %251 = vmatpush.msra.mxu0 0.0
    %252 = vmatpush.msra.mxu0 0.0
    %253 = vmatpush.msra.mxu0 0.0
    %254 = vmatpush.msra.mxu0 0.0
    %255 = vmatpush.msra.mxu0 0.0
    %256 = vmatpush.msra.mxu0 0.0
    %257 = vmatpush.msra.mxu0 0.0
    %258 = vmatpush.msra.mxu0 0.0
    %259 = vmatpush.msra.mxu0 0.0
    %260 = vmatpush.msra.mxu0 0.0
    %261 = vmatpush.msra.mxu0 0.0
    %262 = vmatpush.msra.mxu0 %v60
    %263 = vmatpush.msra.mxu0 %v59
    %264 = vmatpush.msra.mxu0 %v58
    %265 = vmatpush.msra.mxu0 %v57
    %266 = vmatmul.f32.gmra.mxu0 %v112
    %v267 = vpop.f32.mrf.mxu0
    %v268 = vadd.f32 0.0, %v267
    %269 = vdwg.mxu0
    %270 = vmatpush.msra.mxu0 0.0
    %271 = vmatpush.msra.mxu0 0.0
    %272 = vmatpush.msra.mxu0 0.0
    %273 = vmatpush.msra.mxu0 0.0
    %274 = vmatpush.msra.mxu0 0.0
    %275 = vmatpush.msra.mxu0 0.0
    %276 = vmatpush.msra.mxu0 0.0
    %277 = vmatpush.msra.mxu0 0.0
    %278 = vmatpush.msra.mxu0 0.0
    %279 = vmatpush.msra.mxu0 0.0
    %280 = vmatpush.msra.mxu0 0.0
    %281 = vmatpush.msra.mxu0 0.0
    %282 = vmatpush.msra.mxu0 0.0
    %283 = vmatpush.msra.mxu0 0.0
    %284 = vmatpush.msra.mxu0 %v38
    %285 = vmatpush.msra.mxu0 %v37
    %286 = vmatmul.f32.gmra.mxu0 %v136
    %v287 = vpop.f32.mrf.mxu0
    %v288 = vadd.f32 %v268, %v287
    %289 = vdwg.mxu0
    %v291 = vperm.slane %v72, 0
    %v293 = vadd.f32 %v288, %v291
    %294 = vmatpush.msra.mxu0 0.0
    %295 = vmatpush.msra.mxu0 0.0
    %296 = vmatpush.msra.mxu0 0.0
    %297 = vmatpush.msra.mxu0 0.0
    %298 = vmatpush.msra.mxu0 0.0
    %299 = vmatpush.msra.mxu0 0.0
    %300 = vmatpush.msra.mxu0 0.0
    %301 = vmatpush.msra.mxu0 0.0
    %302 = vmatpush.msra.mxu0 0.0
    %303 = vmatpush.msra.mxu0 0.0
    %304 = vmatpush.msra.mxu0 0.0
    %305 = vmatpush.msra.mxu0 0.0
    %306 = vmatpush.msra.mxu0 %v65
    %307 = vmatpush.msra.mxu0 %v64
    %308 = vmatpush.msra.mxu0 %v63
    %309 = vmatpush.msra.mxu0 %v62
    %310 = vmatmul.f32.gmra.mxu0 %v112
    %v311 = vpop.f32.mrf.mxu0
    %v312 = vadd.f32 0.0, %v311
    %313 = vdwg.mxu0
    %314 = vmatpush.msra.mxu0 0.0
    %315 = vmatpush.msra.mxu0 0.0
    %316 = vmatpush.msra.mxu0 0.0
    %317 = vmatpush.msra.mxu0 0.0
    %318 = vmatpush.msra.mxu0 0.0
    %319 = vmatpush.msra.mxu0 0.0
    %320 = vmatpush.msra.mxu0 0.0
    %321 = vmatpush.msra.mxu0 0.0
    %322 = vmatpush.msra.mxu0 0.0
    %323 = vmatpush.msra.mxu0 0.0
    %324 = vmatpush.msra.mxu0 0.0
    %325 = vmatpush.msra.mxu0 0.0
    %326 = vmatpush.msra.mxu0 0.0
    %327 = vmatpush.msra.mxu0 0.0
    %328 = vmatpush.msra.mxu0 %v41
    %329 = vmatpush.msra.mxu0 %v40
    %330 = vmatmul.f32.gmra.mxu0 %v136
    %v331 = vpop.f32.mrf.mxu0
    %v332 = vadd.f32 %v312, %v331
    %333 = vdwg.mxu0
    %v335 = vperm.slane %v74, 0
    %v337 = vadd.f32 %v332, %v335
    %vm338 = vcmask 254976
    %v339 = vsel %vm338, %v205, -inf
    %340 = vmax.xlane.f32.xlu0 %v339
    %v341 = vpop.xlane.xlu0 %340
    %v342 = vsub.f32 %v205, %v341
    %v343 = vmul.f32 %v342, 1.442695
    %v344 = vpow.pop %v343
    %v345 = vsel %vm338, %v344, 0.0
    %346 = vadd.xlane.f32.xlu0 %v345
    %v347 = vpop.xlane.xlu0 %346
    %v348 = vrcp.pop %v347
    %v349 = vmul.f32 %v344, %v348
    %v351 = vsel %vm110, %v349, 0
    %353 = vmatpush.msra.mxu0 0.0
    %354 = vmatpush.msra.mxu0 0.0
    %355 = vmatpush.msra.mxu0 0.0
    %356 = vmatpush.msra.mxu0 0.0
    %357 = vmatpush.msra.mxu0 0.0
    %358 = vmatpush.msra.mxu0 0.0
    %359 = vmatpush.msra.mxu0 0.0
    %360 = vmatpush.msra.mxu0 0.0
    %361 = vmatpush.msra.mxu0 0.0
    %362 = vmatpush.msra.mxu0 0.0
    %363 = vmatpush.msra.mxu0 0.0
    %364 = vmatpush.msra.mxu0 0.0
    %365 = vmatpush.msra.mxu0 %v108
    %366 = vmatpush.msra.mxu0 %v107
    %367 = vmatpush.msra.mxu0 %v106
    %368 = vmatpush.msra.mxu0 %v105
    %369 = vmatmul.f32.gmra.mxu0 %v351
    %v370 = vpop.f32.mrf.mxu0
    %v371 = vadd.f32 0.0, %v370
    %372 = vdwg.mxu0
    %v373 = vsub.f32 1.0, %v371
    %v374 = vsel %vm338, %v249, -inf
    %375 = vmax.xlane.f32.xlu0 %v374
    %v376 = vpop.xlane.xlu0 %375
    %v377 = vsub.f32 %v249, %v376
    %v378 = vmul.f32 %v377, 1.442695
    %v379 = vpow.pop %v378
    %v380 = vsel %vm338, %v379, 0.0
    %381 = vadd.xlane.f32.xlu0 %v380
    %v382 = vpop.xlane.xlu0 %381
    %v383 = vrcp.pop %v382
    %v384 = vmul.f32 %v379, %v383
    %v386 = vsel %vm110, %v384, 0
    %388 = vmatpush.msra.mxu0 0.0
    %389 = vmatpush.msra.mxu0 0.0
    %390 = vmatpush.msra.mxu0 0.0
    %391 = vmatpush.msra.mxu0 0.0
    %392 = vmatpush.msra.mxu0 0.0
    %393 = vmatpush.msra.mxu0 0.0
    %394 = vmatpush.msra.mxu0 0.0
    %395 = vmatpush.msra.mxu0 0.0
    %396 = vmatpush.msra.mxu0 0.0
    %397 = vmatpush.msra.mxu0 0.0
    %398 = vmatpush.msra.mxu0 0.0
    %399 = vmatpush.msra.mxu0 0.0
    %400 = vmatpush.msra.mxu0 %v108
    %401 = vmatpush.msra.mxu0 %v107
    %402 = vmatpush.msra.mxu0 %v106
    %403 = vmatpush.msra.mxu0 %v105
    %404 = vmatmul.f32.gmra.mxu0 %v386
    %v405 = vpop.f32.mrf.mxu0
    %v406 = vadd.f32 0.0, %v405
    %407 = vdwg.mxu0
    %v408 = vsel %vm338, %v293, -inf
    %409 = vmax.xlane.f32.xlu0 %v408
    %v410 = vpop.xlane.xlu0 %409
    %v411 = vsub.f32 %v293, %v410
    %v412 = vmul.f32 %v411, 1.442695
    %v413 = vpow.pop %v412
    %v414 = vsel %vm338, %v413, 0.0
    %415 = vadd.xlane.f32.xlu0 %v414
    %v416 = vpop.xlane.xlu0 %415
    %v417 = vrcp.pop %v416
    %v418 = vmul.f32 %v413, %v417
    %v420 = vsel %vm110, %v418, 0
    %422 = vmatpush.msra.mxu0 0.0
    %423 = vmatpush.msra.mxu0 0.0
    %424 = vmatpush.msra.mxu0 0.0
    %425 = vmatpush.msra.mxu0 0.0
    %426 = vmatpush.msra.mxu0 0.0
    %427 = vmatpush.msra.mxu0 0.0
    %428 = vmatpush.msra.mxu0 0.0
    %429 = vmatpush.msra.mxu0 0.0
    %430 = vmatpush.msra.mxu0 0.0
    %431 = vmatpush.msra.mxu0 0.0
    %432 = vmatpush.msra.mxu0 0.0
    %433 = vmatpush.msra.mxu0 0.0
    %434 = vmatpush.msra.mxu0 %v108
    %435 = vmatpush.msra.mxu0 %v107
    %436 = vmatpush.msra.mxu0 %v106
    %437 = vmatpush.msra.mxu0 %v105
    %438 = vmatmul.f32.gmra.mxu0 %v420
    %v439 = vpop.f32.mrf.mxu0
    %v440 = vadd.f32 0.0, %v439
    %441 = vdwg.mxu0
    %v442 = vsub.f32 1.0, %v440
    %v443 = vsel %vm338, %v337, -inf
    %444 = vmax.xlane.f32.xlu0 %v443
    %v445 = vpop.xlane.xlu0 %444
    %v446 = vsub.f32 %v337, %v445
    %v447 = vmul.f32 %v446, 1.442695
    %v448 = vpow.pop %v447
    %v449 = vsel %vm338, %v448, 0.0
    %450 = vadd.xlane.f32.xlu0 %v449
    %v451 = vpop.xlane.xlu0 %450
    %v452 = vrcp.pop %v451
    %v453 = vmul.f32 %v448, %v452
    %v455 = vsel %vm110, %v453, 0
    %457 = vmatpush.msra.mxu0 0.0
    %458 = vmatpush.msra.mxu0 0.0
    %459 = vmatpush.msra.mxu0 0.0
    %460 = vmatpush.msra.mxu0 0.0
    %461 = vmatpush.msra.mxu0 0.0
    %462 = vmatpush.msra.mxu0 0.0
    %463 = vmatpush.msra.mxu0 0.0
    %464 = vmatpush.msra.mxu0 0.0
    %465 = vmatpush.msra.mxu0 0.0
    %466 = vmatpush.msra.mxu0 0.0
    %467 = vmatpush.msra.mxu0 0.0
    %468 = vmatpush.msra.mxu0 0.0
    %469 = vmatpush.msra.mxu0 %v108
    %470 = vmatpush.msra.mxu0 %v107
    %471 = vmatpush.msra.mxu0 %v106
    %472 = vmatpush.msra.mxu0 %v105
    %473 = vmatmul.f32.gmra.mxu0 %v455
    %v474 = vpop.f32.mrf.mxu0
    %v475 = vadd.f32 0.0, %v474
    %476 = vdwg.mxu0
    %v477 = vtanh.pop %v161
    %v478 = vmul.f32 %v475, %v442
    %v479 = vsub.f32 %v475, %v478
    %v480 = vsub.f32 %v442, %v478
    %v481 = vmul.f32 %v406, %v373
    %v482 = vsub.f32 %v406, %v481
    %v483 = vsub.f32 %v373, %v481
    %v484 = vmul.f32 %v481, 0.0
    %v485 = vmul.f32 %v478, %v477
    %v486 = vadd.f32 %v484, %v485
    %v487 = vmul.f32 %v482, 0.0
    %v488 = vmul.f32 %v479, %v477
    %v489 = vadd.f32 %v487, %v488
    %v490 = vadd.f32 %v489, %v486
    %v491 = vmul.f32 %v483, 0.0
    %v492 = vmul.f32 %v480, %v477
    %v493 = vadd.f32 %v491, %v492
    %v494 = vadd.f32 %v493, %v486
    %v496 = vsel %vm110, %v494, 0
    %498 = vmatpush.msra.mxu0 0.0
    %499 = vmatpush.msra.mxu0 0.0
    %500 = vmatpush.msra.mxu0 0.0
    %501 = vmatpush.msra.mxu0 0.0
    %502 = vmatpush.msra.mxu0 0.0
    %503 = vmatpush.msra.mxu0 0.0
    %504 = vmatpush.msra.mxu0 0.0
    %505 = vmatpush.msra.mxu0 0.0
    %506 = vmatpush.msra.mxu0 0.0
    %507 = vmatpush.msra.mxu0 0.0
    %508 = vmatpush.msra.mxu0 0.0
    %509 = vmatpush.msra.mxu0 0.0
    %510 = vmatpush.msra.mxu0 %v83
    %511 = vmatpush.msra.mxu0 %v82
    %512 = vmatpush.msra.mxu0 %v81
    %513 = vmatpush.msra.mxu0 %v80
    %514 = vmatmul.f32.gmra.mxu0 %v496
    %v515 = vpop.f32.mrf.mxu0
    %v516 = vadd.f32 0.0, %v515
    %517 = vdwg.mxu0
    %v519 = vsel %vm110, %v490, 0
    %521 = vmatpush.msra.mxu0 0.0
    %522 = vmatpush.msra.mxu0 0.0
    %523 = vmatpush.msra.mxu0 0.0
    %524 = vmatpush.msra.mxu0 0.0
    %525 = vmatpush.msra.mxu0 0.0
    %526 = vmatpush.msra.mxu0 0.0
    %527 = vmatpush.msra.mxu0 0.0
    %528 = vmatpush.msra.mxu0 0.0
    %529 = vmatpush.msra.mxu0 0.0
    %530 = vmatpush.msra.mxu0 0.0
    %531 = vmatpush.msra.mxu0 0.0
    %532 = vmatpush.msra.mxu0 0.0
    %533 = vmatpush.msra.mxu0 %v78
    %534 = vmatpush.msra.mxu0 %v77
    %535 = vmatpush.msra.mxu0 %v76
    %536 = vmatpush.msra.mxu0 %v75
    %537 = vmatmul.f32.gmra.mxu0 %v519
    %v538 = vpop.f32.mrf.mxu0
    %v539 = vadd.f32 %v516, %v538
    %540 = vdwg.mxu0
    %v542 = vsel %vm110, %v486, 0
    %544 = vmatpush.msra.mxu0 0.0
    %545 = vmatpush.msra.mxu0 0.0
    %546 = vmatpush.msra.mxu0 0.0
    %547 = vmatpush.msra.mxu0 0.0
    %548 = vmatpush.msra.mxu0 0.0
    %549 = vmatpush.msra.mxu0 0.0
    %550 = vmatpush.msra.mxu0 0.0
    %551 = vmatpush.msra.mxu0 0.0
    %552 = vmatpush.msra.mxu0 0.0
    %553 = vmatpush.msra.mxu0 0.0
    %554 = vmatpush.msra.mxu0 0.0
    %555 = vmatpush.msra.mxu0 0.0
    %556 = vmatpush.msra.mxu0 %v88
    %557 = vmatpush.msra.mxu0 %v87
    %558 = vmatpush.msra.mxu0 %v86
    %559 = vmatpush.msra.mxu0 %v85
    %560 = vmatmul.f32.gmra.mxu0 %v542
    %v561 = vpop.f32.mrf.mxu0
    %v562 = vadd.f32 0.0, %v561
    %563 = vdwg.mxu0
    %v564 = vadd.f32 %v539, %v562
    %v566 = vperm.slane %v89, 0
    %v568 = vadd.f32 %v564, %v566
    %v569 = vtanh.pop %v568
    %v570 = vtanh.pop %v494
    %571 = vst.msk [vmem:[#allocation2] sm:$0x3] %vm338, %v570
    %v572 = vtanh.pop %v490
    %573 = vst.msk [vmem:[#allocation4] sm:$0x3] %vm338, %v572
    %v574 = vtanh.pop %v486
    %575 = vst.msk [vmem:[#allocation6] sm:$0x3] %vm338, %v574
    %s576 = scalar_lea.vmem %s0, 2
    %v577 = vld [vmem:[%s576] sm:$0x3]
    %v579 = vsel %vm110, %v569, 0
    %581 = vmatpush.msra.mxu0 0.0
    %582 = vmatpush.msra.mxu0 0.0
    %583 = vmatpush.msra.mxu0 0.0
    %584 = vmatpush.msra.mxu0 0.0
    %585 = vmatpush.msra.mxu0 0.0
    %586 = vmatpush.msra.mxu0 0.0
    %587 = vmatpush.msra.mxu0 0.0
    %588 = vmatpush.msra.mxu0 0.0
    %589 = vmatpush.msra.mxu0 0.0
    %590 = vmatpush.msra.mxu0 0.0
    %591 = vmatpush.msra.mxu0 0.0
    %592 = vmatpush.msra.mxu0 0.0
    %593 = vmatpush.msra.mxu0 %v45
    %594 = vmatpush.msra.mxu0 %v44
    %595 = vmatpush.msra.mxu0 %v43
    %596 = vmatpush.msra.mxu0 %v42
    %597 = vmatmul.f32.gmra.mxu0 %v579
    %v598 = vpop.f32.mrf.mxu0
    %v599 = vadd.f32 0.0, %v598
    %600 = vdwg.mxu0
    %v602 = vsel %vm134, %v577, 0
    %604 = vmatpush.msra.mxu0 0.0
    %605 = vmatpush.msra.mxu0 0.0
    %606 = vmatpush.msra.mxu0 0.0
    %607 = vmatpush.msra.mxu0 0.0
    %608 = vmatpush.msra.mxu0 0.0
    %609 = vmatpush.msra.mxu0 0.0
    %610 = vmatpush.msra.mxu0 0.0
    %611 = vmatpush.msra.mxu0 0.0
    %612 = vmatpush.msra.mxu0 0.0
    %613 = vmatpush.msra.mxu0 0.0
    %614 = vmatpush.msra.mxu0 0.0
    %615 = vmatpush.msra.mxu0 0.0
    %616 = vmatpush.msra.mxu0 0.0
    %617 = vmatpush.msra.mxu0 0.0
    %618 = vmatpush.msra.mxu0 %v29
    %619 = vmatpush.msra.mxu0 %v28
    %620 = vmatmul.f32.gmra.mxu0 %v602
    %v621 = vpop.f32.mrf.mxu0
    %v622 = vadd.f32 %v599, %v621
    %623 = vdwg.mxu0
    %v624 = vadd.f32 %v622, %v159
    %625 = vmatpush.msra.mxu0 0.0
    %626 = vmatpush.msra.mxu0 0.0
    %627 = vmatpush.msra.mxu0 0.0
    %628 = vmatpush.msra.mxu0 0.0
    %629 = vmatpush.msra.mxu0 0.0
    %630 = vmatpush.msra.mxu0 0.0
    %631 = vmatpush.msra.mxu0 0.0
    %632 = vmatpush.msra.mxu0 0.0
    %633 = vmatpush.msra.mxu0 0.0
    %634 = vmatpush.msra.mxu0 0.0
    %635 = vmatpush.msra.mxu0 0.0
    %636 = vmatpush.msra.mxu0 0.0
    %637 = vmatpush.msra.mxu0 %v50
    %638 = vmatpush.msra.mxu0 %v49
    %639 = vmatpush.msra.mxu0 %v48
    %640 = vmatpush.msra.mxu0 %v47
    %641 = vmatmul.f32.gmra.mxu0 %v579
    %v642 = vpop.f32.mrf.mxu0
    %v643 = vadd.f32 0.0, %v642
    %644 = vdwg.mxu0
    %645 = vmatpush.msra.mxu0 0.0
    %646 = vmatpush.msra.mxu0 0.0
    %647 = vmatpush.msra.mxu0 0.0
    %648 = vmatpush.msra.mxu0 0.0
    %649 = vmatpush.msra.mxu0 0.0
    %650 = vmatpush.msra.mxu0 0.0
    %651 = vmatpush.msra.mxu0 0.0
    %652 = vmatpush.msra.mxu0 0.0
    %653 = vmatpush.msra.mxu0 0.0
    %654 = vmatpush.msra.mxu0 0.0
    %655 = vmatpush.msra.mxu0 0.0
    %656 = vmatpush.msra.mxu0 0.0
    %657 = vmatpush.msra.mxu0 0.0
    %658 = vmatpush.msra.mxu0 0.0
    %659 = vmatpush.msra.mxu0 %v32
    %660 = vmatpush.msra.mxu0 %v31
    %661 = vmatmul.f32.gmra.mxu0 %v602
    %v662 = vpop.f32.mrf.mxu0
    %v663 = vadd.f32 %v643, %v662
    %664 = vdwg.mxu0
    %v665 = vadd.f32 %v663, %v203
    %666 = vmatpush.msra.mxu0 0.0
    %667 = vmatpush.msra.mxu0 0.0
    %668 = vmatpush.msra.mxu0 0.0
    %669 = vmatpush.msra.mxu0 0.0
    %670 = vmatpush.msra.mxu0 0.0
    %671 = vmatpush.msra.mxu0 0.0
    %672 = vmatpush.msra.mxu0 0.0
    %673 = vmatpush.msra.mxu0 0.0
    %674 = vmatpush.msra.mxu0 0.0
    %675 = vmatpush.msra.mxu0 0.0
    %676 = vmatpush.msra.mxu0 0.0
    %677 = vmatpush.msra.mxu0 0.0
    %678 = vmatpush.msra.mxu0 %v55
    %679 = vmatpush.msra.mxu0 %v54
    %680 = vmatpush.msra.mxu0 %v53
    %681 = vmatpush.msra.mxu0 %v52
    %682 = vmatmul.f32.gmra.mxu0 %v579
    %v683 = vpop.f32.mrf.mxu0
    %v684 = vadd.f32 0.0, %v683
    %685 = vdwg.mxu0
    %686 = vmatpush.msra.mxu0 0.0
    %687 = vmatpush.msra.mxu0 0.0
    %688 = vmatpush.msra.mxu0 0.0
    %689 = vmatpush.msra.mxu0 0.0
    %690 = vmatpush.msra.mxu0 0.0
    %691 = vmatpush.msra.mxu0 0.0
    %692 = vmatpush.msra.mxu0 0.0
    %693 = vmatpush.msra.mxu0 0.0
    %694 = vmatpush.msra.mxu0 0.0
    %695 = vmatpush.msra.mxu0 0.0
    %696 = vmatpush.msra.mxu0 0.0
    %697 = vmatpush.msra.mxu0 0.0
    %698 = vmatpush.msra.mxu0 0.0
    %699 = vmatpush.msra.mxu0 0.0
    %700 = vmatpush.msra.mxu0 %v35
    %701 = vmatpush.msra.mxu0 %v34
    %702 = vmatmul.f32.gmra.mxu0 %v602
    %v703 = vpop.f32.mrf.mxu0
    %v704 = vadd.f32 %v684, %v703
    %705 = vdwg.mxu0
    %v706 = vadd.f32 %v704, %v247
    %707 = vmatpush.msra.mxu0 0.0
    %708 = vmatpush.msra.mxu0 0.0
    %709 = vmatpush.msra.mxu0 0.0
    %710 = vmatpush.msra.mxu0 0.0
    %711 = vmatpush.msra.mxu0 0.0
    %712 = vmatpush.msra.mxu0 0.0
    %713 = vmatpush.msra.mxu0 0.0
    %714 = vmatpush.msra.mxu0 0.0
    %715 = vmatpush.msra.mxu0 0.0
    %716 = vmatpush.msra.mxu0 0.0
    %717 = vmatpush.msra.mxu0 0.0
    %718 = vmatpush.msra.mxu0 0.0
    %719 = vmatpush.msra.mxu0 %v60
    %720 = vmatpush.msra.mxu0 %v59
    %721 = vmatpush.msra.mxu0 %v58
    %722 = vmatpush.msra.mxu0 %v57
    %723 = vmatmul.f32.gmra.mxu0 %v579
    %v724 = vpop.f32.mrf.mxu0
    %v725 = vadd.f32 0.0, %v724
    %726 = vdwg.mxu0
    %727 = vmatpush.msra.mxu0 0.0
    %728 = vmatpush.msra.mxu0 0.0
    %729 = vmatpush.msra.mxu0 0.0
    %730 = vmatpush.msra.mxu0 0.0
    %731 = vmatpush.msra.mxu0 0.0
    %732 = vmatpush.msra.mxu0 0.0
    %733 = vmatpush.msra.mxu0 0.0
    %734 = vmatpush.msra.mxu0 0.0
    %735 = vmatpush.msra.mxu0 0.0
    %736 = vmatpush.msra.mxu0 0.0
    %737 = vmatpush.msra.mxu0 0.0
    %738 = vmatpush.msra.mxu0 0.0
    %739 = vmatpush.msra.mxu0 0.0
    %740 = vmatpush.msra.mxu0 0.0
    %741 = vmatpush.msra.mxu0 %v38
    %742 = vmatpush.msra.mxu0 %v37
    %743 = vmatmul.f32.gmra.mxu0 %v602
    %v744 = vpop.f32.mrf.mxu0
    %v745 = vadd.f32 %v725, %v744
    %746 = vdwg.mxu0
    %v747 = vadd.f32 %v745, %v291
    %748 = vmatpush.msra.mxu0 0.0
    %749 = vmatpush.msra.mxu0 0.0
    %750 = vmatpush.msra.mxu0 0.0
    %751 = vmatpush.msra.mxu0 0.0
    %752 = vmatpush.msra.mxu0 0.0
    %753 = vmatpush.msra.mxu0 0.0
    %754 = vmatpush.msra.mxu0 0.0
    %755 = vmatpush.msra.mxu0 0.0
    %756 = vmatpush.msra.mxu0 0.0
    %757 = vmatpush.msra.mxu0 0.0
    %758 = vmatpush.msra.mxu0 0.0
    %759 = vmatpush.msra.mxu0 0.0
    %760 = vmatpush.msra.mxu0 %v65
    %761 = vmatpush.msra.mxu0 %v64
    %762 = vmatpush.msra.mxu0 %v63
    %763 = vmatpush.msra.mxu0 %v62
    %764 = vmatmul.f32.gmra.mxu0 %v579
    %v765 = vpop.f32.mrf.mxu0
    %v766 = vadd.f32 0.0, %v765
    %767 = vdwg.mxu0
    %768 = vmatpush.msra.mxu0 0.0
    %769 = vmatpush.msra.mxu0 0.0
    %770 = vmatpush.msra.mxu0 0.0
    %771 = vmatpush.msra.mxu0 0.0
    %772 = vmatpush.msra.mxu0 0.0
    %773 = vmatpush.msra.mxu0 0.0
    %774 = vmatpush.msra.mxu0 0.0
    %775 = vmatpush.msra.mxu0 0.0
    %776 = vmatpush.msra.mxu0 0.0
    %777 = vmatpush.msra.mxu0 0.0
    %778 = vmatpush.msra.mxu0 0.0
    %779 = vmatpush.msra.mxu0 0.0
    %780 = vmatpush.msra.mxu0 0.0
    %781 = vmatpush.msra.mxu0 0.0
    %782 = vmatpush.msra.mxu0 %v41
    %783 = vmatpush.msra.mxu0 %v40
    %784 = vmatmul.f32.gmra.mxu0 %v602
    %v785 = vpop.f32.mrf.mxu0
    %v786 = vadd.f32 %v766, %v785
    %787 = vdwg.mxu0
    %v788 = vadd.f32 %v786, %v335
    %v789 = vsel %vm338, %v665, -inf
    %790 = vmax.xlane.f32.xlu0 %v789
    %v791 = vpop.xlane.xlu0 %790
    %v792 = vsub.f32 %v665, %v791
    %v793 = vmul.f32 %v792, 1.442695
    %v794 = vpow.pop %v793
    %v795 = vsel %vm338, %v794, 0.0
    %796 = vadd.xlane.f32.xlu0 %v795
    %v797 = vpop.xlane.xlu0 %796
    %v798 = vrcp.pop %v797
    %v799 = vmul.f32 %v794, %v798
    %v801 = vsel %vm110, %v799, 0
    %803 = vmatpush.msra.mxu0 0.0
    %804 = vmatpush.msra.mxu0 0.0
    %805 = vmatpush.msra.mxu0 0.0
    %806 = vmatpush.msra.mxu0 0.0
    %807 = vmatpush.msra.mxu0 0.0
    %808 = vmatpush.msra.mxu0 0.0
    %809 = vmatpush.msra.mxu0 0.0
    %810 = vmatpush.msra.mxu0 0.0
    %811 = vmatpush.msra.mxu0 0.0
    %812 = vmatpush.msra.mxu0 0.0
    %813 = vmatpush.msra.mxu0 0.0
    %814 = vmatpush.msra.mxu0 0.0
    %815 = vmatpush.msra.mxu0 %v108
    %816 = vmatpush.msra.mxu0 %v107
    %817 = vmatpush.msra.mxu0 %v106
    %818 = vmatpush.msra.mxu0 %v105
    %819 = vmatmul.f32.gmra.mxu0 %v801
    %v820 = vpop.f32.mrf.mxu0
    %v821 = vadd.f32 0.0, %v820
    %822 = vdwg.mxu0
    %v823 = vsub.f32 1.0, %v821
    %v824 = vsel %vm338, %v706, -inf
    %825 = vmax.xlane.f32.xlu0 %v824
    %v826 = vpop.xlane.xlu0 %825
    %v827 = vsub.f32 %v706, %v826
    %v828 = vmul.f32 %v827, 1.442695
    %v829 = vpow.pop %v828
    %v830 = vsel %vm338, %v829, 0.0
    %831 = vadd.xlane.f32.xlu0 %v830
    %v832 = vpop.xlane.xlu0 %831
    %v833 = vrcp.pop %v832
    %v834 = vmul.f32 %v829, %v833
    %v836 = vsel %vm110, %v834, 0
    %838 = vmatpush.msra.mxu0 0.0
    %839 = vmatpush.msra.mxu0 0.0
    %840 = vmatpush.msra.mxu0 0.0
    %841 = vmatpush.msra.mxu0 0.0
    %842 = vmatpush.msra.mxu0 0.0
    %843 = vmatpush.msra.mxu0 0.0
    %844 = vmatpush.msra.mxu0 0.0
    %845 = vmatpush.msra.mxu0 0.0
    %846 = vmatpush.msra.mxu0 0.0
    %847 = vmatpush.msra.mxu0 0.0
    %848 = vmatpush.msra.mxu0 0.0
    %849 = vmatpush.msra.mxu0 0.0
    %850 = vmatpush.msra.mxu0 %v108
    %851 = vmatpush.msra.mxu0 %v107
    %852 = vmatpush.msra.mxu0 %v106
    %853 = vmatpush.msra.mxu0 %v105
    %854 = vmatmul.f32.gmra.mxu0 %v836
    %v855 = vpop.f32.mrf.mxu0
    %v856 = vadd.f32 0.0, %v855
    %857 = vdwg.mxu0
    %v858 = vsel %vm338, %v747, -inf
    %859 = vmax.xlane.f32.xlu0 %v858
    %v860 = vpop.xlane.xlu0 %859
    %v861 = vsub.f32 %v747, %v860
    %v862 = vmul.f32 %v861, 1.442695
    %v863 = vpow.pop %v862
    %v864 = vsel %vm338, %v863, 0.0
    %865 = vadd.xlane.f32.xlu0 %v864
    %v866 = vpop.xlane.xlu0 %865
    %v867 = vrcp.pop %v866
    %v868 = vmul.f32 %v863, %v867
    %v870 = vsel %vm110, %v868, 0
    %872 = vmatpush.msra.mxu0 0.0
    %873 = vmatpush.msra.mxu0 0.0
    %874 = vmatpush.msra.mxu0 0.0
    %875 = vmatpush.msra.mxu0 0.0
    %876 = vmatpush.msra.mxu0 0.0
    %877 = vmatpush.msra.mxu0 0.0
    %878 = vmatpush.msra.mxu0 0.0
    %879 = vmatpush.msra.mxu0 0.0
    %880 = vmatpush.msra.mxu0 0.0
    %881 = vmatpush.msra.mxu0 0.0
    %882 = vmatpush.msra.mxu0 0.0
    %883 = vmatpush.msra.mxu0 0.0
    %884 = vmatpush.msra.mxu0 %v108
    %885 = vmatpush.msra.mxu0 %v107
    %886 = vmatpush.msra.mxu0 %v106
    %887 = vmatpush.msra.mxu0 %v105
    %888 = vmatmul.f32.gmra.mxu0 %v870
    %v889 = vpop.f32.mrf.mxu0
    %v890 = vadd.f32 0.0, %v889
    %891 = vdwg.mxu0
    %v892 = vsub.f32 1.0, %v890
    %v893 = vsel %vm338, %v788, -inf
    %894 = vmax.xlane.f32.xlu0 %v893
    %v895 = vpop.xlane.xlu0 %894
    %v896 = vsub.f32 %v788, %v895
    %v897 = vmul.f32 %v896, 1.442695
    %v898 = vpow.pop %v897
    %v899 = vsel %vm338, %v898, 0.0
    %900 = vadd.xlane.f32.xlu0 %v899
    %v901 = vpop.xlane.xlu0 %900
    %v902 = vrcp.pop %v901
    %v903 = vmul.f32 %v898, %v902
    %v905 = vsel %vm110, %v903, 0
    %907 = vmatpush.msra.mxu0 0.0
    %908 = vmatpush.msra.mxu0 0.0
    %909 = vmatpush.msra.mxu0 0.0
    %910 = vmatpush.msra.mxu0 0.0
    %911 = vmatpush.msra.mxu0 0.0
    %912 = vmatpush.msra.mxu0 0.0
    %913 = vmatpush.msra.mxu0 0.0
    %914 = vmatpush.msra.mxu0 0.0
    %915 = vmatpush.msra.mxu0 0.0
    %916 = vmatpush.msra.mxu0 0.0
    %917 = vmatpush.msra.mxu0 0.0
    %918 = vmatpush.msra.mxu0 0.0
    %919 = vmatpush.msra.mxu0 %v108
    %920 = vmatpush.msra.mxu0 %v107
    %921 = vmatpush.msra.mxu0 %v106
    %922 = vmatpush.msra.mxu0 %v105
    %923 = vmatmul.f32.gmra.mxu0 %v905
    %v924 = vpop.f32.mrf.mxu0
    %v925 = vadd.f32 0.0, %v924
    %926 = vdwg.mxu0
    %v927 = vtanh.pop %v624
    %v928 = vmul.f32 %v925, %v892
    %v929 = vsub.f32 %v925, %v928
    %v930 = vsub.f32 %v892, %v928
    %v931 = vmul.f32 %v856, %v823
    %v932 = vsub.f32 %v856, %v931
    %v933 = vsub.f32 %v823, %v931
    %v934 = vmul.f32 %v931, %v568
    %v935 = vmul.f32 %v928, %v927
    %v936 = vadd.f32 %v934, %v935
    %v937 = vmul.f32 %v932, %v568
    %v938 = vmul.f32 %v929, %v927
    %v939 = vadd.f32 %v937, %v938
    %v940 = vadd.f32 %v939, %v936
    %v941 = vmul.f32 %v933, %v568
    %v942 = vmul.f32 %v930, %v927
    %v943 = vadd.f32 %v941, %v942
    %v944 = vadd.f32 %v943, %v936
    %v946 = vsel %vm110, %v944, 0
    %948 = vmatpush.msra.mxu0 0.0
    %949 = vmatpush.msra.mxu0 0.0
    %950 = vmatpush.msra.mxu0 0.0
    %951 = vmatpush.msra.mxu0 0.0
    %952 = vmatpush.msra.mxu0 0.0
    %953 = vmatpush.msra.mxu0 0.0
    %954 = vmatpush.msra.mxu0 0.0
    %955 = vmatpush.msra.mxu0 0.0
    %956 = vmatpush.msra.mxu0 0.0
    %957 = vmatpush.msra.mxu0 0.0
    %958 = vmatpush.msra.mxu0 0.0
    %959 = vmatpush.msra.mxu0 0.0
    %960 = vmatpush.msra.mxu0 %v83
    %961 = vmatpush.msra.mxu0 %v82
    %962 = vmatpush.msra.mxu0 %v81
    %963 = vmatpush.msra.mxu0 %v80
    %964 = vmatmul.f32.gmra.mxu0 %v946
    %v965 = vpop.f32.mrf.mxu0
    %v966 = vadd.f32 0.0, %v965
    %967 = vdwg.mxu0
    %v969 = vsel %vm110, %v940, 0
    %971 = vmatpush.msra.mxu0 0.0
    %972 = vmatpush.msra.mxu0 0.0
    %973 = vmatpush.msra.mxu0 0.0
    %974 = vmatpush.msra.mxu0 0.0
    %975 = vmatpush.msra.mxu0 0.0
    %976 = vmatpush.msra.mxu0 0.0
    %977 = vmatpush.msra.mxu0 0.0
    %978 = vmatpush.msra.mxu0 0.0
    %979 = vmatpush.msra.mxu0 0.0
    %980 = vmatpush.msra.mxu0 0.0
    %981 = vmatpush.msra.mxu0 0.0
    %982 = vmatpush.msra.mxu0 0.0
    %983 = vmatpush.msra.mxu0 %v78
    %984 = vmatpush.msra.mxu0 %v77
    %985 = vmatpush.msra.mxu0 %v76
    %986 = vmatpush.msra.mxu0 %v75
    %987 = vmatmul.f32.gmra.mxu0 %v969
    %v988 = vpop.f32.mrf.mxu0
    %v989 = vadd.f32 %v966, %v988
    %990 = vdwg.mxu0
    %v992 = vsel %vm110, %v936, 0
    %994 = vmatpush.msra.mxu0 0.0
    %995 = vmatpush.msra.mxu0 0.0
    %996 = vmatpush.msra.mxu0 0.0
    %997 = vmatpush.msra.mxu0 0.0
    %998 = vmatpush.msra.mxu0 0.0
    %999 = vmatpush.msra.mxu0 0.0
    %1000 = vmatpush.msra.mxu0 0.0
    %1001 = vmatpush.msra.mxu0 0.0
    %1002 = vmatpush.msra.mxu0 0.0
    %1003 = vmatpush.msra.mxu0 0.0
    %1004 = vmatpush.msra.mxu0 0.0
    %1005 = vmatpush.msra.mxu0 0.0
    %1006 = vmatpush.msra.mxu0 %v88
    %1007 = vmatpush.msra.mxu0 %v87
    %1008 = vmatpush.msra.mxu0 %v86
    %1009 = vmatpush.msra.mxu0 %v85
    %1010 = vmatmul.f32.gmra.mxu0 %v992
    %v1011 = vpop.f32.mrf.mxu0
    %v1012 = vadd.f32 0.0, %v1011
    %1013 = vdwg.mxu0
    %v1014 = vadd.f32 %v989, %v1012
    %v1015 = vadd.f32 %v1014, %v566
    %v1016 = vtanh.pop %v1015
    %v1017 = vtanh.pop %v944
    %s1018 = scalar_lea.vmem [#allocation2], 2
    %1019 = vst.msk [vmem:[%s1018] sm:$0x3] %vm338, %v1017
    %v1020 = vtanh.pop %v940
    %s1021 = scalar_lea.vmem [#allocation4], 2
    %1022 = vst.msk [vmem:[%s1021] sm:$0x3] %vm338, %v1020
    %v1023 = vtanh.pop %v936
    %s1024 = scalar_lea.vmem [#allocation6], 2
    %1025 = vst.msk [vmem:[%s1024] sm:$0x3] %vm338, %v1023
    %s1026 = scalar_lea.vmem %s0, 4
    %v1027 = vld [vmem:[%s1026] sm:$0x3]
    %v1029 = vsel %vm110, %v1016, 0
    %1031 = vmatpush.msra.mxu0 0.0
    %1032 = vmatpush.msra.mxu0 0.0
    %1033 = vmatpush.msra.mxu0 0.0
    %1034 = vmatpush.msra.mxu0 0.0
    %1035 = vmatpush.msra.mxu0 0.0
    %1036 = vmatpush.msra.mxu0 0.0
    %1037 = vmatpush.msra.mxu0 0.0
    %1038 = vmatpush.msra.mxu0 0.0
    %1039 = vmatpush.msra.mxu0 0.0
    %1040 = vmatpush.msra.mxu0 0.0
    %1041 = vmatpush.msra.mxu0 0.0
    %1042 = vmatpush.msra.mxu0 0.0
    %1043 = vmatpush.msra.mxu0 %v45
    %1044 = vmatpush.msra.mxu0 %v44
    %1045 = vmatpush.msra.mxu0 %v43
    %1046 = vmatpush.msra.mxu0 %v42
    %1047 = vmatmul.f32.gmra.mxu0 %v1029
    %v1048 = vpop.f32.mrf.mxu0
    %v1049 = vadd.f32 0.0, %v1048
    %1050 = vdwg.mxu0
    %v1052 = vsel %vm134, %v1027, 0
    %1054 = vmatpush.msra.mxu0 0.0
    %1055 = vmatpush.msra.mxu0 0.0
    %1056 = vmatpush.msra.mxu0 0.0
    %1057 = vmatpush.msra.mxu0 0.0
    %1058 = vmatpush.msra.mxu0 0.0
    %1059 = vmatpush.msra.mxu0 0.0
    %1060 = vmatpush.msra.mxu0 0.0
    %1061 = vmatpush.msra.mxu0 0.0
    %1062 = vmatpush.msra.mxu0 0.0
    %1063 = vmatpush.msra.mxu0 0.0
    %1064 = vmatpush.msra.mxu0 0.0
    %1065 = vmatpush.msra.mxu0 0.0
    %1066 = vmatpush.msra.mxu0 0.0
    %1067 = vmatpush.msra.mxu0 0.0
    %1068 = vmatpush.msra.mxu0 %v29
    %1069 = vmatpush.msra.mxu0 %v28
    %1070 = vmatmul.f32.gmra.mxu0 %v1052
    %v1071 = vpop.f32.mrf.mxu0
    %v1072 = vadd.f32 %v1049, %v1071
    %1073 = vdwg.mxu0
    %v1074 = vadd.f32 %v1072, %v159
    %1075 = vmatpush.msra.mxu0 0.0
    %1076 = vmatpush.msra.mxu0 0.0
    %1077 = vmatpush.msra.mxu0 0.0
    %1078 = vmatpush.msra.mxu0 0.0
    %1079 = vmatpush.msra.mxu0 0.0
    %1080 = vmatpush.msra.mxu0 0.0
    %1081 = vmatpush.msra.mxu0 0.0
    %1082 = vmatpush.msra.mxu0 0.0
    %1083 = vmatpush.msra.mxu0 0.0
    %1084 = vmatpush.msra.mxu0 0.0
    %1085 = vmatpush.msra.mxu0 0.0
    %1086 = vmatpush.msra.mxu0 0.0
    %1087 = vmatpush.msra.mxu0 %v50
    %1088 = vmatpush.msra.mxu0 %v49
    %1089 = vmatpush.msra.mxu0 %v48
    %1090 = vmatpush.msra.mxu0 %v47
    %1091 = vmatmul.f32.gmra.mxu0 %v1029
    %v1092 = vpop.f32.mrf.mxu0
    %v1093 = vadd.f32 0.0, %v1092
    %1094 = vdwg.mxu0
    %1095 = vmatpush.msra.mxu0 0.0
    %1096 = vmatpush.msra.mxu0 0.0
    %1097 = vmatpush.msra.mxu0 0.0
    %1098 = vmatpush.msra.mxu0 0.0
    %1099 = vmatpush.msra.mxu0 0.0
    %1100 = vmatpush.msra.mxu0 0.0
    %1101 = vmatpush.msra.mxu0 0.0
    %1102 = vmatpush.msra.mxu0 0.0
    %1103 = vmatpush.msra.mxu0 0.0
    %1104 = vmatpush.msra.mxu0 0.0
    %1105 = vmatpush.msra.mxu0 0.0
    %1106 = vmatpush.msra.mxu0 0.0
    %1107 = vmatpush.msra.mxu0 0.0
    %1108 = vmatpush.msra.mxu0 0.0
    %1109 = vmatpush.msra.mxu0 %v32
    %1110 = vmatpush.msra.mxu0 %v31
    %1111 = vmatmul.f32.gmra.mxu0 %v1052
    %v1112 = vpop.f32.mrf.mxu0
    %v1113 = vadd.f32 %v1093, %v1112
    %1114 = vdwg.mxu0
    %v1115 = vadd.f32 %v1113, %v203
    %1116 = vmatpush.msra.mxu0 0.0
    %1117 = vmatpush.msra.mxu0 0.0
    %1118 = vmatpush.msra.mxu0 0.0
    %1119 = vmatpush.msra.mxu0 0.0
    %1120 = vmatpush.msra.mxu0 0.0
    %1121 = vmatpush.msra.mxu0 0.0
    %1122 = vmatpush.msra.mxu0 0.0
    %1123 = vmatpush.msra.mxu0 0.0
    %1124 = vmatpush.msra.mxu0 0.0
    %1125 = vmatpush.msra.mxu0 0.0
    %1126 = vmatpush.msra.mxu0 0.0
    %1127 = vmatpush.msra.mxu0 0.0
    %1128 = vmatpush.msra.mxu0 %v55
    %1129 = vmatpush.msra.mxu0 %v54
    %1130 = vmatpush.msra.mxu0 %v53
    %1131 = vmatpush.msra.mxu0 %v52
    %1132 = vmatmul.f32.gmra.mxu0 %v1029
    %v1133 = vpop.f32.mrf.mxu0
    %v1134 = vadd.f32 0.0, %v1133
    %1135 = vdwg.mxu0
    %1136 = vmatpush.msra.mxu0 0.0
    %1137 = vmatpush.msra.mxu0 0.0
    %1138 = vmatpush.msra.mxu0 0.0
    %1139 = vmatpush.msra.mxu0 0.0
    %1140 = vmatpush.msra.mxu0 0.0
    %1141 = vmatpush.msra.mxu0 0.0
    %1142 = vmatpush.msra.mxu0 0.0
    %1143 = vmatpush.msra.mxu0 0.0
    %1144 = vmatpush.msra.mxu0 0.0
    %1145 = vmatpush.msra.mxu0 0.0
    %1146 = vmatpush.msra.mxu0 0.0
    %1147 = vmatpush.msra.mxu0 0.0
    %1148 = vmatpush.msra.mxu0 0.0
    %1149 = vmatpush.msra.mxu0 0.0
    %1150 = vmatpush.msra.mxu0 %v35
    %1151 = vmatpush.msra.mxu0 %v34
    %1152 = vmatmul.f32.gmra.mxu0 %v1052
    %v1153 = vpop.f32.mrf.mxu0
    %v1154 = vadd.f32 %v1134, %v1153
    %1155 = vdwg.mxu0
    %v1156 = vadd.f32 %v1154, %v247
    %1157 = vmatpush.msra.mxu0 0.0
    %1158 = vmatpush.msra.mxu0 0.0
    %1159 = vmatpush.msra.mxu0 0.0
    %1160 = vmatpush.msra.mxu0 0.0
    %1161 = vmatpush.msra.mxu0 0.0
    %1162 = vmatpush.msra.mxu0 0.0
    %1163 = vmatpush.msra.mxu0 0.0
    %1164 = vmatpush.msra.mxu0 0.0
    %1165 = vmatpush.msra.mxu0 0.0
    %1166 = vmatpush.msra.mxu0 0.0
    %1167 = vmatpush.msra.mxu0 0.0
    %1168 = vmatpush.msra.mxu0 0.0
    %1169 = vmatpush.msra.mxu0 %v60
    %1170 = vmatpush.msra.mxu0 %v59
    %1171 = vmatpush.msra.mxu0 %v58
    %1172 = vmatpush.msra.mxu0 %v57
    %1173 = vmatmul.f32.gmra.mxu0 %v1029
    %v1174 = vpop.f32.mrf.mxu0
    %v1175 = vadd.f32 0.0, %v1174
    %1176 = vdwg.mxu0
    %1177 = vmatpush.msra.mxu0 0.0
    %1178 = vmatpush.msra.mxu0 0.0
    %1179 = vmatpush.msra.mxu0 0.0
    %1180 = vmatpush.msra.mxu0 0.0
    %1181 = vmatpush.msra.mxu0 0.0
    %1182 = vmatpush.msra.mxu0 0.0
    %1183 = vmatpush.msra.mxu0 0.0
    %1184 = vmatpush.msra.mxu0 0.0
    %1185 = vmatpush.msra.mxu0 0.0
    %1186 = vmatpush.msra.mxu0 0.0
    %1187 = vmatpush.msra.mxu0 0.0
    %1188 = vmatpush.msra.mxu0 0.0
    %1189 = vmatpush.msra.mxu0 0.0
    %1190 = vmatpush.msra.mxu0 0.0
    %1191 = vmatpush.msra.mxu0 %v38
    %1192 = vmatpush.msra.mxu0 %v37
    %1193 = vmatmul.f32.gmra.mxu0 %v1052
    %v1194 = vpop.f32.mrf.mxu0
    %v1195 = vadd.f32 %v1175, %v1194
    %1196 = vdwg.mxu0
    %v1197 = vadd.f32 %v1195, %v291
    %1198 = vmatpush.msra.mxu0 0.0
    %1199 = vmatpush.msra.mxu0 0.0
    %1200 = vmatpush.msra.mxu0 0.0
    %1201 = vmatpush.msra.mxu0 0.0
    %1202 = vmatpush.msra.mxu0 0.0
    %1203 = vmatpush.msra.mxu0 0.0
    %1204 = vmatpush.msra.mxu0 0.0
    %1205 = vmatpush.msra.mxu0 0.0
    %1206 = vmatpush.msra.mxu0 0.0
    %1207 = vmatpush.msra.mxu0 0.0
    %1208 = vmatpush.msra.mxu0 0.0
    %1209 = vmatpush.msra.mxu0 0.0
    %1210 = vmatpush.msra.mxu0 %v65
    %1211 = vmatpush.msra.mxu0 %v64
    %1212 = vmatpush.msra.mxu0 %v63
    %1213 = vmatpush.msra.mxu0 %v62
    %1214 = vmatmul.f32.gmra.mxu0 %v1029
    %v1215 = vpop.f32.mrf.mxu0
    %v1216 = vadd.f32 0.0, %v1215
    %1217 = vdwg.mxu0
    %1218 = vmatpush.msra.mxu0 0.0
    %1219 = vmatpush.msra.mxu0 0.0
    %1220 = vmatpush.msra.mxu0 0.0
    %1221 = vmatpush.msra.mxu0 0.0
    %1222 = vmatpush.msra.mxu0 0.0
    %1223 = vmatpush.msra.mxu0 0.0
    %1224 = vmatpush.msra.mxu0 0.0
    %1225 = vmatpush.msra.mxu0 0.0
    %1226 = vmatpush.msra.mxu0 0.0
    %1227 = vmatpush.msra.mxu0 0.0
    %1228 = vmatpush.msra.mxu0 0.0
    %1229 = vmatpush.msra.mxu0 0.0
    %1230 = vmatpush.msra.mxu0 0.0
    %1231 = vmatpush.msra.mxu0 0.0
    %1232 = vmatpush.msra.mxu0 %v41
    %1233 = vmatpush.msra.mxu0 %v40
    %1234 = vmatmul.f32.gmra.mxu0 %v1052
    %v1235 = vpop.f32.mrf.mxu0
    %v1236 = vadd.f32 %v1216, %v1235
    %1237 = vdwg.mxu0
    %v1238 = vadd.f32 %v1236, %v335
    %v1239 = vsel %vm338, %v1115, -inf
    %1240 = vmax.xlane.f32.xlu0 %v1239
    %v1241 = vpop.xlane.xlu0 %1240
    %v1242 = vsub.f32 %v1115, %v1241
    %v1243 = vmul.f32 %v1242, 1.442695
    %v1244 = vpow.pop %v1243
    %v1245 = vsel %vm338, %v1244, 0.0
    %1246 = vadd.xlane.f32.xlu0 %v1245
    %v1247 = vpop.xlane.xlu0 %1246
    %v1248 = vrcp.pop %v1247
    %v1249 = vmul.f32 %v1244, %v1248
    %v1251 = vsel %vm110, %v1249, 0
    %1253 = vmatpush.msra.mxu0 0.0
    %1254 = vmatpush.msra.mxu0 0.0
    %1255 = vmatpush.msra.mxu0 0.0
    %1256 = vmatpush.msra.mxu0 0.0
    %1257 = vmatpush.msra.mxu0 0.0
    %1258 = vmatpush.msra.mxu0 0.0
    %1259 = vmatpush.msra.mxu0 0.0
    %1260 = vmatpush.msra.mxu0 0.0
    %1261 = vmatpush.msra.mxu0 0.0
    %1262 = vmatpush.msra.mxu0 0.0
    %1263 = vmatpush.msra.mxu0 0.0
    %1264 = vmatpush.msra.mxu0 0.0
    %1265 = vmatpush.msra.mxu0 %v108
    %1266 = vmatpush.msra.mxu0 %v107
    %1267 = vmatpush.msra.mxu0 %v106
    %1268 = vmatpush.msra.mxu0 %v105
    %1269 = vmatmul.f32.gmra.mxu0 %v1251
    %v1270 = vpop.f32.mrf.mxu0
    %v1271 = vadd.f32 0.0, %v1270
    %1272 = vdwg.mxu0
    %v1273 = vsub.f32 1.0, %v1271
    %v1274 = vsel %vm338, %v1156, -inf
    %1275 = vmax.xlane.f32.xlu0 %v1274
    %v1276 = vpop.xlane.xlu0 %1275
    %v1277 = vsub.f32 %v1156, %v1276
    %v1278 = vmul.f32 %v1277, 1.442695
    %v1279 = vpow.pop %v1278
    %v1280 = vsel %vm338, %v1279, 0.0
    %1281 = vadd.xlane.f32.xlu0 %v1280
    %v1282 = vpop.xlane.xlu0 %1281
    %v1283 = vrcp.pop %v1282
    %v1284 = vmul.f32 %v1279, %v1283
    %v1286 = vsel %vm110, %v1284, 0
    %1288 = vmatpush.msra.mxu0 0.0
    %1289 = vmatpush.msra.mxu0 0.0
    %1290 = vmatpush.msra.mxu0 0.0
    %1291 = vmatpush.msra.mxu0 0.0
    %1292 = vmatpush.msra.mxu0 0.0
    %1293 = vmatpush.msra.mxu0 0.0
    %1294 = vmatpush.msra.mxu0 0.0
    %1295 = vmatpush.msra.mxu0 0.0
    %1296 = vmatpush.msra.mxu0 0.0
    %1297 = vmatpush.msra.mxu0 0.0
    %1298 = vmatpush.msra.mxu0 0.0
    %1299 = vmatpush.msra.mxu0 0.0
    %1300 = vmatpush.msra.mxu0 %v108
    %1301 = vmatpush.msra.mxu0 %v107
    %1302 = vmatpush.msra.mxu0 %v106
    %1303 = vmatpush.msra.mxu0 %v105
    %1304 = vmatmul.f32.gmra.mxu0 %v1286
    %v1305 = vpop.f32.mrf.mxu0
    %v1306 = vadd.f32 0.0, %v1305
    %1307 = vdwg.mxu0
    %v1308 = vsel %vm338, %v1197, -inf
    %1309 = vmax.xlane.f32.xlu0 %v1308
    %v1310 = vpop.xlane.xlu0 %1309
    %v1311 = vsub.f32 %v1197, %v1310
    %v1312 = vmul.f32 %v1311, 1.442695
    %v1313 = vpow.pop %v1312
    %v1314 = vsel %vm338, %v1313, 0.0
    %1315 = vadd.xlane.f32.xlu0 %v1314
    %v1316 = vpop.xlane.xlu0 %1315
    %v1317 = vrcp.pop %v1316
    %v1318 = vmul.f32 %v1313, %v1317
    %v1320 = vsel %vm110, %v1318, 0
    %1322 = vmatpush.msra.mxu0 0.0
    %1323 = vmatpush.msra.mxu0 0.0
    %1324 = vmatpush.msra.mxu0 0.0
    %1325 = vmatpush.msra.mxu0 0.0
    %1326 = vmatpush.msra.mxu0 0.0
    %1327 = vmatpush.msra.mxu0 0.0
    %1328 = vmatpush.msra.mxu0 0.0
    %1329 = vmatpush.msra.mxu0 0.0
    %1330 = vmatpush.msra.mxu0 0.0
    %1331 = vmatpush.msra.mxu0 0.0
    %1332 = vmatpush.msra.mxu0 0.0
    %1333 = vmatpush.msra.mxu0 0.0
    %1334 = vmatpush.msra.mxu0 %v108
    %1335 = vmatpush.msra.mxu0 %v107
    %1336 = vmatpush.msra.mxu0 %v106
    %1337 = vmatpush.msra.mxu0 %v105
    %1338 = vmatmul.f32.gmra.mxu0 %v1320
    %v1339 = vpop.f32.mrf.mxu0
    %v1340 = vadd.f32 0.0, %v1339
    %1341 = vdwg.mxu0
    %v1342 = vsub.f32 1.0, %v1340
    %v1343 = vsel %vm338, %v1238, -inf
    %1344 = vmax.xlane.f32.xlu0 %v1343
    %v1345 = vpop.xlane.xlu0 %1344
    %v1346 = vsub.f32 %v1238, %v1345
    %v1347 = vmul.f32 %v1346, 1.442695
    %v1348 = vpow.pop %v1347
    %v1349 = vsel %vm338, %v1348, 0.0
    %1350 = vadd.xlane.f32.xlu0 %v1349
    %v1351 = vpop.xlane.xlu0 %1350
    %v1352 = vrcp.pop %v1351
    %v1353 = vmul.f32 %v1348, %v1352
    %v1355 = vsel %vm110, %v1353, 0
    %1357 = vmatpush.msra.mxu0 0.0
    %1358 = vmatpush.msra.mxu0 0.0
    %1359 = vmatpush.msra.mxu0 0.0
    %1360 = vmatpush.msra.mxu0 0.0
    %1361 = vmatpush.msra.mxu0 0.0
    %1362 = vmatpush.msra.mxu0 0.0
    %1363 = vmatpush.msra.mxu0 0.0
    %1364 = vmatpush.msra.mxu0 0.0
    %1365 = vmatpush.msra.mxu0 0.0
    %1366 = vmatpush.msra.mxu0 0.0
    %1367 = vmatpush.msra.mxu0 0.0
    %1368 = vmatpush.msra.mxu0 0.0
    %1369 = vmatpush.msra.mxu0 %v108
    %1370 = vmatpush.msra.mxu0 %v107
    %1371 = vmatpush.msra.mxu0 %v106
    %1372 = vmatpush.msra.mxu0 %v105
    %1373 = vmatmul.f32.gmra.mxu0 %v1355
    %v1374 = vpop.f32.mrf.mxu0
    %v1375 = vadd.f32 0.0, %v1374
    %1376 = vdwg.mxu0
    %v1377 = vtanh.pop %v1074
    %v1378 = vmul.f32 %v1375, %v1342
    %v1379 = vsub.f32 %v1375, %v1378
    %v1380 = vsub.f32 %v1342, %v1378
    %v1381 = vmul.f32 %v1306, %v1273
    %v1382 = vsub.f32 %v1306, %v1381
    %v1383 = vsub.f32 %v1273, %v1381
    %v1384 = vmul.f32 %v1381, %v1015
    %v1385 = vmul.f32 %v1378, %v1377
    %v1386 = vadd.f32 %v1384, %v1385
    %v1387 = vmul.f32 %v1382, %v1015
    %v1388 = vmul.f32 %v1379, %v1377
    %v1389 = vadd.f32 %v1387, %v1388
    %v1390 = vadd.f32 %v1389, %v1386
    %v1391 = vmul.f32 %v1383, %v1015
    %v1392 = vmul.f32 %v1380, %v1377
    %v1393 = vadd.f32 %v1391, %v1392
    %v1394 = vadd.f32 %v1393, %v1386
    %v1396 = vsel %vm110, %v1394, 0
    %1398 = vmatpush.msra.mxu0 0.0
    %1399 = vmatpush.msra.mxu0 0.0
    %1400 = vmatpush.msra.mxu0 0.0
    %1401 = vmatpush.msra.mxu0 0.0
    %1402 = vmatpush.msra.mxu0 0.0
    %1403 = vmatpush.msra.mxu0 0.0
    %1404 = vmatpush.msra.mxu0 0.0
    %1405 = vmatpush.msra.mxu0 0.0
    %1406 = vmatpush.msra.mxu0 0.0
    %1407 = vmatpush.msra.mxu0 0.0
    %1408 = vmatpush.msra.mxu0 0.0
    %1409 = vmatpush.msra.mxu0 0.0
    %1410 = vmatpush.msra.mxu0 %v83
    %1411 = vmatpush.msra.mxu0 %v82
    %1412 = vmatpush.msra.mxu0 %v81
    %1413 = vmatpush.msra.mxu0 %v80
    %1414 = vmatmul.f32.gmra.mxu0 %v1396
    %v1415 = vpop.f32.mrf.mxu0
    %v1416 = vadd.f32 0.0, %v1415
    %1417 = vdwg.mxu0
    %v1419 = vsel %vm110, %v1390, 0
    %1421 = vmatpush.msra.mxu0 0.0
    %1422 = vmatpush.msra.mxu0 0.0
    %1423 = vmatpush.msra.mxu0 0.0
    %1424 = vmatpush.msra.mxu0 0.0
    %1425 = vmatpush.msra.mxu0 0.0
    %1426 = vmatpush.msra.mxu0 0.0
    %1427 = vmatpush.msra.mxu0 0.0
    %1428 = vmatpush.msra.mxu0 0.0
    %1429 = vmatpush.msra.mxu0 0.0
    %1430 = vmatpush.msra.mxu0 0.0
    %1431 = vmatpush.msra.mxu0 0.0
    %1432 = vmatpush.msra.mxu0 0.0
    %1433 = vmatpush.msra.mxu0 %v78
    %1434 = vmatpush.msra.mxu0 %v77
    %1435 = vmatpush.msra.mxu0 %v76
    %1436 = vmatpush.msra.mxu0 %v75
    %1437 = vmatmul.f32.gmra.mxu0 %v1419
    %v1438 = vpop.f32.mrf.mxu0
    %v1439 = vadd.f32 %v1416, %v1438
    %1440 = vdwg.mxu0
    %v1442 = vsel %vm110, %v1386, 0
    %1444 = vmatpush.msra.mxu0 0.0
    %1445 = vmatpush.msra.mxu0 0.0
    %1446 = vmatpush.msra.mxu0 0.0
    %1447 = vmatpush.msra.mxu0 0.0
    %1448 = vmatpush.msra.mxu0 0.0
    %1449 = vmatpush.msra.mxu0 0.0
    %1450 = vmatpush.msra.mxu0 0.0
    %1451 = vmatpush.msra.mxu0 0.0
    %1452 = vmatpush.msra.mxu0 0.0
    %1453 = vmatpush.msra.mxu0 0.0
    %1454 = vmatpush.msra.mxu0 0.0
    %1455 = vmatpush.msra.mxu0 0.0
    %1456 = vmatpush.msra.mxu0 %v88
    %1457 = vmatpush.msra.mxu0 %v87
    %1458 = vmatpush.msra.mxu0 %v86
    %1459 = vmatpush.msra.mxu0 %v85
    %1460 = vmatmul.f32.gmra.mxu0 %v1442
    %v1461 = vpop.f32.mrf.mxu0
    %v1462 = vadd.f32 0.0, %v1461
    %1463 = vdwg.mxu0
    %v1464 = vadd.f32 %v1439, %v1462
    %v1465 = vadd.f32 %v1464, %v566
    %v1466 = vtanh.pop %v1465
    %v1467 = vtanh.pop %v1394
    %s1468 = scalar_lea.vmem [#allocation2], 4
    %1469 = vst.msk [vmem:[%s1468] sm:$0x3] %vm338, %v1467
    %v1470 = vtanh.pop %v1390
    %s1471 = scalar_lea.vmem [#allocation4], 4
    %1472 = vst.msk [vmem:[%s1471] sm:$0x3] %vm338, %v1470
    %v1473 = vtanh.pop %v1386
    %s1474 = scalar_lea.vmem [#allocation6], 4
    %1475 = vst.msk [vmem:[%s1474] sm:$0x3] %vm338, %v1473
    %s1476 = scalar_lea.vmem %s0, 6
    %v1477 = vld [vmem:[%s1476] sm:$0x3]
    %v1479 = vsel %vm110, %v1466, 0
    %1481 = vmatpush.msra.mxu0 0.0
    %1482 = vmatpush.msra.mxu0 0.0
    %1483 = vmatpush.msra.mxu0 0.0
    %1484 = vmatpush.msra.mxu0 0.0
    %1485 = vmatpush.msra.mxu0 0.0
    %1486 = vmatpush.msra.mxu0 0.0
    %1487 = vmatpush.msra.mxu0 0.0
    %1488 = vmatpush.msra.mxu0 0.0
    %1489 = vmatpush.msra.mxu0 0.0
    %1490 = vmatpush.msra.mxu0 0.0
    %1491 = vmatpush.msra.mxu0 0.0
    %1492 = vmatpush.msra.mxu0 0.0
    %1493 = vmatpush.msra.mxu0 %v45
    %1494 = vmatpush.msra.mxu0 %v44
    %1495 = vmatpush.msra.mxu0 %v43
    %1496 = vmatpush.msra.mxu0 %v42
    %1497 = vmatmul.f32.gmra.mxu0 %v1479
    %v1498 = vpop.f32.mrf.mxu0
    %v1499 = vadd.f32 0.0, %v1498
    %1500 = vdwg.mxu0
    %v1502 = vsel %vm134, %v1477, 0
    %1504 = vmatpush.msra.mxu0 0.0
    %1505 = vmatpush.msra.mxu0 0.0
    %1506 = vmatpush.msra.mxu0 0.0
    %1507 = vmatpush.msra.mxu0 0.0
    %1508 = vmatpush.msra.mxu0 0.0
    %1509 = vmatpush.msra.mxu0 0.0
    %1510 = vmatpush.msra.mxu0 0.0
    %1511 = vmatpush.msra.mxu0 0.0
    %1512 = vmatpush.msra.mxu0 0.0
    %1513 = vmatpush.msra.mxu0 0.0
    %1514 = vmatpush.msra.mxu0 0.0
    %1515 = vmatpush.msra.mxu0 0.0
    %1516 = vmatpush.msra.mxu0 0.0
    %1517 = vmatpush.msra.mxu0 0.0
    %1518 = vmatpush.msra.mxu0 %v29
    %1519 = vmatpush.msra.mxu0 %v28
    %1520 = vmatmul.f32.gmra.mxu0 %v1502
    %v1521 = vpop.f32.mrf.mxu0
    %v1522 = vadd.f32 %v1499, %v1521
    %1523 = vdwg.mxu0
    %v1524 = vadd.f32 %v1522, %v159
    %1525 = vmatpush.msra.mxu0 0.0
    %1526 = vmatpush.msra.mxu0 0.0
    %1527 = vmatpush.msra.mxu0 0.0
    %1528 = vmatpush.msra.mxu0 0.0
    %1529 = vmatpush.msra.mxu0 0.0
    %1530 = vmatpush.msra.mxu0 0.0
    %1531 = vmatpush.msra.mxu0 0.0
    %1532 = vmatpush.msra.mxu0 0.0
    %1533 = vmatpush.msra.mxu0 0.0
    %1534 = vmatpush.msra.mxu0 0.0
    %1535 = vmatpush.msra.mxu0 0.0
    %1536 = vmatpush.msra.mxu0 0.0
    %1537 = vmatpush.msra.mxu0 %v50
    %1538 = vmatpush.msra.mxu0 %v49
    %1539 = vmatpush.msra.mxu0 %v48
    %1540 = vmatpush.msra.mxu0 %v47
    %1541 = vmatmul.f32.gmra.mxu0 %v1479
    %v1542 = vpop.f32.mrf.mxu0
    %v1543 = vadd.f32 0.0, %v1542
    %1544 = vdwg.mxu0
    %1545 = vmatpush.msra.mxu0 0.0
    %1546 = vmatpush.msra.mxu0 0.0
    %1547 = vmatpush.msra.mxu0 0.0
    %1548 = vmatpush.msra.mxu0 0.0
    %1549 = vmatpush.msra.mxu0 0.0
    %1550 = vmatpush.msra.mxu0 0.0
    %1551 = vmatpush.msra.mxu0 0.0
    %1552 = vmatpush.msra.mxu0 0.0
    %1553 = vmatpush.msra.mxu0 0.0
    %1554 = vmatpush.msra.mxu0 0.0
    %1555 = vmatpush.msra.mxu0 0.0
    %1556 = vmatpush.msra.mxu0 0.0
    %1557 = vmatpush.msra.mxu0 0.0
    %1558 = vmatpush.msra.mxu0 0.0
    %1559 = vmatpush.msra.mxu0 %v32
    %1560 = vmatpush.msra.mxu0 %v31
    %1561 = vmatmul.f32.gmra.mxu0 %v1502
    %v1562 = vpop.f32.mrf.mxu0
    %v1563 = vadd.f32 %v1543, %v1562
    %1564 = vdwg.mxu0
    %v1565 = vadd.f32 %v1563, %v203
    %1566 = vmatpush.msra.mxu0 0.0
    %1567 = vmatpush.msra.mxu0 0.0
    %1568 = vmatpush.msra.mxu0 0.0
    %1569 = vmatpush.msra.mxu0 0.0
    %1570 = vmatpush.msra.mxu0 0.0
    %1571 = vmatpush.msra.mxu0 0.0
    %1572 = vmatpush.msra.mxu0 0.0
    %1573 = vmatpush.msra.mxu0 0.0
    %1574 = vmatpush.msra.mxu0 0.0
    %1575 = vmatpush.msra.mxu0 0.0
    %1576 = vmatpush.msra.mxu0 0.0
    %1577 = vmatpush.msra.mxu0 0.0
    %1578 = vmatpush.msra.mxu0 %v55
    %1579 = vmatpush.msra.mxu0 %v54
    %1580 = vmatpush.msra.mxu0 %v53
    %1581 = vmatpush.msra.mxu0 %v52
    %1582 = vmatmul.f32.gmra.mxu0 %v1479
    %v1583 = vpop.f32.mrf.mxu0
    %v1584 = vadd.f32 0.0, %v1583
    %1585 = vdwg.mxu0
    %1586 = vmatpush.msra.mxu0 0.0
    %1587 = vmatpush.msra.mxu0 0.0
    %1588 = vmatpush.msra.mxu0 0.0
    %1589 = vmatpush.msra.mxu0 0.0
    %1590 = vmatpush.msra.mxu0 0.0
    %1591 = vmatpush.msra.mxu0 0.0
    %1592 = vmatpush.msra.mxu0 0.0
    %1593 = vmatpush.msra.mxu0 0.0
    %1594 = vmatpush.msra.mxu0 0.0
    %1595 = vmatpush.msra.mxu0 0.0
    %1596 = vmatpush.msra.mxu0 0.0
    %1597 = vmatpush.msra.mxu0 0.0
    %1598 = vmatpush.msra.mxu0 0.0
    %1599 = vmatpush.msra.mxu0 0.0
    %1600 = vmatpush.msra.mxu0 %v35
    %1601 = vmatpush.msra.mxu0 %v34
    %1602 = vmatmul.f32.gmra.mxu0 %v1502
    %v1603 = vpop.f32.mrf.mxu0
    %v1604 = vadd.f32 %v1584, %v1603
    %1605 = vdwg.mxu0
    %v1606 = vadd.f32 %v1604, %v247
    %1607 = vmatpush.msra.mxu0 0.0
    %1608 = vmatpush.msra.mxu0 0.0
    %1609 = vmatpush.msra.mxu0 0.0
    %1610 = vmatpush.msra.mxu0 0.0
    %1611 = vmatpush.msra.mxu0 0.0
    %1612 = vmatpush.msra.mxu0 0.0
    %1613 = vmatpush.msra.mxu0 0.0
    %1614 = vmatpush.msra.mxu0 0.0
    %1615 = vmatpush.msra.mxu0 0.0
    %1616 = vmatpush.msra.mxu0 0.0
    %1617 = vmatpush.msra.mxu0 0.0
    %1618 = vmatpush.msra.mxu0 0.0
    %1619 = vmatpush.msra.mxu0 %v60
    %1620 = vmatpush.msra.mxu0 %v59
    %1621 = vmatpush.msra.mxu0 %v58
    %1622 = vmatpush.msra.mxu0 %v57
    %1623 = vmatmul.f32.gmra.mxu0 %v1479
    %v1624 = vpop.f32.mrf.mxu0
    %v1625 = vadd.f32 0.0, %v1624
    %1626 = vdwg.mxu0
    %1627 = vmatpush.msra.mxu0 0.0
    %1628 = vmatpush.msra.mxu0 0.0
    %1629 = vmatpush.msra.mxu0 0.0
    %1630 = vmatpush.msra.mxu0 0.0
    %1631 = vmatpush.msra.mxu0 0.0
    %1632 = vmatpush.msra.mxu0 0.0
    %1633 = vmatpush.msra.mxu0 0.0
    %1634 = vmatpush.msra.mxu0 0.0
    %1635 = vmatpush.msra.mxu0 0.0
    %1636 = vmatpush.msra.mxu0 0.0
    %1637 = vmatpush.msra.mxu0 0.0
    %1638 = vmatpush.msra.mxu0 0.0
    %1639 = vmatpush.msra.mxu0 0.0
    %1640 = vmatpush.msra.mxu0 0.0
    %1641 = vmatpush.msra.mxu0 %v38
    %1642 = vmatpush.msra.mxu0 %v37
    %1643 = vmatmul.f32.gmra.mxu0 %v1502
    %v1644 = vpop.f32.mrf.mxu0
    %v1645 = vadd.f32 %v1625, %v1644
    %1646 = vdwg.mxu0
    %v1647 = vadd.f32 %v1645, %v291
    %1648 = vmatpush.msra.mxu0 0.0
    %1649 = vmatpush.msra.mxu0 0.0
    %1650 = vmatpush.msra.mxu0 0.0
    %1651 = vmatpush.msra.mxu0 0.0
    %1652 = vmatpush.msra.mxu0 0.0
    %1653 = vmatpush.msra.mxu0 0.0
    %1654 = vmatpush.msra.mxu0 0.0
    %1655 = vmatpush.msra.mxu0 0.0
    %1656 = vmatpush.msra.mxu0 0.0
    %1657 = vmatpush.msra.mxu0 0.0
    %1658 = vmatpush.msra.mxu0 0.0
    %1659 = vmatpush.msra.mxu0 0.0
    %1660 = vmatpush.msra.mxu0 %v65
    %1661 = vmatpush.msra.mxu0 %v64
    %1662 = vmatpush.msra.mxu0 %v63
    %1663 = vmatpush.msra.mxu0 %v62
    %1664 = vmatmul.f32.gmra.mxu0 %v1479
    %v1665 = vpop.f32.mrf.mxu0
    %v1666 = vadd.f32 0.0, %v1665
    %1667 = vdwg.mxu0
    %1668 = vmatpush.msra.mxu0 0.0
    %1669 = vmatpush.msra.mxu0 0.0
    %1670 = vmatpush.msra.mxu0 0.0
    %1671 = vmatpush.msra.mxu0 0.0
    %1672 = vmatpush.msra.mxu0 0.0
    %1673 = vmatpush.msra.mxu0 0.0
    %1674 = vmatpush.msra.mxu0 0.0
    %1675 = vmatpush.msra.mxu0 0.0
    %1676 = vmatpush.msra.mxu0 0.0
    %1677 = vmatpush.msra.mxu0 0.0
    %1678 = vmatpush.msra.mxu0 0.0
    %1679 = vmatpush.msra.mxu0 0.0
    %1680 = vmatpush.msra.mxu0 0.0
    %1681 = vmatpush.msra.mxu0 0.0
    %1682 = vmatpush.msra.mxu0 %v41
    %1683 = vmatpush.msra.mxu0 %v40
    %1684 = vmatmul.f32.gmra.mxu0 %v1502
    %v1685 = vpop.f32.mrf.mxu0
    %v1686 = vadd.f32 %v1666, %v1685
    %1687 = vdwg.mxu0
    %v1688 = vadd.f32 %v1686, %v335
    %v1689 = vsel %vm338, %v1565, -inf
    %1690 = vmax.xlane.f32.xlu0 %v1689
    %v1691 = vpop.xlane.xlu0 %1690
    %v1692 = vsub.f32 %v1565, %v1691
    %v1693 = vmul.f32 %v1692, 1.442695
    %v1694 = vpow.pop %v1693
    %v1695 = vsel %vm338, %v1694, 0.0
    %1696 = vadd.xlane.f32.xlu0 %v1695
    %v1697 = vpop.xlane.xlu0 %1696
    %v1698 = vrcp.pop %v1697
    %v1699 = vmul.f32 %v1694, %v1698
    %v1701 = vsel %vm110, %v1699, 0
    %1703 = vmatpush.msra.mxu0 0.0
    %1704 = vmatpush.msra.mxu0 0.0
    %1705 = vmatpush.msra.mxu0 0.0
    %1706 = vmatpush.msra.mxu0 0.0
    %1707 = vmatpush.msra.mxu0 0.0
    %1708 = vmatpush.msra.mxu0 0.0
    %1709 = vmatpush.msra.mxu0 0.0
    %1710 = vmatpush.msra.mxu0 0.0
    %1711 = vmatpush.msra.mxu0 0.0
    %1712 = vmatpush.msra.mxu0 0.0
    %1713 = vmatpush.msra.mxu0 0.0
    %1714 = vmatpush.msra.mxu0 0.0
    %1715 = vmatpush.msra.mxu0 %v108
    %1716 = vmatpush.msra.mxu0 %v107
    %1717 = vmatpush.msra.mxu0 %v106
    %1718 = vmatpush.msra.mxu0 %v105
    %1719 = vmatmul.f32.gmra.mxu0 %v1701
    %v1720 = vpop.f32.mrf.mxu0
    %v1721 = vadd.f32 0.0, %v1720
    %1722 = vdwg.mxu0
    %v1723 = vsub.f32 1.0, %v1721
    %v1724 = vsel %vm338, %v1606, -inf
    %1725 = vmax.xlane.f32.xlu0 %v1724
    %v1726 = vpop.xlane.xlu0 %1725
    %v1727 = vsub.f32 %v1606, %v1726
    %v1728 = vmul.f32 %v1727, 1.442695
    %v1729 = vpow.pop %v1728
    %v1730 = vsel %vm338, %v1729, 0.0
    %1731 = vadd.xlane.f32.xlu0 %v1730
    %v1732 = vpop.xlane.xlu0 %1731
    %v1733 = vrcp.pop %v1732
    %v1734 = vmul.f32 %v1729, %v1733
    %v1736 = vsel %vm110, %v1734, 0
    %1738 = vmatpush.msra.mxu0 0.0
    %1739 = vmatpush.msra.mxu0 0.0
    %1740 = vmatpush.msra.mxu0 0.0
    %1741 = vmatpush.msra.mxu0 0.0
    %1742 = vmatpush.msra.mxu0 0.0
    %1743 = vmatpush.msra.mxu0 0.0
    %1744 = vmatpush.msra.mxu0 0.0
    %1745 = vmatpush.msra.mxu0 0.0
    %1746 = vmatpush.msra.mxu0 0.0
    %1747 = vmatpush.msra.mxu0 0.0
    %1748 = vmatpush.msra.mxu0 0.0
    %1749 = vmatpush.msra.mxu0 0.0
    %1750 = vmatpush.msra.mxu0 %v108
    %1751 = vmatpush.msra.mxu0 %v107
    %1752 = vmatpush.msra.mxu0 %v106
    %1753 = vmatpush.msra.mxu0 %v105
    %1754 = vmatmul.f32.gmra.mxu0 %v1736
    %v1755 = vpop.f32.mrf.mxu0
    %v1756 = vadd.f32 0.0, %v1755
    %1757 = vdwg.mxu0
    %v1758 = vsel %vm338, %v1647, -inf
    %1759 = vmax.xlane.f32.xlu0 %v1758
    %v1760 = vpop.xlane.xlu0 %1759
    %v1761 = vsub.f32 %v1647, %v1760
    %v1762 = vmul.f32 %v1761, 1.442695
    %v1763 = vpow.pop %v1762
    %v1764 = vsel %vm338, %v1763, 0.0
    %1765 = vadd.xlane.f32.xlu0 %v1764
    %v1766 = vpop.xlane.xlu0 %1765
    %v1767 = vrcp.pop %v1766
    %v1768 = vmul.f32 %v1763, %v1767
    %v1770 = vsel %vm110, %v1768, 0
    %1772 = vmatpush.msra.mxu0 0.0
    %1773 = vmatpush.msra.mxu0 0.0
    %1774 = vmatpush.msra.mxu0 0.0
    %1775 = vmatpush.msra.mxu0 0.0
    %1776 = vmatpush.msra.mxu0 0.0
    %1777 = vmatpush.msra.mxu0 0.0
    %1778 = vmatpush.msra.mxu0 0.0
    %1779 = vmatpush.msra.mxu0 0.0
    %1780 = vmatpush.msra.mxu0 0.0
    %1781 = vmatpush.msra.mxu0 0.0
    %1782 = vmatpush.msra.mxu0 0.0
    %1783 = vmatpush.msra.mxu0 0.0
    %1784 = vmatpush.msra.mxu0 %v108
    %1785 = vmatpush.msra.mxu0 %v107
    %1786 = vmatpush.msra.mxu0 %v106
    %1787 = vmatpush.msra.mxu0 %v105
    %1788 = vmatmul.f32.gmra.mxu0 %v1770
    %v1789 = vpop.f32.mrf.mxu0
    %v1790 = vadd.f32 0.0, %v1789
    %1791 = vdwg.mxu0
    %v1792 = vsub.f32 1.0, %v1790
    %v1793 = vsel %vm338, %v1688, -inf
    %1794 = vmax.xlane.f32.xlu0 %v1793
    %v1795 = vpop.xlane.xlu0 %1794
    %v1796 = vsub.f32 %v1688, %v1795
    %v1797 = vmul.f32 %v1796, 1.442695
    %v1798 = vpow.pop %v1797
    %v1799 = vsel %vm338, %v1798, 0.0
    %1800 = vadd.xlane.f32.xlu0 %v1799
    %v1801 = vpop.xlane.xlu0 %1800
    %v1802 = vrcp.pop %v1801
    %v1803 = vmul.f32 %v1798, %v1802
    %v1805 = vsel %vm110, %v1803, 0
    %1807 = vmatpush.msra.mxu0 0.0
    %1808 = vmatpush.msra.mxu0 0.0
    %1809 = vmatpush.msra.mxu0 0.0
    %1810 = vmatpush.msra.mxu0 0.0
    %1811 = vmatpush.msra.mxu0 0.0
    %1812 = vmatpush.msra.mxu0 0.0
    %1813 = vmatpush.msra.mxu0 0.0
    %1814 = vmatpush.msra.mxu0 0.0
    %1815 = vmatpush.msra.mxu0 0.0
    %1816 = vmatpush.msra.mxu0 0.0
    %1817 = vmatpush.msra.mxu0 0.0
    %1818 = vmatpush.msra.mxu0 0.0
    %1819 = vmatpush.msra.mxu0 %v108
    %1820 = vmatpush.msra.mxu0 %v107
    %1821 = vmatpush.msra.mxu0 %v106
    %1822 = vmatpush.msra.mxu0 %v105
    %1823 = vmatmul.f32.gmra.mxu0 %v1805
    %v1824 = vpop.f32.mrf.mxu0
    %v1825 = vadd.f32 0.0, %v1824
    %1826 = vdwg.mxu0
    %v1827 = vtanh.pop %v1524
    %v1828 = vmul.f32 %v1825, %v1792
    %v1829 = vsub.f32 %v1825, %v1828
    %v1830 = vsub.f32 %v1792, %v1828
    %v1831 = vmul.f32 %v1756, %v1723
    %v1832 = vsub.f32 %v1756, %v1831
    %v1833 = vsub.f32 %v1723, %v1831
    %v1834 = vmul.f32 %v1831, %v1465
    %v1835 = vmul.f32 %v1828, %v1827
    %v1836 = vadd.f32 %v1834, %v1835
    %v1837 = vmul.f32 %v1832, %v1465
    %v1838 = vmul.f32 %v1829, %v1827
    %v1839 = vadd.f32 %v1837, %v1838
    %v1840 = vadd.f32 %v1839, %v1836
    %v1841 = vmul.f32 %v1833, %v1465
    %v1842 = vmul.f32 %v1830, %v1827
    %v1843 = vadd.f32 %v1841, %v1842
    %v1844 = vadd.f32 %v1843, %v1836
    %v1846 = vsel %vm110, %v1844, 0
    %1848 = vmatpush.msra.mxu0 0.0
    %1849 = vmatpush.msra.mxu0 0.0
    %1850 = vmatpush.msra.mxu0 0.0
    %1851 = vmatpush.msra.mxu0 0.0
    %1852 = vmatpush.msra.mxu0 0.0
    %1853 = vmatpush.msra.mxu0 0.0
    %1854 = vmatpush.msra.mxu0 0.0
    %1855 = vmatpush.msra.mxu0 0.0
    %1856 = vmatpush.msra.mxu0 0.0
    %1857 = vmatpush.msra.mxu0 0.0
    %1858 = vmatpush.msra.mxu0 0.0
    %1859 = vmatpush.msra.mxu0 0.0
    %1860 = vmatpush.msra.mxu0 %v83
    %1861 = vmatpush.msra.mxu0 %v82
    %1862 = vmatpush.msra.mxu0 %v81
    %1863 = vmatpush.msra.mxu0 %v80
    %1864 = vmatmul.f32.gmra.mxu0 %v1846
    %v1865 = vpop.f32.mrf.mxu0
    %v1866 = vadd.f32 0.0, %v1865
    %1867 = vdwg.mxu0
    %v1869 = vsel %vm110, %v1840, 0
    %1871 = vmatpush.msra.mxu0 0.0
    %1872 = vmatpush.msra.mxu0 0.0
    %1873 = vmatpush.msra.mxu0 0.0
    %1874 = vmatpush.msra.mxu0 0.0
    %1875 = vmatpush.msra.mxu0 0.0
    %1876 = vmatpush.msra.mxu0 0.0
    %1877 = vmatpush.msra.mxu0 0.0
    %1878 = vmatpush.msra.mxu0 0.0
    %1879 = vmatpush.msra.mxu0 0.0
    %1880 = vmatpush.msra.mxu0 0.0
    %1881 = vmatpush.msra.mxu0 0.0
    %1882 = vmatpush.msra.mxu0 0.0
    %1883 = vmatpush.msra.mxu0 %v78
    %1884 = vmatpush.msra.mxu0 %v77
    %1885 = vmatpush.msra.mxu0 %v76
    %1886 = vmatpush.msra.mxu0 %v75
    %1887 = vmatmul.f32.gmra.mxu0 %v1869
    %v1888 = vpop.f32.mrf.mxu0
    %v1889 = vadd.f32 %v1866, %v1888
    %1890 = vdwg.mxu0
    %v1892 = vsel %vm110, %v1836, 0
    %1894 = vmatpush.msra.mxu0 0.0
    %1895 = vmatpush.msra.mxu0 0.0
    %1896 = vmatpush.msra.mxu0 0.0
    %1897 = vmatpush.msra.mxu0 0.0
    %1898 = vmatpush.msra.mxu0 0.0
    %1899 = vmatpush.msra.mxu0 0.0
    %1900 = vmatpush.msra.mxu0 0.0
    %1901 = vmatpush.msra.mxu0 0.0
    %1902 = vmatpush.msra.mxu0 0.0
    %1903 = vmatpush.msra.mxu0 0.0
    %1904 = vmatpush.msra.mxu0 0.0
    %1905 = vmatpush.msra.mxu0 0.0
    %1906 = vmatpush.msra.mxu0 %v88
    %1907 = vmatpush.msra.mxu0 %v87
    %1908 = vmatpush.msra.mxu0 %v86
    %1909 = vmatpush.msra.mxu0 %v85
    %1910 = vmatmul.f32.gmra.mxu0 %v1892
    %v1911 = vpop.f32.mrf.mxu0
    %v1912 = vadd.f32 0.0, %v1911
    %1913 = vdwg.mxu0
    %v1914 = vadd.f32 %v1889, %v1912
    %v1915 = vadd.f32 %v1914, %v566
    %v1916 = vtanh.pop %v1915
    %v1917 = vtanh.pop %v1844
    %s1918 = scalar_lea.vmem [#allocation2], 6
    %1919 = vst.msk [vmem:[%s1918] sm:$0x3] %vm338, %v1917
    %v1920 = vtanh.pop %v1840
    %s1921 = scalar_lea.vmem [#allocation4], 6
    %1922 = vst.msk [vmem:[%s1921] sm:$0x3] %vm338, %v1920
    %v1923 = vtanh.pop %v1836
    %s1924 = scalar_lea.vmem [#allocation6], 6
    %1925 = vst.msk [vmem:[%s1924] sm:$0x3] %vm338, %v1923
    %s1926 = scalar_lea.vmem %s0, 8
    %v1927 = vld [vmem:[%s1926] sm:$0x3]
    %v1929 = vsel %vm110, %v1916, 0
    %1931 = vmatpush.msra.mxu0 0.0
    %1932 = vmatpush.msra.mxu0 0.0
    %1933 = vmatpush.msra.mxu0 0.0
    %1934 = vmatpush.msra.mxu0 0.0
    %1935 = vmatpush.msra.mxu0 0.0
    %1936 = vmatpush.msra.mxu0 0.0
    %1937 = vmatpush.msra.mxu0 0.0
    %1938 = vmatpush.msra.mxu0 0.0
    %1939 = vmatpush.msra.mxu0 0.0
    %1940 = vmatpush.msra.mxu0 0.0
    %1941 = vmatpush.msra.mxu0 0.0
    %1942 = vmatpush.msra.mxu0 0.0
    %1943 = vmatpush.msra.mxu0 %v45
    %1944 = vmatpush.msra.mxu0 %v44
    %1945 = vmatpush.msra.mxu0 %v43
    %1946 = vmatpush.msra.mxu0 %v42
    %1947 = vmatmul.f32.gmra.mxu0 %v1929
    %v1948 = vpop.f32.mrf.mxu0
    %v1949 = vadd.f32 0.0, %v1948
    %1950 = vdwg.mxu0
    %v1952 = vsel %vm134, %v1927, 0
    %1954 = vmatpush.msra.mxu0 0.0
    %1955 = vmatpush.msra.mxu0 0.0
    %1956 = vmatpush.msra.mxu0 0.0
    %1957 = vmatpush.msra.mxu0 0.0
    %1958 = vmatpush.msra.mxu0 0.0
    %1959 = vmatpush.msra.mxu0 0.0
    %1960 = vmatpush.msra.mxu0 0.0
    %1961 = vmatpush.msra.mxu0 0.0
    %1962 = vmatpush.msra.mxu0 0.0
    %1963 = vmatpush.msra.mxu0 0.0
    %1964 = vmatpush.msra.mxu0 0.0
    %1965 = vmatpush.msra.mxu0 0.0
    %1966 = vmatpush.msra.mxu0 0.0
    %1967 = vmatpush.msra.mxu0 0.0
    %1968 = vmatpush.msra.mxu0 %v29
    %1969 = vmatpush.msra.mxu0 %v28
    %1970 = vmatmul.f32.gmra.mxu0 %v1952
    %v1971 = vpop.f32.mrf.mxu0
    %v1972 = vadd.f32 %v1949, %v1971
    %1973 = vdwg.mxu0
    %v1974 = vadd.f32 %v1972, %v159
    %1975 = vmatpush.msra.mxu0 0.0
    %1976 = vmatpush.msra.mxu0 0.0
    %1977 = vmatpush.msra.mxu0 0.0
    %1978 = vmatpush.msra.mxu0 0.0
    %1979 = vmatpush.msra.mxu0 0.0
    %1980 = vmatpush.msra.mxu0 0.0
    %1981 = vmatpush.msra.mxu0 0.0
    %1982 = vmatpush.msra.mxu0 0.0
    %1983 = vmatpush.msra.mxu0 0.0
    %1984 = vmatpush.msra.mxu0 0.0
    %1985 = vmatpush.msra.mxu0 0.0
    %1986 = vmatpush.msra.mxu0 0.0
    %1987 = vmatpush.msra.mxu0 %v50
    %1988 = vmatpush.msra.mxu0 %v49
    %1989 = vmatpush.msra.mxu0 %v48
    %1990 = vmatpush.msra.mxu0 %v47
    %1991 = vmatmul.f32.gmra.mxu0 %v1929
    %v1992 = vpop.f32.mrf.mxu0
    %v1993 = vadd.f32 0.0, %v1992
    %1994 = vdwg.mxu0
    %1995 = vmatpush.msra.mxu0 0.0
    %1996 = vmatpush.msra.mxu0 0.0
    %1997 = vmatpush.msra.mxu0 0.0
    %1998 = vmatpush.msra.mxu0 0.0
    %1999 = vmatpush.msra.mxu0 0.0
    %2000 = vmatpush.msra.mxu0 0.0
    %2001 = vmatpush.msra.mxu0 0.0
    %2002 = vmatpush.msra.mxu0 0.0
    %2003 = vmatpush.msra.mxu0 0.0
    %2004 = vmatpush.msra.mxu0 0.0
    %2005 = vmatpush.msra.mxu0 0.0
    %2006 = vmatpush.msra.mxu0 0.0
    %2007 = vmatpush.msra.mxu0 0.0
    %2008 = vmatpush.msra.mxu0 0.0
    %2009 = vmatpush.msra.mxu0 %v32
    %2010 = vmatpush.msra.mxu0 %v31
    %2011 = vmatmul.f32.gmra.mxu0 %v1952
    %v2012 = vpop.f32.mrf.mxu0
    %v2013 = vadd.f32 %v1993, %v2012
    %2014 = vdwg.mxu0
    %v2015 = vadd.f32 %v2013, %v203
    %2016 = vmatpush.msra.mxu0 0.0
    %2017 = vmatpush.msra.mxu0 0.0
    %2018 = vmatpush.msra.mxu0 0.0
    %2019 = vmatpush.msra.mxu0 0.0
    %2020 = vmatpush.msra.mxu0 0.0
    %2021 = vmatpush.msra.mxu0 0.0
    %2022 = vmatpush.msra.mxu0 0.0
    %2023 = vmatpush.msra.mxu0 0.0
    %2024 = vmatpush.msra.mxu0 0.0
    %2025 = vmatpush.msra.mxu0 0.0
    %2026 = vmatpush.msra.mxu0 0.0
    %2027 = vmatpush.msra.mxu0 0.0
    %2028 = vmatpush.msra.mxu0 %v55
    %2029 = vmatpush.msra.mxu0 %v54
    %2030 = vmatpush.msra.mxu0 %v53
    %2031 = vmatpush.msra.mxu0 %v52
    %2032 = vmatmul.f32.gmra.mxu0 %v1929
    %v2033 = vpop.f32.mrf.mxu0
    %v2034 = vadd.f32 0.0, %v2033
    %2035 = vdwg.mxu0
    %2036 = vmatpush.msra.mxu0 0.0
    %2037 = vmatpush.msra.mxu0 0.0
    %2038 = vmatpush.msra.mxu0 0.0
    %2039 = vmatpush.msra.mxu0 0.0
    %2040 = vmatpush.msra.mxu0 0.0
    %2041 = vmatpush.msra.mxu0 0.0
    %2042 = vmatpush.msra.mxu0 0.0
    %2043 = vmatpush.msra.mxu0 0.0
    %2044 = vmatpush.msra.mxu0 0.0
    %2045 = vmatpush.msra.mxu0 0.0
    %2046 = vmatpush.msra.mxu0 0.0
    %2047 = vmatpush.msra.mxu0 0.0
    %2048 = vmatpush.msra.mxu0 0.0
    %2049 = vmatpush.msra.mxu0 0.0
    %2050 = vmatpush.msra.mxu0 %v35
    %2051 = vmatpush.msra.mxu0 %v34
    %2052 = vmatmul.f32.gmra.mxu0 %v1952
    %v2053 = vpop.f32.mrf.mxu0
    %v2054 = vadd.f32 %v2034, %v2053
    %2055 = vdwg.mxu0
    %v2056 = vadd.f32 %v2054, %v247
    %2057 = vmatpush.msra.mxu0 0.0
    %2058 = vmatpush.msra.mxu0 0.0
    %2059 = vmatpush.msra.mxu0 0.0
    %2060 = vmatpush.msra.mxu0 0.0
    %2061 = vmatpush.msra.mxu0 0.0
    %2062 = vmatpush.msra.mxu0 0.0
    %2063 = vmatpush.msra.mxu0 0.0
    %2064 = vmatpush.msra.mxu0 0.0
    %2065 = vmatpush.msra.mxu0 0.0
    %2066 = vmatpush.msra.mxu0 0.0
    %2067 = vmatpush.msra.mxu0 0.0
    %2068 = vmatpush.msra.mxu0 0.0
    %2069 = vmatpush.msra.mxu0 %v60
    %2070 = vmatpush.msra.mxu0 %v59
    %2071 = vmatpush.msra.mxu0 %v58
    %2072 = vmatpush.msra.mxu0 %v57
    %2073 = vmatmul.f32.gmra.mxu0 %v1929
    %v2074 = vpop.f32.mrf.mxu0
    %v2075 = vadd.f32 0.0, %v2074
    %2076 = vdwg.mxu0
    %2077 = vmatpush.msra.mxu0 0.0
    %2078 = vmatpush.msra.mxu0 0.0
    %2079 = vmatpush.msra.mxu0 0.0
    %2080 = vmatpush.msra.mxu0 0.0
    %2081 = vmatpush.msra.mxu0 0.0
    %2082 = vmatpush.msra.mxu0 0.0
    %2083 = vmatpush.msra.mxu0 0.0
    %2084 = vmatpush.msra.mxu0 0.0
    %2085 = vmatpush.msra.mxu0 0.0
    %2086 = vmatpush.msra.mxu0 0.0
    %2087 = vmatpush.msra.mxu0 0.0
    %2088 = vmatpush.msra.mxu0 0.0
    %2089 = vmatpush.msra.mxu0 0.0
    %2090 = vmatpush.msra.mxu0 0.0
    %2091 = vmatpush.msra.mxu0 %v38
    %2092 = vmatpush.msra.mxu0 %v37
    %2093 = vmatmul.f32.gmra.mxu0 %v1952
    %v2094 = vpop.f32.mrf.mxu0
    %v2095 = vadd.f32 %v2075, %v2094
    %2096 = vdwg.mxu0
    %v2097 = vadd.f32 %v2095, %v291
    %2098 = vmatpush.msra.mxu0 0.0
    %2099 = vmatpush.msra.mxu0 0.0
    %2100 = vmatpush.msra.mxu0 0.0
    %2101 = vmatpush.msra.mxu0 0.0
    %2102 = vmatpush.msra.mxu0 0.0
    %2103 = vmatpush.msra.mxu0 0.0
    %2104 = vmatpush.msra.mxu0 0.0
    %2105 = vmatpush.msra.mxu0 0.0
    %2106 = vmatpush.msra.mxu0 0.0
    %2107 = vmatpush.msra.mxu0 0.0
    %2108 = vmatpush.msra.mxu0 0.0
    %2109 = vmatpush.msra.mxu0 0.0
    %2110 = vmatpush.msra.mxu0 %v65
    %2111 = vmatpush.msra.mxu0 %v64
    %2112 = vmatpush.msra.mxu0 %v63
    %2113 = vmatpush.msra.mxu0 %v62
    %2114 = vmatmul.f32.gmra.mxu0 %v1929
    %v2115 = vpop.f32.mrf.mxu0
    %v2116 = vadd.f32 0.0, %v2115
    %2117 = vdwg.mxu0
    %2118 = vmatpush.msra.mxu0 0.0
    %2119 = vmatpush.msra.mxu0 0.0
    %2120 = vmatpush.msra.mxu0 0.0
    %2121 = vmatpush.msra.mxu0 0.0
    %2122 = vmatpush.msra.mxu0 0.0
    %2123 = vmatpush.msra.mxu0 0.0
    %2124 = vmatpush.msra.mxu0 0.0
    %2125 = vmatpush.msra.mxu0 0.0
    %2126 = vmatpush.msra.mxu0 0.0
    %2127 = vmatpush.msra.mxu0 0.0
    %2128 = vmatpush.msra.mxu0 0.0
    %2129 = vmatpush.msra.mxu0 0.0
    %2130 = vmatpush.msra.mxu0 0.0
    %2131 = vmatpush.msra.mxu0 0.0
    %2132 = vmatpush.msra.mxu0 %v41
    %2133 = vmatpush.msra.mxu0 %v40
    %2134 = vmatmul.f32.gmra.mxu0 %v1952
    %v2135 = vpop.f32.mrf.mxu0
    %v2136 = vadd.f32 %v2116, %v2135
    %2137 = vdwg.mxu0
    %v2138 = vadd.f32 %v2136, %v335
    %v2139 = vsel %vm338, %v2015, -inf
    %2140 = vmax.xlane.f32.xlu0 %v2139
    %v2141 = vpop.xlane.xlu0 %2140
    %v2142 = vsub.f32 %v2015, %v2141
    %v2143 = vmul.f32 %v2142, 1.442695
    %v2144 = vpow.pop %v2143
    %v2145 = vsel %vm338, %v2144, 0.0
    %2146 = vadd.xlane.f32.xlu0 %v2145
    %v2147 = vpop.xlane.xlu0 %2146
    %v2148 = vrcp.pop %v2147
    %v2149 = vmul.f32 %v2144, %v2148
    %v2151 = vsel %vm110, %v2149, 0
    %2153 = vmatpush.msra.mxu0 0.0
    %2154 = vmatpush.msra.mxu0 0.0
    %2155 = vmatpush.msra.mxu0 0.0
    %2156 = vmatpush.msra.mxu0 0.0
    %2157 = vmatpush.msra.mxu0 0.0
    %2158 = vmatpush.msra.mxu0 0.0
    %2159 = vmatpush.msra.mxu0 0.0
    %2160 = vmatpush.msra.mxu0 0.0
    %2161 = vmatpush.msra.mxu0 0.0
    %2162 = vmatpush.msra.mxu0 0.0
    %2163 = vmatpush.msra.mxu0 0.0
    %2164 = vmatpush.msra.mxu0 0.0
    %2165 = vmatpush.msra.mxu0 %v108
    %2166 = vmatpush.msra.mxu0 %v107
    %2167 = vmatpush.msra.mxu0 %v106
    %2168 = vmatpush.msra.mxu0 %v105
    %2169 = vmatmul.f32.gmra.mxu0 %v2151
    %v2170 = vpop.f32.mrf.mxu0
    %v2171 = vadd.f32 0.0, %v2170
    %2172 = vdwg.mxu0
    %v2173 = vsub.f32 1.0, %v2171
    %v2174 = vsel %vm338, %v2056, -inf
    %2175 = vmax.xlane.f32.xlu0 %v2174
    %v2176 = vpop.xlane.xlu0 %2175
    %v2177 = vsub.f32 %v2056, %v2176
    %v2178 = vmul.f32 %v2177, 1.442695
    %v2179 = vpow.pop %v2178
    %v2180 = vsel %vm338, %v2179, 0.0
    %2181 = vadd.xlane.f32.xlu0 %v2180
    %v2182 = vpop.xlane.xlu0 %2181
    %v2183 = vrcp.pop %v2182
    %v2184 = vmul.f32 %v2179, %v2183
    %v2186 = vsel %vm110, %v2184, 0
    %2188 = vmatpush.msra.mxu0 0.0
    %2189 = vmatpush.msra.mxu0 0.0
    %2190 = vmatpush.msra.mxu0 0.0
    %2191 = vmatpush.msra.mxu0 0.0
    %2192 = vmatpush.msra.mxu0 0.0
    %2193 = vmatpush.msra.mxu0 0.0
    %2194 = vmatpush.msra.mxu0 0.0
    %2195 = vmatpush.msra.mxu0 0.0
    %2196 = vmatpush.msra.mxu0 0.0
    %2197 = vmatpush.msra.mxu0 0.0
    %2198 = vmatpush.msra.mxu0 0.0
    %2199 = vmatpush.msra.mxu0 0.0
    %2200 = vmatpush.msra.mxu0 %v108
    %2201 = vmatpush.msra.mxu0 %v107
    %2202 = vmatpush.msra.mxu0 %v106
    %2203 = vmatpush.msra.mxu0 %v105
    %2204 = vmatmul.f32.gmra.mxu0 %v2186
    %v2205 = vpop.f32.mrf.mxu0
    %v2206 = vadd.f32 0.0, %v2205
    %2207 = vdwg.mxu0
    %v2208 = vsel %vm338, %v2097, -inf
    %2209 = vmax.xlane.f32.xlu0 %v2208
    %v2210 = vpop.xlane.xlu0 %2209
    %v2211 = vsub.f32 %v2097, %v2210
    %v2212 = vmul.f32 %v2211, 1.442695
    %v2213 = vpow.pop %v2212
    %v2214 = vsel %vm338, %v2213, 0.0
    %2215 = vadd.xlane.f32.xlu0 %v2214
    %v2216 = vpop.xlane.xlu0 %2215
    %v2217 = vrcp.pop %v2216
    %v2218 = vmul.f32 %v2213, %v2217
    %v2220 = vsel %vm110, %v2218, 0
    %2222 = vmatpush.msra.mxu0 0.0
    %2223 = vmatpush.msra.mxu0 0.0
    %2224 = vmatpush.msra.mxu0 0.0
    %2225 = vmatpush.msra.mxu0 0.0
    %2226 = vmatpush.msra.mxu0 0.0
    %2227 = vmatpush.msra.mxu0 0.0
    %2228 = vmatpush.msra.mxu0 0.0
    %2229 = vmatpush.msra.mxu0 0.0
    %2230 = vmatpush.msra.mxu0 0.0
    %2231 = vmatpush.msra.mxu0 0.0
    %2232 = vmatpush.msra.mxu0 0.0
    %2233 = vmatpush.msra.mxu0 0.0
    %2234 = vmatpush.msra.mxu0 %v108
    %2235 = vmatpush.msra.mxu0 %v107
    %2236 = vmatpush.msra.mxu0 %v106
    %2237 = vmatpush.msra.mxu0 %v105
    %2238 = vmatmul.f32.gmra.mxu0 %v2220
    %v2239 = vpop.f32.mrf.mxu0
    %v2240 = vadd.f32 0.0, %v2239
    %2241 = vdwg.mxu0
    %v2242 = vsub.f32 1.0, %v2240
    %v2243 = vsel %vm338, %v2138, -inf
    %2244 = vmax.xlane.f32.xlu0 %v2243
    %v2245 = vpop.xlane.xlu0 %2244
    %v2246 = vsub.f32 %v2138, %v2245
    %v2247 = vmul.f32 %v2246, 1.442695
    %v2248 = vpow.pop %v2247
    %v2249 = vsel %vm338, %v2248, 0.0
    %2250 = vadd.xlane.f32.xlu0 %v2249
    %v2251 = vpop.xlane.xlu0 %2250
    %v2252 = vrcp.pop %v2251
    %v2253 = vmul.f32 %v2248, %v2252
    %v2255 = vsel %vm110, %v2253, 0
    %2257 = vmatpush.msra.mxu0 0.0
    %2258 = vmatpush.msra.mxu0 0.0
    %2259 = vmatpush.msra.mxu0 0.0
    %2260 = vmatpush.msra.mxu0 0.0
    %2261 = vmatpush.msra.mxu0 0.0
    %2262 = vmatpush.msra.mxu0 0.0
    %2263 = vmatpush.msra.mxu0 0.0
    %2264 = vmatpush.msra.mxu0 0.0
    %2265 = vmatpush.msra.mxu0 0.0
    %2266 = vmatpush.msra.mxu0 0.0
    %2267 = vmatpush.msra.mxu0 0.0
    %2268 = vmatpush.msra.mxu0 0.0
    %2269 = vmatpush.msra.mxu0 %v108
    %2270 = vmatpush.msra.mxu0 %v107
    %2271 = vmatpush.msra.mxu0 %v106
    %2272 = vmatpush.msra.mxu0 %v105
    %2273 = vmatmul.f32.gmra.mxu0 %v2255
    %v2274 = vpop.f32.mrf.mxu0
    %v2275 = vadd.f32 0.0, %v2274
    %2276 = vdwg.mxu0
    %v2277 = vtanh.pop %v1974
    %v2278 = vmul.f32 %v2275, %v2242
    %v2279 = vsub.f32 %v2275, %v2278
    %v2280 = vsub.f32 %v2242, %v2278
    %v2281 = vmul.f32 %v2206, %v2173
    %v2282 = vsub.f32 %v2206, %v2281
    %v2283 = vsub.f32 %v2173, %v2281
    %v2284 = vmul.f32 %v2281, %v1915
    %v2285 = vmul.f32 %v2278, %v2277
    %v2286 = vadd.f32 %v2284, %v2285
    %v2287 = vmul.f32 %v2282, %v1915
    %v2288 = vmul.f32 %v2279, %v2277
    %v2289 = vadd.f32 %v2287, %v2288
    %v2290 = vadd.f32 %v2289, %v2286
    %v2291 = vmul.f32 %v2283, %v1915
    %v2292 = vmul.f32 %v2280, %v2277
    %v2293 = vadd.f32 %v2291, %v2292
    %v2294 = vadd.f32 %v2293, %v2286
    %v2296 = vsel %vm110, %v2294, 0
    %2298 = vmatpush.msra.mxu0 0.0
    %2299 = vmatpush.msra.mxu0 0.0
    %2300 = vmatpush.msra.mxu0 0.0
    %2301 = vmatpush.msra.mxu0 0.0
    %2302 = vmatpush.msra.mxu0 0.0
    %2303 = vmatpush.msra.mxu0 0.0
    %2304 = vmatpush.msra.mxu0 0.0
    %2305 = vmatpush.msra.mxu0 0.0
    %2306 = vmatpush.msra.mxu0 0.0
    %2307 = vmatpush.msra.mxu0 0.0
    %2308 = vmatpush.msra.mxu0 0.0
    %2309 = vmatpush.msra.mxu0 0.0
    %2310 = vmatpush.msra.mxu0 %v83
    %2311 = vmatpush.msra.mxu0 %v82
    %2312 = vmatpush.msra.mxu0 %v81
    %2313 = vmatpush.msra.mxu0 %v80
    %2314 = vmatmul.f32.gmra.mxu0 %v2296
    %v2315 = vpop.f32.mrf.mxu0
    %v2316 = vadd.f32 0.0, %v2315
    %2317 = vdwg.mxu0
    %v2319 = vsel %vm110, %v2290, 0
    %2321 = vmatpush.msra.mxu0 0.0
    %2322 = vmatpush.msra.mxu0 0.0
    %2323 = vmatpush.msra.mxu0 0.0
    %2324 = vmatpush.msra.mxu0 0.0
    %2325 = vmatpush.msra.mxu0 0.0
    %2326 = vmatpush.msra.mxu0 0.0
    %2327 = vmatpush.msra.mxu0 0.0
    %2328 = vmatpush.msra.mxu0 0.0
    %2329 = vmatpush.msra.mxu0 0.0
    %2330 = vmatpush.msra.mxu0 0.0
    %2331 = vmatpush.msra.mxu0 0.0
    %2332 = vmatpush.msra.mxu0 0.0
    %2333 = vmatpush.msra.mxu0 %v78
    %2334 = vmatpush.msra.mxu0 %v77
    %2335 = vmatpush.msra.mxu0 %v76
    %2336 = vmatpush.msra.mxu0 %v75
    %2337 = vmatmul.f32.gmra.mxu0 %v2319
    %v2338 = vpop.f32.mrf.mxu0
    %v2339 = vadd.f32 %v2316, %v2338
    %2340 = vdwg.mxu0
    %v2342 = vsel %vm110, %v2286, 0
    %2344 = vmatpush.msra.mxu0 0.0
    %2345 = vmatpush.msra.mxu0 0.0
    %2346 = vmatpush.msra.mxu0 0.0
    %2347 = vmatpush.msra.mxu0 0.0
    %2348 = vmatpush.msra.mxu0 0.0
    %2349 = vmatpush.msra.mxu0 0.0
    %2350 = vmatpush.msra.mxu0 0.0
    %2351 = vmatpush.msra.mxu0 0.0
    %2352 = vmatpush.msra.mxu0 0.0
    %2353 = vmatpush.msra.mxu0 0.0
    %2354 = vmatpush.msra.mxu0 0.0
    %2355 = vmatpush.msra.mxu0 0.0
    %2356 = vmatpush.msra.mxu0 %v88
    %2357 = vmatpush.msra.mxu0 %v87
    %2358 = vmatpush.msra.mxu0 %v86
    %2359 = vmatpush.msra.mxu0 %v85
    %2360 = vmatmul.f32.gmra.mxu0 %v2342
    %v2361 = vpop.f32.mrf.mxu0
    %v2362 = vadd.f32 0.0, %v2361
    %2363 = vdwg.mxu0
    %v2364 = vadd.f32 %v2339, %v2362
    %v2365 = vadd.f32 %v2364, %v566
    %v2366 = vtanh.pop %v2365
    %v2367 = vtanh.pop %v2294
    %s2368 = scalar_lea.vmem [#allocation2], 8
    %2369 = vst.msk [vmem:[%s2368] sm:$0x3] %vm338, %v2367
    %v2370 = vtanh.pop %v2290
    %s2371 = scalar_lea.vmem [#allocation4], 8
    %2372 = vst.msk [vmem:[%s2371] sm:$0x3] %vm338, %v2370
    %v2373 = vtanh.pop %v2286
    %s2374 = scalar_lea.vmem [#allocation6], 8
    %2375 = vst.msk [vmem:[%s2374] sm:$0x3] %vm338, %v2373
    %s2376 = scalar_lea.vmem %s0, 10
    %v2377 = vld [vmem:[%s2376] sm:$0x3]
    %v2379 = vsel %vm110, %v2366, 0
    %2381 = vmatpush.msra.mxu0 0.0
    %2382 = vmatpush.msra.mxu0 0.0
    %2383 = vmatpush.msra.mxu0 0.0
    %2384 = vmatpush.msra.mxu0 0.0
    %2385 = vmatpush.msra.mxu0 0.0
    %2386 = vmatpush.msra.mxu0 0.0
    %2387 = vmatpush.msra.mxu0 0.0
    %2388 = vmatpush.msra.mxu0 0.0
    %2389 = vmatpush.msra.mxu0 0.0
    %2390 = vmatpush.msra.mxu0 0.0
    %2391 = vmatpush.msra.mxu0 0.0
    %2392 = vmatpush.msra.mxu0 0.0
    %2393 = vmatpush.msra.mxu0 %v45
    %2394 = vmatpush.msra.mxu0 %v44
    %2395 = vmatpush.msra.mxu0 %v43
    %2396 = vmatpush.msra.mxu0 %v42
    %2397 = vmatmul.f32.gmra.mxu0 %v2379
    %v2398 = vpop.f32.mrf.mxu0
    %v2399 = vadd.f32 0.0, %v2398
    %2400 = vdwg.mxu0
    %v2402 = vsel %vm134, %v2377, 0
    %2404 = vmatpush.msra.mxu0 0.0
    %2405 = vmatpush.msra.mxu0 0.0
    %2406 = vmatpush.msra.mxu0 0.0
    %2407 = vmatpush.msra.mxu0 0.0
    %2408 = vmatpush.msra.mxu0 0.0
    %2409 = vmatpush.msra.mxu0 0.0
    %2410 = vmatpush.msra.mxu0 0.0
    %2411 = vmatpush.msra.mxu0 0.0
    %2412 = vmatpush.msra.mxu0 0.0
    %2413 = vmatpush.msra.mxu0 0.0
    %2414 = vmatpush.msra.mxu0 0.0
    %2415 = vmatpush.msra.mxu0 0.0
    %2416 = vmatpush.msra.mxu0 0.0
    %2417 = vmatpush.msra.mxu0 0.0
    %2418 = vmatpush.msra.mxu0 %v29
    %2419 = vmatpush.msra.mxu0 %v28
    %2420 = vmatmul.f32.gmra.mxu0 %v2402
    %v2421 = vpop.f32.mrf.mxu0
    %v2422 = vadd.f32 %v2399, %v2421
    %2423 = vdwg.mxu0
    %v2424 = vadd.f32 %v2422, %v159
    %2425 = vmatpush.msra.mxu0 0.0
    %2426 = vmatpush.msra.mxu0 0.0
    %2427 = vmatpush.msra.mxu0 0.0
    %2428 = vmatpush.msra.mxu0 0.0
    %2429 = vmatpush.msra.mxu0 0.0
    %2430 = vmatpush.msra.mxu0 0.0
    %2431 = vmatpush.msra.mxu0 0.0
    %2432 = vmatpush.msra.mxu0 0.0
    %2433 = vmatpush.msra.mxu0 0.0
    %2434 = vmatpush.msra.mxu0 0.0
    %2435 = vmatpush.msra.mxu0 0.0
    %2436 = vmatpush.msra.mxu0 0.0
    %2437 = vmatpush.msra.mxu0 %v50
    %2438 = vmatpush.msra.mxu0 %v49
    %2439 = vmatpush.msra.mxu0 %v48
    %2440 = vmatpush.msra.mxu0 %v47
    %2441 = vmatmul.f32.gmra.mxu0 %v2379
    %v2442 = vpop.f32.mrf.mxu0
    %v2443 = vadd.f32 0.0, %v2442
    %2444 = vdwg.mxu0
    %2445 = vmatpush.msra.mxu0 0.0
    %2446 = vmatpush.msra.mxu0 0.0
    %2447 = vmatpush.msra.mxu0 0.0
    %2448 = vmatpush.msra.mxu0 0.0
    %2449 = vmatpush.msra.mxu0 0.0
    %2450 = vmatpush.msra.mxu0 0.0
    %2451 = vmatpush.msra.mxu0 0.0
    %2452 = vmatpush.msra.mxu0 0.0
    %2453 = vmatpush.msra.mxu0 0.0
    %2454 = vmatpush.msra.mxu0 0.0
    %2455 = vmatpush.msra.mxu0 0.0
    %2456 = vmatpush.msra.mxu0 0.0
    %2457 = vmatpush.msra.mxu0 0.0
    %2458 = vmatpush.msra.mxu0 0.0
    %2459 = vmatpush.msra.mxu0 %v32
    %2460 = vmatpush.msra.mxu0 %v31
    %2461 = vmatmul.f32.gmra.mxu0 %v2402
    %v2462 = vpop.f32.mrf.mxu0
    %v2463 = vadd.f32 %v2443, %v2462
    %2464 = vdwg.mxu0
    %v2465 = vadd.f32 %v2463, %v203
    %2466 = vmatpush.msra.mxu0 0.0
    %2467 = vmatpush.msra.mxu0 0.0
    %2468 = vmatpush.msra.mxu0 0.0
    %2469 = vmatpush.msra.mxu0 0.0
    %2470 = vmatpush.msra.mxu0 0.0
    %2471 = vmatpush.msra.mxu0 0.0
    %2472 = vmatpush.msra.mxu0 0.0
    %2473 = vmatpush.msra.mxu0 0.0
    %2474 = vmatpush.msra.mxu0 0.0
    %2475 = vmatpush.msra.mxu0 0.0
    %2476 = vmatpush.msra.mxu0 0.0
    %2477 = vmatpush.msra.mxu0 0.0
    %2478 = vmatpush.msra.mxu0 %v55
    %2479 = vmatpush.msra.mxu0 %v54
    %2480 = vmatpush.msra.mxu0 %v53
    %2481 = vmatpush.msra.mxu0 %v52
    %2482 = vmatmul.f32.gmra.mxu0 %v2379
    %v2483 = vpop.f32.mrf.mxu0
    %v2484 = vadd.f32 0.0, %v2483
    %2485 = vdwg.mxu0
    %2486 = vmatpush.msra.mxu0 0.0
    %2487 = vmatpush.msra.mxu0 0.0
    %2488 = vmatpush.msra.mxu0 0.0
    %2489 = vmatpush.msra.mxu0 0.0
    %2490 = vmatpush.msra.mxu0 0.0
    %2491 = vmatpush.msra.mxu0 0.0
    %2492 = vmatpush.msra.mxu0 0.0
    %2493 = vmatpush.msra.mxu0 0.0
    %2494 = vmatpush.msra.mxu0 0.0
    %2495 = vmatpush.msra.mxu0 0.0
    %2496 = vmatpush.msra.mxu0 0.0
    %2497 = vmatpush.msra.mxu0 0.0
    %2498 = vmatpush.msra.mxu0 0.0
    %2499 = vmatpush.msra.mxu0 0.0
    %2500 = vmatpush.msra.mxu0 %v35
    %2501 = vmatpush.msra.mxu0 %v34
    %2502 = vmatmul.f32.gmra.mxu0 %v2402
    %v2503 = vpop.f32.mrf.mxu0
    %v2504 = vadd.f32 %v2484, %v2503
    %2505 = vdwg.mxu0
    %v2506 = vadd.f32 %v2504, %v247
    %2507 = vmatpush.msra.mxu0 0.0
    %2508 = vmatpush.msra.mxu0 0.0
    %2509 = vmatpush.msra.mxu0 0.0
    %2510 = vmatpush.msra.mxu0 0.0
    %2511 = vmatpush.msra.mxu0 0.0
    %2512 = vmatpush.msra.mxu0 0.0
    %2513 = vmatpush.msra.mxu0 0.0
    %2514 = vmatpush.msra.mxu0 0.0
    %2515 = vmatpush.msra.mxu0 0.0
    %2516 = vmatpush.msra.mxu0 0.0
    %2517 = vmatpush.msra.mxu0 0.0
    %2518 = vmatpush.msra.mxu0 0.0
    %2519 = vmatpush.msra.mxu0 %v60
    %2520 = vmatpush.msra.mxu0 %v59
    %2521 = vmatpush.msra.mxu0 %v58
    %2522 = vmatpush.msra.mxu0 %v57
    %2523 = vmatmul.f32.gmra.mxu0 %v2379
    %v2524 = vpop.f32.mrf.mxu0
    %v2525 = vadd.f32 0.0, %v2524
    %2526 = vdwg.mxu0
    %2527 = vmatpush.msra.mxu0 0.0
    %2528 = vmatpush.msra.mxu0 0.0
    %2529 = vmatpush.msra.mxu0 0.0
    %2530 = vmatpush.msra.mxu0 0.0
    %2531 = vmatpush.msra.mxu0 0.0
    %2532 = vmatpush.msra.mxu0 0.0
    %2533 = vmatpush.msra.mxu0 0.0
    %2534 = vmatpush.msra.mxu0 0.0
    %2535 = vmatpush.msra.mxu0 0.0
    %2536 = vmatpush.msra.mxu0 0.0
    %2537 = vmatpush.msra.mxu0 0.0
    %2538 = vmatpush.msra.mxu0 0.0
    %2539 = vmatpush.msra.mxu0 0.0
    %2540 = vmatpush.msra.mxu0 0.0
    %2541 = vmatpush.msra.mxu0 %v38
    %2542 = vmatpush.msra.mxu0 %v37
    %2543 = vmatmul.f32.gmra.mxu0 %v2402
    %v2544 = vpop.f32.mrf.mxu0
    %v2545 = vadd.f32 %v2525, %v2544
    %2546 = vdwg.mxu0
    %v2547 = vadd.f32 %v2545, %v291
    %2548 = vmatpush.msra.mxu0 0.0
    %2549 = vmatpush.msra.mxu0 0.0
    %2550 = vmatpush.msra.mxu0 0.0
    %2551 = vmatpush.msra.mxu0 0.0
    %2552 = vmatpush.msra.mxu0 0.0
    %2553 = vmatpush.msra.mxu0 0.0
    %2554 = vmatpush.msra.mxu0 0.0
    %2555 = vmatpush.msra.mxu0 0.0
    %2556 = vmatpush.msra.mxu0 0.0
    %2557 = vmatpush.msra.mxu0 0.0
    %2558 = vmatpush.msra.mxu0 0.0
    %2559 = vmatpush.msra.mxu0 0.0
    %2560 = vmatpush.msra.mxu0 %v65
    %2561 = vmatpush.msra.mxu0 %v64
    %2562 = vmatpush.msra.mxu0 %v63
    %2563 = vmatpush.msra.mxu0 %v62
    %2564 = vmatmul.f32.gmra.mxu0 %v2379
    %v2565 = vpop.f32.mrf.mxu0
    %v2566 = vadd.f32 0.0, %v2565
    %2567 = vdwg.mxu0
    %2568 = vmatpush.msra.mxu0 0.0
    %2569 = vmatpush.msra.mxu0 0.0
    %2570 = vmatpush.msra.mxu0 0.0
    %2571 = vmatpush.msra.mxu0 0.0
    %2572 = vmatpush.msra.mxu0 0.0
    %2573 = vmatpush.msra.mxu0 0.0
    %2574 = vmatpush.msra.mxu0 0.0
    %2575 = vmatpush.msra.mxu0 0.0
    %2576 = vmatpush.msra.mxu0 0.0
    %2577 = vmatpush.msra.mxu0 0.0
    %2578 = vmatpush.msra.mxu0 0.0
    %2579 = vmatpush.msra.mxu0 0.0
    %2580 = vmatpush.msra.mxu0 0.0
    %2581 = vmatpush.msra.mxu0 0.0
    %2582 = vmatpush.msra.mxu0 %v41
    %2583 = vmatpush.msra.mxu0 %v40
    %2584 = vmatmul.f32.gmra.mxu0 %v2402
    %v2585 = vpop.f32.mrf.mxu0
    %v2586 = vadd.f32 %v2566, %v2585
    %2587 = vdwg.mxu0
    %v2588 = vadd.f32 %v2586, %v335
    %v2589 = vsel %vm338, %v2465, -inf
    %2590 = vmax.xlane.f32.xlu0 %v2589
    %v2591 = vpop.xlane.xlu0 %2590
    %v2592 = vsub.f32 %v2465, %v2591
    %v2593 = vmul.f32 %v2592, 1.442695
    %v2594 = vpow.pop %v2593
    %v2595 = vsel %vm338, %v2594, 0.0
    %2596 = vadd.xlane.f32.xlu0 %v2595
    %v2597 = vpop.xlane.xlu0 %2596
    %v2598 = vrcp.pop %v2597
    %v2599 = vmul.f32 %v2594, %v2598
    %v2601 = vsel %vm110, %v2599, 0
    %2603 = vmatpush.msra.mxu0 0.0
    %2604 = vmatpush.msra.mxu0 0.0
    %2605 = vmatpush.msra.mxu0 0.0
    %2606 = vmatpush.msra.mxu0 0.0
    %2607 = vmatpush.msra.mxu0 0.0
    %2608 = vmatpush.msra.mxu0 0.0
    %2609 = vmatpush.msra.mxu0 0.0
    %2610 = vmatpush.msra.mxu0 0.0
    %2611 = vmatpush.msra.mxu0 0.0
    %2612 = vmatpush.msra.mxu0 0.0
    %2613 = vmatpush.msra.mxu0 0.0
    %2614 = vmatpush.msra.mxu0 0.0
    %2615 = vmatpush.msra.mxu0 %v108
    %2616 = vmatpush.msra.mxu0 %v107
    %2617 = vmatpush.msra.mxu0 %v106
    %2618 = vmatpush.msra.mxu0 %v105
    %2619 = vmatmul.f32.gmra.mxu0 %v2601
    %v2620 = vpop.f32.mrf.mxu0
    %v2621 = vadd.f32 0.0, %v2620
    %2622 = vdwg.mxu0
    %v2623 = vsub.f32 1.0, %v2621
    %v2624 = vsel %vm338, %v2506, -inf
    %2625 = vmax.xlane.f32.xlu0 %v2624
    %v2626 = vpop.xlane.xlu0 %2625
    %v2627 = vsub.f32 %v2506, %v2626
    %v2628 = vmul.f32 %v2627, 1.442695
    %v2629 = vpow.pop %v2628
    %v2630 = vsel %vm338, %v2629, 0.0
    %2631 = vadd.xlane.f32.xlu0 %v2630
    %v2632 = vpop.xlane.xlu0 %2631
    %v2633 = vrcp.pop %v2632
    %v2634 = vmul.f32 %v2629, %v2633
    %v2636 = vsel %vm110, %v2634, 0
    %2638 = vmatpush.msra.mxu0 0.0
    %2639 = vmatpush.msra.mxu0 0.0
    %2640 = vmatpush.msra.mxu0 0.0
    %2641 = vmatpush.msra.mxu0 0.0
    %2642 = vmatpush.msra.mxu0 0.0
    %2643 = vmatpush.msra.mxu0 0.0
    %2644 = vmatpush.msra.mxu0 0.0
    %2645 = vmatpush.msra.mxu0 0.0
    %2646 = vmatpush.msra.mxu0 0.0
    %2647 = vmatpush.msra.mxu0 0.0
    %2648 = vmatpush.msra.mxu0 0.0
    %2649 = vmatpush.msra.mxu0 0.0
    %2650 = vmatpush.msra.mxu0 %v108
    %2651 = vmatpush.msra.mxu0 %v107
    %2652 = vmatpush.msra.mxu0 %v106
    %2653 = vmatpush.msra.mxu0 %v105
    %2654 = vmatmul.f32.gmra.mxu0 %v2636
    %v2655 = vpop.f32.mrf.mxu0
    %v2656 = vadd.f32 0.0, %v2655
    %2657 = vdwg.mxu0
    %v2658 = vsel %vm338, %v2547, -inf
    %2659 = vmax.xlane.f32.xlu0 %v2658
    %v2660 = vpop.xlane.xlu0 %2659
    %v2661 = vsub.f32 %v2547, %v2660
    %v2662 = vmul.f32 %v2661, 1.442695
    %v2663 = vpow.pop %v2662
    %v2664 = vsel %vm338, %v2663, 0.0
    %2665 = vadd.xlane.f32.xlu0 %v2664
    %v2666 = vpop.xlane.xlu0 %2665
    %v2667 = vrcp.pop %v2666
    %v2668 = vmul.f32 %v2663, %v2667
    %v2670 = vsel %vm110, %v2668, 0
    %2672 = vmatpush.msra.mxu0 0.0
    %2673 = vmatpush.msra.mxu0 0.0
    %2674 = vmatpush.msra.mxu0 0.0
    %2675 = vmatpush.msra.mxu0 0.0
    %2676 = vmatpush.msra.mxu0 0.0
    %2677 = vmatpush.msra.mxu0 0.0
    %2678 = vmatpush.msra.mxu0 0.0
    %2679 = vmatpush.msra.mxu0 0.0
    %2680 = vmatpush.msra.mxu0 0.0
    %2681 = vmatpush.msra.mxu0 0.0
    %2682 = vmatpush.msra.mxu0 0.0
    %2683 = vmatpush.msra.mxu0 0.0
    %2684 = vmatpush.msra.mxu0 %v108
    %2685 = vmatpush.msra.mxu0 %v107
    %2686 = vmatpush.msra.mxu0 %v106
    %2687 = vmatpush.msra.mxu0 %v105
    %2688 = vmatmul.f32.gmra.mxu0 %v2670
    %v2689 = vpop.f32.mrf.mxu0
    %v2690 = vadd.f32 0.0, %v2689
    %2691 = vdwg.mxu0
    %v2692 = vsub.f32 1.0, %v2690
    %v2693 = vsel %vm338, %v2588, -inf
    %2694 = vmax.xlane.f32.xlu0 %v2693
    %v2695 = vpop.xlane.xlu0 %2694
    %v2696 = vsub.f32 %v2588, %v2695
    %v2697 = vmul.f32 %v2696, 1.442695
    %v2698 = vpow.pop %v2697
    %v2699 = vsel %vm338, %v2698, 0.0
    %2700 = vadd.xlane.f32.xlu0 %v2699
    %v2701 = vpop.xlane.xlu0 %2700
    %v2702 = vrcp.pop %v2701
    %v2703 = vmul.f32 %v2698, %v2702
    %v2705 = vsel %vm110, %v2703, 0
    %2707 = vmatpush.msra.mxu0 0.0
    %2708 = vmatpush.msra.mxu0 0.0
    %2709 = vmatpush.msra.mxu0 0.0
    %2710 = vmatpush.msra.mxu0 0.0
    %2711 = vmatpush.msra.mxu0 0.0
    %2712 = vmatpush.msra.mxu0 0.0
    %2713 = vmatpush.msra.mxu0 0.0
    %2714 = vmatpush.msra.mxu0 0.0
    %2715 = vmatpush.msra.mxu0 0.0
    %2716 = vmatpush.msra.mxu0 0.0
    %2717 = vmatpush.msra.mxu0 0.0
    %2718 = vmatpush.msra.mxu0 0.0
    %2719 = vmatpush.msra.mxu0 %v108
    %2720 = vmatpush.msra.mxu0 %v107
    %2721 = vmatpush.msra.mxu0 %v106
    %2722 = vmatpush.msra.mxu0 %v105
    %2723 = vmatmul.f32.gmra.mxu0 %v2705
    %v2724 = vpop.f32.mrf.mxu0
    %v2725 = vadd.f32 0.0, %v2724
    %2726 = vdwg.mxu0
    %v2727 = vtanh.pop %v2424
    %v2728 = vmul.f32 %v2725, %v2692
    %v2729 = vsub.f32 %v2725, %v2728
    %v2730 = vsub.f32 %v2692, %v2728
    %v2731 = vmul.f32 %v2656, %v2623
    %v2732 = vsub.f32 %v2656, %v2731
    %v2733 = vsub.f32 %v2623, %v2731
    %v2734 = vmul.f32 %v2731, %v2365
    %v2735 = vmul.f32 %v2728, %v2727
    %v2736 = vadd.f32 %v2734, %v2735
    %v2737 = vmul.f32 %v2732, %v2365
    %v2738 = vmul.f32 %v2729, %v2727
    %v2739 = vadd.f32 %v2737, %v2738
    %v2740 = vadd.f32 %v2739, %v2736
    %v2741 = vmul.f32 %v2733, %v2365
    %v2742 = vmul.f32 %v2730, %v2727
    %v2743 = vadd.f32 %v2741, %v2742
    %v2744 = vadd.f32 %v2743, %v2736
    %v2746 = vsel %vm110, %v2744, 0
    %2748 = vmatpush.msra.mxu0 0.0
    %2749 = vmatpush.msra.mxu0 0.0
    %2750 = vmatpush.msra.mxu0 0.0
    %2751 = vmatpush.msra.mxu0 0.0
    %2752 = vmatpush.msra.mxu0 0.0
    %2753 = vmatpush.msra.mxu0 0.0
    %2754 = vmatpush.msra.mxu0 0.0
    %2755 = vmatpush.msra.mxu0 0.0
    %2756 = vmatpush.msra.mxu0 0.0
    %2757 = vmatpush.msra.mxu0 0.0
    %2758 = vmatpush.msra.mxu0 0.0
    %2759 = vmatpush.msra.mxu0 0.0
    %2760 = vmatpush.msra.mxu0 %v83
    %2761 = vmatpush.msra.mxu0 %v82
    %2762 = vmatpush.msra.mxu0 %v81
    %2763 = vmatpush.msra.mxu0 %v80
    %2764 = vmatmul.f32.gmra.mxu0 %v2746
    %v2765 = vpop.f32.mrf.mxu0
    %v2766 = vadd.f32 0.0, %v2765
    %2767 = vdwg.mxu0
    %v2769 = vsel %vm110, %v2740, 0
    %2771 = vmatpush.msra.mxu0 0.0
    %2772 = vmatpush.msra.mxu0 0.0
    %2773 = vmatpush.msra.mxu0 0.0
    %2774 = vmatpush.msra.mxu0 0.0
    %2775 = vmatpush.msra.mxu0 0.0
    %2776 = vmatpush.msra.mxu0 0.0
    %2777 = vmatpush.msra.mxu0 0.0
    %2778 = vmatpush.msra.mxu0 0.0
    %2779 = vmatpush.msra.mxu0 0.0
    %2780 = vmatpush.msra.mxu0 0.0
    %2781 = vmatpush.msra.mxu0 0.0
    %2782 = vmatpush.msra.mxu0 0.0
    %2783 = vmatpush.msra.mxu0 %v78
    %2784 = vmatpush.msra.mxu0 %v77
    %2785 = vmatpush.msra.mxu0 %v76
    %2786 = vmatpush.msra.mxu0 %v75
    %2787 = vmatmul.f32.gmra.mxu0 %v2769
    %v2788 = vpop.f32.mrf.mxu0
    %v2789 = vadd.f32 %v2766, %v2788
    %2790 = vdwg.mxu0
    %v2792 = vsel %vm110, %v2736, 0
    %2794 = vmatpush.msra.mxu0 0.0
    %2795 = vmatpush.msra.mxu0 0.0
    %2796 = vmatpush.msra.mxu0 0.0
    %2797 = vmatpush.msra.mxu0 0.0
    %2798 = vmatpush.msra.mxu0 0.0
    %2799 = vmatpush.msra.mxu0 0.0
    %2800 = vmatpush.msra.mxu0 0.0
    %2801 = vmatpush.msra.mxu0 0.0
    %2802 = vmatpush.msra.mxu0 0.0
    %2803 = vmatpush.msra.mxu0 0.0
    %2804 = vmatpush.msra.mxu0 0.0
    %2805 = vmatpush.msra.mxu0 0.0
    %2806 = vmatpush.msra.mxu0 %v88
    %2807 = vmatpush.msra.mxu0 %v87
    %2808 = vmatpush.msra.mxu0 %v86
    %2809 = vmatpush.msra.mxu0 %v85
    %2810 = vmatmul.f32.gmra.mxu0 %v2792
    %v2811 = vpop.f32.mrf.mxu0
    %v2812 = vadd.f32 0.0, %v2811
    %2813 = vdwg.mxu0
    %v2814 = vadd.f32 %v2789, %v2812
    %v2815 = vadd.f32 %v2814, %v566
    %v2816 = vtanh.pop %v2815
    %v2817 = vtanh.pop %v2744
    %s2818 = scalar_lea.vmem [#allocation2], 10
    %2819 = vst.msk [vmem:[%s2818] sm:$0x3] %vm338, %v2817
    %v2820 = vtanh.pop %v2740
    %s2821 = scalar_lea.vmem [#allocation4], 10
    %2822 = vst.msk [vmem:[%s2821] sm:$0x3] %vm338, %v2820
    %v2823 = vtanh.pop %v2736
    %s2824 = scalar_lea.vmem [#allocation6], 10
    %2825 = vst.msk [vmem:[%s2824] sm:$0x3] %vm338, %v2823
    %s2826 = scalar_lea.vmem %s0, 12
    %v2827 = vld [vmem:[%s2826] sm:$0x3]
    %v2829 = vsel %vm110, %v2816, 0
    %2831 = vmatpush.msra.mxu0 0.0
    %2832 = vmatpush.msra.mxu0 0.0
    %2833 = vmatpush.msra.mxu0 0.0
    %2834 = vmatpush.msra.mxu0 0.0
    %2835 = vmatpush.msra.mxu0 0.0
    %2836 = vmatpush.msra.mxu0 0.0
    %2837 = vmatpush.msra.mxu0 0.0
    %2838 = vmatpush.msra.mxu0 0.0
    %2839 = vmatpush.msra.mxu0 0.0
    %2840 = vmatpush.msra.mxu0 0.0
    %2841 = vmatpush.msra.mxu0 0.0
    %2842 = vmatpush.msra.mxu0 0.0
    %2843 = vmatpush.msra.mxu0 %v45
    %2844 = vmatpush.msra.mxu0 %v44
    %2845 = vmatpush.msra.mxu0 %v43
    %2846 = vmatpush.msra.mxu0 %v42
    %2847 = vmatmul.f32.gmra.mxu0 %v2829
    %v2848 = vpop.f32.mrf.mxu0
    %v2849 = vadd.f32 0.0, %v2848
    %2850 = vdwg.mxu0
    %v2852 = vsel %vm134, %v2827, 0
    %2854 = vmatpush.msra.mxu0 0.0
    %2855 = vmatpush.msra.mxu0 0.0
    %2856 = vmatpush.msra.mxu0 0.0
    %2857 = vmatpush.msra.mxu0 0.0
    %2858 = vmatpush.msra.mxu0 0.0
    %2859 = vmatpush.msra.mxu0 0.0
    %2860 = vmatpush.msra.mxu0 0.0
    %2861 = vmatpush.msra.mxu0 0.0
    %2862 = vmatpush.msra.mxu0 0.0
    %2863 = vmatpush.msra.mxu0 0.0
    %2864 = vmatpush.msra.mxu0 0.0
    %2865 = vmatpush.msra.mxu0 0.0
    %2866 = vmatpush.msra.mxu0 0.0
    %2867 = vmatpush.msra.mxu0 0.0
    %2868 = vmatpush.msra.mxu0 %v29
    %2869 = vmatpush.msra.mxu0 %v28
    %2870 = vmatmul.f32.gmra.mxu0 %v2852
    %v2871 = vpop.f32.mrf.mxu0
    %v2872 = vadd.f32 %v2849, %v2871
    %2873 = vdwg.mxu0
    %v2874 = vadd.f32 %v2872, %v159
    %2875 = vmatpush.msra.mxu0 0.0
    %2876 = vmatpush.msra.mxu0 0.0
    %2877 = vmatpush.msra.mxu0 0.0
    %2878 = vmatpush.msra.mxu0 0.0
    %2879 = vmatpush.msra.mxu0 0.0
    %2880 = vmatpush.msra.mxu0 0.0
    %2881 = vmatpush.msra.mxu0 0.0
    %2882 = vmatpush.msra.mxu0 0.0
    %2883 = vmatpush.msra.mxu0 0.0
    %2884 = vmatpush.msra.mxu0 0.0
    %2885 = vmatpush.msra.mxu0 0.0
    %2886 = vmatpush.msra.mxu0 0.0
    %2887 = vmatpush.msra.mxu0 %v50
    %2888 = vmatpush.msra.mxu0 %v49
    %2889 = vmatpush.msra.mxu0 %v48
    %2890 = vmatpush.msra.mxu0 %v47
    %2891 = vmatmul.f32.gmra.mxu0 %v2829
    %v2892 = vpop.f32.mrf.mxu0
    %v2893 = vadd.f32 0.0, %v2892
    %2894 = vdwg.mxu0
    %2895 = vmatpush.msra.mxu0 0.0
    %2896 = vmatpush.msra.mxu0 0.0
    %2897 = vmatpush.msra.mxu0 0.0
    %2898 = vmatpush.msra.mxu0 0.0
    %2899 = vmatpush.msra.mxu0 0.0
    %2900 = vmatpush.msra.mxu0 0.0
    %2901 = vmatpush.msra.mxu0 0.0
    %2902 = vmatpush.msra.mxu0 0.0
    %2903 = vmatpush.msra.mxu0 0.0
    %2904 = vmatpush.msra.mxu0 0.0
    %2905 = vmatpush.msra.mxu0 0.0
    %2906 = vmatpush.msra.mxu0 0.0
    %2907 = vmatpush.msra.mxu0 0.0
    %2908 = vmatpush.msra.mxu0 0.0
    %2909 = vmatpush.msra.mxu0 %v32
    %2910 = vmatpush.msra.mxu0 %v31
    %2911 = vmatmul.f32.gmra.mxu0 %v2852
    %v2912 = vpop.f32.mrf.mxu0
    %v2913 = vadd.f32 %v2893, %v2912
    %2914 = vdwg.mxu0
    %v2915 = vadd.f32 %v2913, %v203
    %2916 = vmatpush.msra.mxu0 0.0
    %2917 = vmatpush.msra.mxu0 0.0
    %2918 = vmatpush.msra.mxu0 0.0
    %2919 = vmatpush.msra.mxu0 0.0
    %2920 = vmatpush.msra.mxu0 0.0
    %2921 = vmatpush.msra.mxu0 0.0
    %2922 = vmatpush.msra.mxu0 0.0
    %2923 = vmatpush.msra.mxu0 0.0
    %2924 = vmatpush.msra.mxu0 0.0
    %2925 = vmatpush.msra.mxu0 0.0
    %2926 = vmatpush.msra.mxu0 0.0
    %2927 = vmatpush.msra.mxu0 0.0
    %2928 = vmatpush.msra.mxu0 %v55
    %2929 = vmatpush.msra.mxu0 %v54
    %2930 = vmatpush.msra.mxu0 %v53
    %2931 = vmatpush.msra.mxu0 %v52
    %2932 = vmatmul.f32.gmra.mxu0 %v2829
    %v2933 = vpop.f32.mrf.mxu0
    %v2934 = vadd.f32 0.0, %v2933
    %2935 = vdwg.mxu0
    %2936 = vmatpush.msra.mxu0 0.0
    %2937 = vmatpush.msra.mxu0 0.0
    %2938 = vmatpush.msra.mxu0 0.0
    %2939 = vmatpush.msra.mxu0 0.0
    %2940 = vmatpush.msra.mxu0 0.0
    %2941 = vmatpush.msra.mxu0 0.0
    %2942 = vmatpush.msra.mxu0 0.0
    %2943 = vmatpush.msra.mxu0 0.0
    %2944 = vmatpush.msra.mxu0 0.0
    %2945 = vmatpush.msra.mxu0 0.0
    %2946 = vmatpush.msra.mxu0 0.0
    %2947 = vmatpush.msra.mxu0 0.0
    %2948 = vmatpush.msra.mxu0 0.0
    %2949 = vmatpush.msra.mxu0 0.0
    %2950 = vmatpush.msra.mxu0 %v35
    %2951 = vmatpush.msra.mxu0 %v34
    %2952 = vmatmul.f32.gmra.mxu0 %v2852
    %v2953 = vpop.f32.mrf.mxu0
    %v2954 = vadd.f32 %v2934, %v2953
    %2955 = vdwg.mxu0
    %v2956 = vadd.f32 %v2954, %v247
    %2957 = vmatpush.msra.mxu0 0.0
    %2958 = vmatpush.msra.mxu0 0.0
    %2959 = vmatpush.msra.mxu0 0.0
    %2960 = vmatpush.msra.mxu0 0.0
    %2961 = vmatpush.msra.mxu0 0.0
    %2962 = vmatpush.msra.mxu0 0.0
    %2963 = vmatpush.msra.mxu0 0.0
    %2964 = vmatpush.msra.mxu0 0.0
    %2965 = vmatpush.msra.mxu0 0.0
    %2966 = vmatpush.msra.mxu0 0.0
    %2967 = vmatpush.msra.mxu0 0.0
    %2968 = vmatpush.msra.mxu0 0.0
    %2969 = vmatpush.msra.mxu0 %v60
    %2970 = vmatpush.msra.mxu0 %v59
    %2971 = vmatpush.msra.mxu0 %v58
    %2972 = vmatpush.msra.mxu0 %v57
    %2973 = vmatmul.f32.gmra.mxu0 %v2829
    %v2974 = vpop.f32.mrf.mxu0
    %v2975 = vadd.f32 0.0, %v2974
    %2976 = vdwg.mxu0
    %2977 = vmatpush.msra.mxu0 0.0
    %2978 = vmatpush.msra.mxu0 0.0
    %2979 = vmatpush.msra.mxu0 0.0
    %2980 = vmatpush.msra.mxu0 0.0
    %2981 = vmatpush.msra.mxu0 0.0
    %2982 = vmatpush.msra.mxu0 0.0
    %2983 = vmatpush.msra.mxu0 0.0
    %2984 = vmatpush.msra.mxu0 0.0
    %2985 = vmatpush.msra.mxu0 0.0
    %2986 = vmatpush.msra.mxu0 0.0
    %2987 = vmatpush.msra.mxu0 0.0
    %2988 = vmatpush.msra.mxu0 0.0
    %2989 = vmatpush.msra.mxu0 0.0
    %2990 = vmatpush.msra.mxu0 0.0
    %2991 = vmatpush.msra.mxu0 %v38
    %2992 = vmatpush.msra.mxu0 %v37
    %2993 = vmatmul.f32.gmra.mxu0 %v2852
    %v2994 = vpop.f32.mrf.mxu0
    %v2995 = vadd.f32 %v2975, %v2994
    %2996 = vdwg.mxu0
    %v2997 = vadd.f32 %v2995, %v291
    %2998 = vmatpush.msra.mxu0 0.0
    %2999 = vmatpush.msra.mxu0 0.0
    %3000 = vmatpush.msra.mxu0 0.0
    %3001 = vmatpush.msra.mxu0 0.0
    %3002 = vmatpush.msra.mxu0 0.0
    %3003 = vmatpush.msra.mxu0 0.0
    %3004 = vmatpush.msra.mxu0 0.0
    %3005 = vmatpush.msra.mxu0 0.0
    %3006 = vmatpush.msra.mxu0 0.0
    %3007 = vmatpush.msra.mxu0 0.0
    %3008 = vmatpush.msra.mxu0 0.0
    %3009 = vmatpush.msra.mxu0 0.0
    %3010 = vmatpush.msra.mxu0 %v65
    %3011 = vmatpush.msra.mxu0 %v64
    %3012 = vmatpush.msra.mxu0 %v63
    %3013 = vmatpush.msra.mxu0 %v62
    %3014 = vmatmul.f32.gmra.mxu0 %v2829
    %v3015 = vpop.f32.mrf.mxu0
    %v3016 = vadd.f32 0.0, %v3015
    %3017 = vdwg.mxu0
    %3018 = vmatpush.msra.mxu0 0.0
    %3019 = vmatpush.msra.mxu0 0.0
    %3020 = vmatpush.msra.mxu0 0.0
    %3021 = vmatpush.msra.mxu0 0.0
    %3022 = vmatpush.msra.mxu0 0.0
    %3023 = vmatpush.msra.mxu0 0.0
    %3024 = vmatpush.msra.mxu0 0.0
    %3025 = vmatpush.msra.mxu0 0.0
    %3026 = vmatpush.msra.mxu0 0.0
    %3027 = vmatpush.msra.mxu0 0.0
    %3028 = vmatpush.msra.mxu0 0.0
    %3029 = vmatpush.msra.mxu0 0.0
    %3030 = vmatpush.msra.mxu0 0.0
    %3031 = vmatpush.msra.mxu0 0.0
    %3032 = vmatpush.msra.mxu0 %v41
    %3033 = vmatpush.msra.mxu0 %v40
    %3034 = vmatmul.f32.gmra.mxu0 %v2852
    %v3035 = vpop.f32.mrf.mxu0
    %v3036 = vadd.f32 %v3016, %v3035
    %3037 = vdwg.mxu0
    %v3038 = vadd.f32 %v3036, %v335
    %v3039 = vsel %vm338, %v2915, -inf
    %3040 = vmax.xlane.f32.xlu0 %v3039
    %v3041 = vpop.xlane.xlu0 %3040
    %v3042 = vsub.f32 %v2915, %v3041
    %v3043 = vmul.f32 %v3042, 1.442695
    %v3044 = vpow.pop %v3043
    %v3045 = vsel %vm338, %v3044, 0.0
    %3046 = vadd.xlane.f32.xlu0 %v3045
    %v3047 = vpop.xlane.xlu0 %3046
    %v3048 = vrcp.pop %v3047
    %v3049 = vmul.f32 %v3044, %v3048
    %v3051 = vsel %vm110, %v3049, 0
    %3053 = vmatpush.msra.mxu0 0.0
    %3054 = vmatpush.msra.mxu0 0.0
    %3055 = vmatpush.msra.mxu0 0.0
    %3056 = vmatpush.msra.mxu0 0.0
    %3057 = vmatpush.msra.mxu0 0.0
    %3058 = vmatpush.msra.mxu0 0.0
    %3059 = vmatpush.msra.mxu0 0.0
    %3060 = vmatpush.msra.mxu0 0.0
    %3061 = vmatpush.msra.mxu0 0.0
    %3062 = vmatpush.msra.mxu0 0.0
    %3063 = vmatpush.msra.mxu0 0.0
    %3064 = vmatpush.msra.mxu0 0.0
    %3065 = vmatpush.msra.mxu0 %v108
    %3066 = vmatpush.msra.mxu0 %v107
    %3067 = vmatpush.msra.mxu0 %v106
    %3068 = vmatpush.msra.mxu0 %v105
    %3069 = vmatmul.f32.gmra.mxu0 %v3051
    %v3070 = vpop.f32.mrf.mxu0
    %v3071 = vadd.f32 0.0, %v3070
    %3072 = vdwg.mxu0
    %v3073 = vsub.f32 1.0, %v3071
    %v3074 = vsel %vm338, %v2956, -inf
    %3075 = vmax.xlane.f32.xlu0 %v3074
    %v3076 = vpop.xlane.xlu0 %3075
    %v3077 = vsub.f32 %v2956, %v3076
    %v3078 = vmul.f32 %v3077, 1.442695
    %v3079 = vpow.pop %v3078
    %v3080 = vsel %vm338, %v3079, 0.0
    %3081 = vadd.xlane.f32.xlu0 %v3080
    %v3082 = vpop.xlane.xlu0 %3081
    %v3083 = vrcp.pop %v3082
    %v3084 = vmul.f32 %v3079, %v3083
    %v3086 = vsel %vm110, %v3084, 0
    %3088 = vmatpush.msra.mxu0 0.0
    %3089 = vmatpush.msra.mxu0 0.0
    %3090 = vmatpush.msra.mxu0 0.0
    %3091 = vmatpush.msra.mxu0 0.0
    %3092 = vmatpush.msra.mxu0 0.0
    %3093 = vmatpush.msra.mxu0 0.0
    %3094 = vmatpush.msra.mxu0 0.0
    %3095 = vmatpush.msra.mxu0 0.0
    %3096 = vmatpush.msra.mxu0 0.0
    %3097 = vmatpush.msra.mxu0 0.0
    %3098 = vmatpush.msra.mxu0 0.0
    %3099 = vmatpush.msra.mxu0 0.0
    %3100 = vmatpush.msra.mxu0 %v108
    %3101 = vmatpush.msra.mxu0 %v107
    %3102 = vmatpush.msra.mxu0 %v106
    %3103 = vmatpush.msra.mxu0 %v105
    %3104 = vmatmul.f32.gmra.mxu0 %v3086
    %v3105 = vpop.f32.mrf.mxu0
    %v3106 = vadd.f32 0.0, %v3105
    %3107 = vdwg.mxu0
    %v3108 = vsel %vm338, %v2997, -inf
    %3109 = vmax.xlane.f32.xlu0 %v3108
    %v3110 = vpop.xlane.xlu0 %3109
    %v3111 = vsub.f32 %v2997, %v3110
    %v3112 = vmul.f32 %v3111, 1.442695
    %v3113 = vpow.pop %v3112
    %v3114 = vsel %vm338, %v3113, 0.0
    %3115 = vadd.xlane.f32.xlu0 %v3114
    %v3116 = vpop.xlane.xlu0 %3115
    %v3117 = vrcp.pop %v3116
    %v3118 = vmul.f32 %v3113, %v3117
    %v3120 = vsel %vm110, %v3118, 0
    %3122 = vmatpush.msra.mxu0 0.0
    %3123 = vmatpush.msra.mxu0 0.0
    %3124 = vmatpush.msra.mxu0 0.0
    %3125 = vmatpush.msra.mxu0 0.0
    %3126 = vmatpush.msra.mxu0 0.0
    %3127 = vmatpush.msra.mxu0 0.0
    %3128 = vmatpush.msra.mxu0 0.0
    %3129 = vmatpush.msra.mxu0 0.0
    %3130 = vmatpush.msra.mxu0 0.0
    %3131 = vmatpush.msra.mxu0 0.0
    %3132 = vmatpush.msra.mxu0 0.0
    %3133 = vmatpush.msra.mxu0 0.0
    %3134 = vmatpush.msra.mxu0 %v108
    %3135 = vmatpush.msra.mxu0 %v107
    %3136 = vmatpush.msra.mxu0 %v106
    %3137 = vmatpush.msra.mxu0 %v105
    %3138 = vmatmul.f32.gmra.mxu0 %v3120
    %v3139 = vpop.f32.mrf.mxu0
    %v3140 = vadd.f32 0.0, %v3139
    %3141 = vdwg.mxu0
    %v3142 = vsub.f32 1.0, %v3140
    %v3143 = vsel %vm338, %v3038, -inf
    %3144 = vmax.xlane.f32.xlu0 %v3143
    %v3145 = vpop.xlane.xlu0 %3144
    %v3146 = vsub.f32 %v3038, %v3145
    %v3147 = vmul.f32 %v3146, 1.442695
    %v3148 = vpow.pop %v3147
    %v3149 = vsel %vm338, %v3148, 0.0
    %3150 = vadd.xlane.f32.xlu0 %v3149
    %v3151 = vpop.xlane.xlu0 %3150
    %v3152 = vrcp.pop %v3151
    %v3153 = vmul.f32 %v3148, %v3152
    %v3155 = vsel %vm110, %v3153, 0
    %3157 = vmatpush.msra.mxu0 0.0
    %3158 = vmatpush.msra.mxu0 0.0
    %3159 = vmatpush.msra.mxu0 0.0
    %3160 = vmatpush.msra.mxu0 0.0
    %3161 = vmatpush.msra.mxu0 0.0
    %3162 = vmatpush.msra.mxu0 0.0
    %3163 = vmatpush.msra.mxu0 0.0
    %3164 = vmatpush.msra.mxu0 0.0
    %3165 = vmatpush.msra.mxu0 0.0
    %3166 = vmatpush.msra.mxu0 0.0
    %3167 = vmatpush.msra.mxu0 0.0
    %3168 = vmatpush.msra.mxu0 0.0
    %3169 = vmatpush.msra.mxu0 %v108
    %3170 = vmatpush.msra.mxu0 %v107
    %3171 = vmatpush.msra.mxu0 %v106
    %3172 = vmatpush.msra.mxu0 %v105
    %3173 = vmatmul.f32.gmra.mxu0 %v3155
    %v3174 = vpop.f32.mrf.mxu0
    %v3175 = vadd.f32 0.0, %v3174
    %3176 = vdwg.mxu0
    %v3177 = vtanh.pop %v2874
    %v3178 = vmul.f32 %v3175, %v3142
    %v3179 = vsub.f32 %v3175, %v3178
    %v3180 = vsub.f32 %v3142, %v3178
    %v3181 = vmul.f32 %v3106, %v3073
    %v3182 = vsub.f32 %v3106, %v3181
    %v3183 = vsub.f32 %v3073, %v3181
    %v3184 = vmul.f32 %v3181, %v2815
    %v3185 = vmul.f32 %v3178, %v3177
    %v3186 = vadd.f32 %v3184, %v3185
    %v3187 = vmul.f32 %v3182, %v2815
    %v3188 = vmul.f32 %v3179, %v3177
    %v3189 = vadd.f32 %v3187, %v3188
    %v3190 = vadd.f32 %v3189, %v3186
    %v3191 = vmul.f32 %v3183, %v2815
    %v3192 = vmul.f32 %v3180, %v3177
    %v3193 = vadd.f32 %v3191, %v3192
    %v3194 = vadd.f32 %v3193, %v3186
    %v3196 = vsel %vm110, %v3194, 0
    %3198 = vmatpush.msra.mxu0 0.0
    %3199 = vmatpush.msra.mxu0 0.0
    %3200 = vmatpush.msra.mxu0 0.0
    %3201 = vmatpush.msra.mxu0 0.0
    %3202 = vmatpush.msra.mxu0 0.0
    %3203 = vmatpush.msra.mxu0 0.0
    %3204 = vmatpush.msra.mxu0 0.0
    %3205 = vmatpush.msra.mxu0 0.0
    %3206 = vmatpush.msra.mxu0 0.0
    %3207 = vmatpush.msra.mxu0 0.0
    %3208 = vmatpush.msra.mxu0 0.0
    %3209 = vmatpush.msra.mxu0 0.0
    %3210 = vmatpush.msra.mxu0 %v83
    %3211 = vmatpush.msra.mxu0 %v82
    %3212 = vmatpush.msra.mxu0 %v81
    %3213 = vmatpush.msra.mxu0 %v80
    %3214 = vmatmul.f32.gmra.mxu0 %v3196
    %v3215 = vpop.f32.mrf.mxu0
    %v3216 = vadd.f32 0.0, %v3215
    %3217 = vdwg.mxu0
    %v3219 = vsel %vm110, %v3190, 0
    %3221 = vmatpush.msra.mxu0 0.0
    %3222 = vmatpush.msra.mxu0 0.0
    %3223 = vmatpush.msra.mxu0 0.0
    %3224 = vmatpush.msra.mxu0 0.0
    %3225 = vmatpush.msra.mxu0 0.0
    %3226 = vmatpush.msra.mxu0 0.0
    %3227 = vmatpush.msra.mxu0 0.0
    %3228 = vmatpush.msra.mxu0 0.0
    %3229 = vmatpush.msra.mxu0 0.0
    %3230 = vmatpush.msra.mxu0 0.0
    %3231 = vmatpush.msra.mxu0 0.0
    %3232 = vmatpush.msra.mxu0 0.0
    %3233 = vmatpush.msra.mxu0 %v78
    %3234 = vmatpush.msra.mxu0 %v77
    %3235 = vmatpush.msra.mxu0 %v76
    %3236 = vmatpush.msra.mxu0 %v75
    %3237 = vmatmul.f32.gmra.mxu0 %v3219
    %v3238 = vpop.f32.mrf.mxu0
    %v3239 = vadd.f32 %v3216, %v3238
    %3240 = vdwg.mxu0
    %v3242 = vsel %vm110, %v3186, 0
    %3244 = vmatpush.msra.mxu0 0.0
    %3245 = vmatpush.msra.mxu0 0.0
    %3246 = vmatpush.msra.mxu0 0.0
    %3247 = vmatpush.msra.mxu0 0.0
    %3248 = vmatpush.msra.mxu0 0.0
    %3249 = vmatpush.msra.mxu0 0.0
    %3250 = vmatpush.msra.mxu0 0.0
    %3251 = vmatpush.msra.mxu0 0.0
    %3252 = vmatpush.msra.mxu0 0.0
    %3253 = vmatpush.msra.mxu0 0.0
    %3254 = vmatpush.msra.mxu0 0.0
    %3255 = vmatpush.msra.mxu0 0.0
    %3256 = vmatpush.msra.mxu0 %v88
    %3257 = vmatpush.msra.mxu0 %v87
    %3258 = vmatpush.msra.mxu0 %v86
    %3259 = vmatpush.msra.mxu0 %v85
    %3260 = vmatmul.f32.gmra.mxu0 %v3242
    %v3261 = vpop.f32.mrf.mxu0
    %v3262 = vadd.f32 0.0, %v3261
    %3263 = vdwg.mxu0
    %v3264 = vadd.f32 %v3239, %v3262
    %v3265 = vadd.f32 %v3264, %v566
    %v3266 = vtanh.pop %v3265
    %v3267 = vtanh.pop %v3194
    %s3268 = scalar_lea.vmem [#allocation2], 12
    %3269 = vst.msk [vmem:[%s3268] sm:$0x3] %vm338, %v3267
    %v3270 = vtanh.pop %v3190
    %s3271 = scalar_lea.vmem [#allocation4], 12
    %3272 = vst.msk [vmem:[%s3271] sm:$0x3] %vm338, %v3270
    %v3273 = vtanh.pop %v3186
    %s3274 = scalar_lea.vmem [#allocation6], 12
    %3275 = vst.msk [vmem:[%s3274] sm:$0x3] %vm338, %v3273
    %s3276 = scalar_lea.vmem %s0, 14
    %v3277 = vld [vmem:[%s3276] sm:$0x3]
    %v3279 = vsel %vm110, %v3266, 0
    %3281 = vmatpush.msra.mxu0 0.0
    %3282 = vmatpush.msra.mxu0 0.0
    %3283 = vmatpush.msra.mxu0 0.0
    %3284 = vmatpush.msra.mxu0 0.0
    %3285 = vmatpush.msra.mxu0 0.0
    %3286 = vmatpush.msra.mxu0 0.0
    %3287 = vmatpush.msra.mxu0 0.0
    %3288 = vmatpush.msra.mxu0 0.0
    %3289 = vmatpush.msra.mxu0 0.0
    %3290 = vmatpush.msra.mxu0 0.0
    %3291 = vmatpush.msra.mxu0 0.0
    %3292 = vmatpush.msra.mxu0 0.0
    %3293 = vmatpush.msra.mxu0 %v45
    %3294 = vmatpush.msra.mxu0 %v44
    %3295 = vmatpush.msra.mxu0 %v43
    %3296 = vmatpush.msra.mxu0 %v42
    %3297 = vmatmul.f32.gmra.mxu0 %v3279
    %v3298 = vpop.f32.mrf.mxu0
    %v3299 = vadd.f32 0.0, %v3298
    %3300 = vdwg.mxu0
    %v3302 = vsel %vm134, %v3277, 0
    %3304 = vmatpush.msra.mxu0 0.0
    %3305 = vmatpush.msra.mxu0 0.0
    %3306 = vmatpush.msra.mxu0 0.0
    %3307 = vmatpush.msra.mxu0 0.0
    %3308 = vmatpush.msra.mxu0 0.0
    %3309 = vmatpush.msra.mxu0 0.0
    %3310 = vmatpush.msra.mxu0 0.0
    %3311 = vmatpush.msra.mxu0 0.0
    %3312 = vmatpush.msra.mxu0 0.0
    %3313 = vmatpush.msra.mxu0 0.0
    %3314 = vmatpush.msra.mxu0 0.0
    %3315 = vmatpush.msra.mxu0 0.0
    %3316 = vmatpush.msra.mxu0 0.0
    %3317 = vmatpush.msra.mxu0 0.0
    %3318 = vmatpush.msra.mxu0 %v29
    %3319 = vmatpush.msra.mxu0 %v28
    %3320 = vmatmul.f32.gmra.mxu0 %v3302
    %v3321 = vpop.f32.mrf.mxu0
    %v3322 = vadd.f32 %v3299, %v3321
    %3323 = vdwg.mxu0
    %v3324 = vadd.f32 %v3322, %v159
    %3325 = vmatpush.msra.mxu0 0.0
    %3326 = vmatpush.msra.mxu0 0.0
    %3327 = vmatpush.msra.mxu0 0.0
    %3328 = vmatpush.msra.mxu0 0.0
    %3329 = vmatpush.msra.mxu0 0.0
    %3330 = vmatpush.msra.mxu0 0.0
    %3331 = vmatpush.msra.mxu0 0.0
    %3332 = vmatpush.msra.mxu0 0.0
    %3333 = vmatpush.msra.mxu0 0.0
    %3334 = vmatpush.msra.mxu0 0.0
    %3335 = vmatpush.msra.mxu0 0.0
    %3336 = vmatpush.msra.mxu0 0.0
    %3337 = vmatpush.msra.mxu0 %v50
    %3338 = vmatpush.msra.mxu0 %v49
    %3339 = vmatpush.msra.mxu0 %v48
    %3340 = vmatpush.msra.mxu0 %v47
    %3341 = vmatmul.f32.gmra.mxu0 %v3279
    %v3342 = vpop.f32.mrf.mxu0
    %v3343 = vadd.f32 0.0, %v3342
    %3344 = vdwg.mxu0
    %3345 = vmatpush.msra.mxu0 0.0
    %3346 = vmatpush.msra.mxu0 0.0
    %3347 = vmatpush.msra.mxu0 0.0
    %3348 = vmatpush.msra.mxu0 0.0
    %3349 = vmatpush.msra.mxu0 0.0
    %3350 = vmatpush.msra.mxu0 0.0
    %3351 = vmatpush.msra.mxu0 0.0
    %3352 = vmatpush.msra.mxu0 0.0
    %3353 = vmatpush.msra.mxu0 0.0
    %3354 = vmatpush.msra.mxu0 0.0
    %3355 = vmatpush.msra.mxu0 0.0
    %3356 = vmatpush.msra.mxu0 0.0
    %3357 = vmatpush.msra.mxu0 0.0
    %3358 = vmatpush.msra.mxu0 0.0
    %3359 = vmatpush.msra.mxu0 %v32
    %3360 = vmatpush.msra.mxu0 %v31
    %3361 = vmatmul.f32.gmra.mxu0 %v3302
    %v3362 = vpop.f32.mrf.mxu0
    %v3363 = vadd.f32 %v3343, %v3362
    %3364 = vdwg.mxu0
    %v3365 = vadd.f32 %v3363, %v203
    %3366 = vmatpush.msra.mxu0 0.0
    %3367 = vmatpush.msra.mxu0 0.0
    %3368 = vmatpush.msra.mxu0 0.0
    %3369 = vmatpush.msra.mxu0 0.0
    %3370 = vmatpush.msra.mxu0 0.0
    %3371 = vmatpush.msra.mxu0 0.0
    %3372 = vmatpush.msra.mxu0 0.0
    %3373 = vmatpush.msra.mxu0 0.0
    %3374 = vmatpush.msra.mxu0 0.0
    %3375 = vmatpush.msra.mxu0 0.0
    %3376 = vmatpush.msra.mxu0 0.0
    %3377 = vmatpush.msra.mxu0 0.0
    %3378 = vmatpush.msra.mxu0 %v55
    %3379 = vmatpush.msra.mxu0 %v54
    %3380 = vmatpush.msra.mxu0 %v53
    %3381 = vmatpush.msra.mxu0 %v52
    %3382 = vmatmul.f32.gmra.mxu0 %v3279
    %v3383 = vpop.f32.mrf.mxu0
    %v3384 = vadd.f32 0.0, %v3383
    %3385 = vdwg.mxu0
    %3386 = vmatpush.msra.mxu0 0.0
    %3387 = vmatpush.msra.mxu0 0.0
    %3388 = vmatpush.msra.mxu0 0.0
    %3389 = vmatpush.msra.mxu0 0.0
    %3390 = vmatpush.msra.mxu0 0.0
    %3391 = vmatpush.msra.mxu0 0.0
    %3392 = vmatpush.msra.mxu0 0.0
    %3393 = vmatpush.msra.mxu0 0.0
    %3394 = vmatpush.msra.mxu0 0.0
    %3395 = vmatpush.msra.mxu0 0.0
    %3396 = vmatpush.msra.mxu0 0.0
    %3397 = vmatpush.msra.mxu0 0.0
    %3398 = vmatpush.msra.mxu0 0.0
    %3399 = vmatpush.msra.mxu0 0.0
    %3400 = vmatpush.msra.mxu0 %v35
    %3401 = vmatpush.msra.mxu0 %v34
    %3402 = vmatmul.f32.gmra.mxu0 %v3302
    %v3403 = vpop.f32.mrf.mxu0
    %v3404 = vadd.f32 %v3384, %v3403
    %3405 = vdwg.mxu0
    %v3406 = vadd.f32 %v3404, %v247
    %3407 = vmatpush.msra.mxu0 0.0
    %3408 = vmatpush.msra.mxu0 0.0
    %3409 = vmatpush.msra.mxu0 0.0
    %3410 = vmatpush.msra.mxu0 0.0
    %3411 = vmatpush.msra.mxu0 0.0
    %3412 = vmatpush.msra.mxu0 0.0
    %3413 = vmatpush.msra.mxu0 0.0
    %3414 = vmatpush.msra.mxu0 0.0
    %3415 = vmatpush.msra.mxu0 0.0
    %3416 = vmatpush.msra.mxu0 0.0
    %3417 = vmatpush.msra.mxu0 0.0
    %3418 = vmatpush.msra.mxu0 0.0
    %3419 = vmatpush.msra.mxu0 %v60
    %3420 = vmatpush.msra.mxu0 %v59
    %3421 = vmatpush.msra.mxu0 %v58
    %3422 = vmatpush.msra.mxu0 %v57
    %3423 = vmatmul.f32.gmra.mxu0 %v3279
    %v3424 = vpop.f32.mrf.mxu0
    %v3425 = vadd.f32 0.0, %v3424
    %3426 = vdwg.mxu0
    %3427 = vmatpush.msra.mxu0 0.0
    %3428 = vmatpush.msra.mxu0 0.0
    %3429 = vmatpush.msra.mxu0 0.0
    %3430 = vmatpush.msra.mxu0 0.0
    %3431 = vmatpush.msra.mxu0 0.0
    %3432 = vmatpush.msra.mxu0 0.0
    %3433 = vmatpush.msra.mxu0 0.0
    %3434 = vmatpush.msra.mxu0 0.0
    %3435 = vmatpush.msra.mxu0 0.0
    %3436 = vmatpush.msra.mxu0 0.0
    %3437 = vmatpush.msra.mxu0 0.0
    %3438 = vmatpush.msra.mxu0 0.0
    %3439 = vmatpush.msra.mxu0 0.0
    %3440 = vmatpush.msra.mxu0 0.0
    %3441 = vmatpush.msra.mxu0 %v38
    %3442 = vmatpush.msra.mxu0 %v37
    %3443 = vmatmul.f32.gmra.mxu0 %v3302
    %v3444 = vpop.f32.mrf.mxu0
    %v3445 = vadd.f32 %v3425, %v3444
    %3446 = vdwg.mxu0
    %v3447 = vadd.f32 %v3445, %v291
    %3448 = vmatpush.msra.mxu0 0.0
    %3449 = vmatpush.msra.mxu0 0.0
    %3450 = vmatpush.msra.mxu0 0.0
    %3451 = vmatpush.msra.mxu0 0.0
    %3452 = vmatpush.msra.mxu0 0.0
    %3453 = vmatpush.msra.mxu0 0.0
    %3454 = vmatpush.msra.mxu0 0.0
    %3455 = vmatpush.msra.mxu0 0.0
    %3456 = vmatpush.msra.mxu0 0.0
    %3457 = vmatpush.msra.mxu0 0.0
    %3458 = vmatpush.msra.mxu0 0.0
    %3459 = vmatpush.msra.mxu0 0.0
    %3460 = vmatpush.msra.mxu0 %v65
    %3461 = vmatpush.msra.mxu0 %v64
    %3462 = vmatpush.msra.mxu0 %v63
    %3463 = vmatpush.msra.mxu0 %v62
    %3464 = vmatmul.f32.gmra.mxu0 %v3279
    %v3465 = vpop.f32.mrf.mxu0
    %v3466 = vadd.f32 0.0, %v3465
    %3467 = vdwg.mxu0
    %3468 = vmatpush.msra.mxu0 0.0
    %3469 = vmatpush.msra.mxu0 0.0
    %3470 = vmatpush.msra.mxu0 0.0
    %3471 = vmatpush.msra.mxu0 0.0
    %3472 = vmatpush.msra.mxu0 0.0
    %3473 = vmatpush.msra.mxu0 0.0
    %3474 = vmatpush.msra.mxu0 0.0
    %3475 = vmatpush.msra.mxu0 0.0
    %3476 = vmatpush.msra.mxu0 0.0
    %3477 = vmatpush.msra.mxu0 0.0
    %3478 = vmatpush.msra.mxu0 0.0
    %3479 = vmatpush.msra.mxu0 0.0
    %3480 = vmatpush.msra.mxu0 0.0
    %3481 = vmatpush.msra.mxu0 0.0
    %3482 = vmatpush.msra.mxu0 %v41
    %3483 = vmatpush.msra.mxu0 %v40
    %3484 = vmatmul.f32.gmra.mxu0 %v3302
    %v3485 = vpop.f32.mrf.mxu0
    %v3486 = vadd.f32 %v3466, %v3485
    %3487 = vdwg.mxu0
    %v3488 = vadd.f32 %v3486, %v335
    %v3489 = vsel %vm338, %v3365, -inf
    %3490 = vmax.xlane.f32.xlu0 %v3489
    %v3491 = vpop.xlane.xlu0 %3490
    %v3492 = vsub.f32 %v3365, %v3491
    %v3493 = vmul.f32 %v3492, 1.442695
    %v3494 = vpow.pop %v3493
    %v3495 = vsel %vm338, %v3494, 0.0
    %3496 = vadd.xlane.f32.xlu0 %v3495
    %v3497 = vpop.xlane.xlu0 %3496
    %v3498 = vrcp.pop %v3497
    %v3499 = vmul.f32 %v3494, %v3498
    %v3501 = vsel %vm110, %v3499, 0
    %3503 = vmatpush.msra.mxu0 0.0
    %3504 = vmatpush.msra.mxu0 0.0
    %3505 = vmatpush.msra.mxu0 0.0
    %3506 = vmatpush.msra.mxu0 0.0
    %3507 = vmatpush.msra.mxu0 0.0
    %3508 = vmatpush.msra.mxu0 0.0
    %3509 = vmatpush.msra.mxu0 0.0
    %3510 = vmatpush.msra.mxu0 0.0
    %3511 = vmatpush.msra.mxu0 0.0
    %3512 = vmatpush.msra.mxu0 0.0
    %3513 = vmatpush.msra.mxu0 0.0
    %3514 = vmatpush.msra.mxu0 0.0
    %3515 = vmatpush.msra.mxu0 %v108
    %3516 = vmatpush.msra.mxu0 %v107
    %3517 = vmatpush.msra.mxu0 %v106
    %3518 = vmatpush.msra.mxu0 %v105
    %3519 = vmatmul.f32.gmra.mxu0 %v3501
    %v3520 = vpop.f32.mrf.mxu0
    %v3521 = vadd.f32 0.0, %v3520
    %3522 = vdwg.mxu0
    %v3523 = vsub.f32 1.0, %v3521
    %v3524 = vsel %vm338, %v3406, -inf
    %3525 = vmax.xlane.f32.xlu0 %v3524
    %v3526 = vpop.xlane.xlu0 %3525
    %v3527 = vsub.f32 %v3406, %v3526
    %v3528 = vmul.f32 %v3527, 1.442695
    %v3529 = vpow.pop %v3528
    %v3530 = vsel %vm338, %v3529, 0.0
    %3531 = vadd.xlane.f32.xlu0 %v3530
    %v3532 = vpop.xlane.xlu0 %3531
    %v3533 = vrcp.pop %v3532
    %v3534 = vmul.f32 %v3529, %v3533
    %v3536 = vsel %vm110, %v3534, 0
    %3538 = vmatpush.msra.mxu0 0.0
    %3539 = vmatpush.msra.mxu0 0.0
    %3540 = vmatpush.msra.mxu0 0.0
    %3541 = vmatpush.msra.mxu0 0.0
    %3542 = vmatpush.msra.mxu0 0.0
    %3543 = vmatpush.msra.mxu0 0.0
    %3544 = vmatpush.msra.mxu0 0.0
    %3545 = vmatpush.msra.mxu0 0.0
    %3546 = vmatpush.msra.mxu0 0.0
    %3547 = vmatpush.msra.mxu0 0.0
    %3548 = vmatpush.msra.mxu0 0.0
    %3549 = vmatpush.msra.mxu0 0.0
    %3550 = vmatpush.msra.mxu0 %v108
    %3551 = vmatpush.msra.mxu0 %v107
    %3552 = vmatpush.msra.mxu0 %v106
    %3553 = vmatpush.msra.mxu0 %v105
    %3554 = vmatmul.f32.gmra.mxu0 %v3536
    %v3555 = vpop.f32.mrf.mxu0
    %v3556 = vadd.f32 0.0, %v3555
    %3557 = vdwg.mxu0
    %v3558 = vsel %vm338, %v3447, -inf
    %3559 = vmax.xlane.f32.xlu0 %v3558
    %v3560 = vpop.xlane.xlu0 %3559
    %v3561 = vsub.f32 %v3447, %v3560
    %v3562 = vmul.f32 %v3561, 1.442695
    %v3563 = vpow.pop %v3562
    %v3564 = vsel %vm338, %v3563, 0.0
    %3565 = vadd.xlane.f32.xlu0 %v3564
    %v3566 = vpop.xlane.xlu0 %3565
    %v3567 = vrcp.pop %v3566
    %v3568 = vmul.f32 %v3563, %v3567
    %v3570 = vsel %vm110, %v3568, 0
    %3572 = vmatpush.msra.mxu0 0.0
    %3573 = vmatpush.msra.mxu0 0.0
    %3574 = vmatpush.msra.mxu0 0.0
    %3575 = vmatpush.msra.mxu0 0.0
    %3576 = vmatpush.msra.mxu0 0.0
    %3577 = vmatpush.msra.mxu0 0.0
    %3578 = vmatpush.msra.mxu0 0.0
    %3579 = vmatpush.msra.mxu0 0.0
    %3580 = vmatpush.msra.mxu0 0.0
    %3581 = vmatpush.msra.mxu0 0.0
    %3582 = vmatpush.msra.mxu0 0.0
    %3583 = vmatpush.msra.mxu0 0.0
    %3584 = vmatpush.msra.mxu0 %v108
    %3585 = vmatpush.msra.mxu0 %v107
    %3586 = vmatpush.msra.mxu0 %v106
    %3587 = vmatpush.msra.mxu0 %v105
    %3588 = vmatmul.f32.gmra.mxu0 %v3570
    %v3589 = vpop.f32.mrf.mxu0
    %v3590 = vadd.f32 0.0, %v3589
    %3591 = vdwg.mxu0
    %v3592 = vsub.f32 1.0, %v3590
    %v3593 = vsel %vm338, %v3488, -inf
    %3594 = vmax.xlane.f32.xlu0 %v3593
    %v3595 = vpop.xlane.xlu0 %3594
    %v3596 = vsub.f32 %v3488, %v3595
    %v3597 = vmul.f32 %v3596, 1.442695
    %v3598 = vpow.pop %v3597
    %v3599 = vsel %vm338, %v3598, 0.0
    %3600 = vadd.xlane.f32.xlu0 %v3599
    %v3601 = vpop.xlane.xlu0 %3600
    %v3602 = vrcp.pop %v3601
    %v3603 = vmul.f32 %v3598, %v3602
    %v3605 = vsel %vm110, %v3603, 0
    %3607 = vmatpush.msra.mxu0 0.0
    %3608 = vmatpush.msra.mxu0 0.0
    %3609 = vmatpush.msra.mxu0 0.0
    %3610 = vmatpush.msra.mxu0 0.0
    %3611 = vmatpush.msra.mxu0 0.0
    %3612 = vmatpush.msra.mxu0 0.0
    %3613 = vmatpush.msra.mxu0 0.0
    %3614 = vmatpush.msra.mxu0 0.0
    %3615 = vmatpush.msra.mxu0 0.0
    %3616 = vmatpush.msra.mxu0 0.0
    %3617 = vmatpush.msra.mxu0 0.0
    %3618 = vmatpush.msra.mxu0 0.0
    %3619 = vmatpush.msra.mxu0 %v108
    %3620 = vmatpush.msra.mxu0 %v107
    %3621 = vmatpush.msra.mxu0 %v106
    %3622 = vmatpush.msra.mxu0 %v105
    %3623 = vmatmul.f32.gmra.mxu0 %v3605
    %v3624 = vpop.f32.mrf.mxu0
    %v3625 = vadd.f32 0.0, %v3624
    %3626 = vdwg.mxu0
    %v3627 = vtanh.pop %v3324
    %v3628 = vmul.f32 %v3625, %v3592
    %v3629 = vsub.f32 %v3625, %v3628
    %v3630 = vsub.f32 %v3592, %v3628
    %v3631 = vmul.f32 %v3556, %v3523
    %v3632 = vsub.f32 %v3556, %v3631
    %v3633 = vsub.f32 %v3523, %v3631
    %v3634 = vmul.f32 %v3631, %v3265
    %v3635 = vmul.f32 %v3628, %v3627
    %v3636 = vadd.f32 %v3634, %v3635
    %v3637 = vmul.f32 %v3632, %v3265
    %v3638 = vmul.f32 %v3629, %v3627
    %v3639 = vadd.f32 %v3637, %v3638
    %v3640 = vadd.f32 %v3639, %v3636
    %v3641 = vmul.f32 %v3633, %v3265
    %v3642 = vmul.f32 %v3630, %v3627
    %v3643 = vadd.f32 %v3641, %v3642
    %v3644 = vadd.f32 %v3643, %v3636
    %v3645 = vtanh.pop %v3644
    %s3646 = scalar_lea.vmem [#allocation2], 14
    %3647 = vst.msk [vmem:[%s3646] sm:$0x3] %vm338, %v3645
    %v3648 = vtanh.pop %v3640
    %s3649 = scalar_lea.vmem [#allocation4], 14
    %3650 = vst.msk [vmem:[%s3649] sm:$0x3] %vm338, %v3648
    %v3651 = vtanh.pop %v3636
    %s3652 = scalar_lea.vmem [#allocation6], 14
    %3653 = vst.msk [vmem:[%s3652] sm:$0x3] %vm338, %v3651
    // Predicated region
    $region26: #{encoder_forward.1} parent=1 // pred_check
      _
    $region27: #{encoder_forward.1} parent=1 // pred_check_branch
      %3655 = sbr.rel (0) target = $region29
    $region28: #{encoder_forward.1} parent=1 // pred_region
      %3657 = vsyncadd [#allocation3], 0
      %s3658 = sshll.u32 [#allocation2], 4
      %s3659 = int_to_ptr.vmem [resolvable:$true] %s3658
      %s3660 = sshll.u32 %s6, 4
      %s3661 = int_to_ptr.hbm [resolvable:$true] %s3660
      %3666 = dma.vmem_to_hbm [thread:$0]  %s3659, 256, %s3661, [#allocation3], 32, 32, 2
    $region29: #{encoder_forward.1} parent=1 // pred_fallthru
      _
    // Predicated region
    $region30: #{encoder_forward.1} parent=1 // pred_check
      _
    $region31: #{encoder_forward.1} parent=1 // pred_check_branch
      %3668 = sbr.rel (0) target = $region33
    $region32: #{encoder_forward.1} parent=1 // pred_region
      %3670 = vsyncadd [#allocation5], 0
      %s3671 = sshll.u32 [#allocation4], 4
      %s3672 = int_to_ptr.vmem [resolvable:$true] %s3671
      %s3673 = sshll.u32 %s7, 4
      %s3674 = int_to_ptr.hbm [resolvable:$true] %s3673
      %3679 = dma.vmem_to_hbm [thread:$0]  %s3672, 256, %s3674, [#allocation5], 32, 32, 2
    $region33: #{encoder_forward.1} parent=1 // pred_fallthru
      _
    // Predicated region
    $region34: #{encoder_forward.1} parent=1 // pred_check
      _
    $region35: #{encoder_forward.1} parent=1 // pred_check_branch
      %3681 = sbr.rel (0) target = $region37
    $region36: #{encoder_forward.1} parent=1 // pred_region
      %3683 = vsyncadd [#allocation5], 0
      %s3684 = sshll.u32 [#allocation6], 4
      %s3685 = int_to_ptr.vmem [resolvable:$true] %s3684
      %s3686 = sshll.u32 %s8, 4
      %s3687 = int_to_ptr.hbm [resolvable:$true] %s3686
      %3692 = dma.vmem_to_hbm [thread:$0]  %s3685, 256, %s3687, [#allocation5], 32, 32, 2
    $region37: #{encoder_forward.1} parent=1 // pred_fallthru
      _
    // Predicated region
    $region38: #{encoder_forward.1} parent=1 // pred_check
      _
    $region39: #{encoder_forward.1} parent=1 // pred_check_branch
      %3694 = sbr.rel (0) target = $region41
    $region40: #{encoder_forward.1} parent=1 // pred_region
      %3696 = dma.done [#allocation3], 256
    $region41: #{encoder_forward.1} parent=1 // pred_fallthru
      _
    // Predicated region
    $region42: #{encoder_forward.1} parent=1 // pred_check
      _
    $region43: #{encoder_forward.1} parent=1 // pred_check_branch
      %3698 = sbr.rel (0) target = $region45
    $region44: #{encoder_forward.1} parent=1 // pred_region
      %3700 = dma.done [#allocation5], 256
    $region45: #{encoder_forward.1} parent=1 // pred_fallthru
      _
    // Predicated region
    $region46: #{encoder_forward.1} parent=1 // pred_check
      _
    $region47: #{encoder_forward.1} parent=1 // pred_check_branch
      %3702 = sbr.rel (0) target = $region49
    $region48: #{encoder_forward.1} parent=1 // pred_region
      %3704 = dma.done [#allocation5], 256
    $region49: #{encoder_forward.1} parent=1 // pred_fallthru
      _
    %3705 = vsyncpa [#allocation3], 1
    %3706 = vsyncpa [#allocation5], 1

</llo_original>
